<compile_context>
chip_gen: v6e
topology: v6e:2x2x1
jax: 0.10.0
libtpu: 0.0.40
codegen_flags: <defaults>
</compile_context>

<pallas_src>
import jax
import jax.numpy as jnp
from jax.experimental import pallas as pl
from jax.experimental.pallas import tpu as pltpu

# ----- model hyper-parameters (from the PyTorch module) -----
EMBED_DIM = 64
NUM_CLASSES = 5
NUM_CHANNELS = 100
KERNEL_SIZES = (3, 4, 5)
MAX_K = max(KERNEL_SIZES)          # 5 tap positions cover all branches
N_BRANCH = len(KERNEL_SIZES)
MAX_LEN = 30
VOCAB_SIZE = 50                    # synthetic small vocab
DROPOUT = 0.7                      # eval-mode forward: dropout is identity
BATCH = 4

# ----- padded (TPU-friendly) sizes -----
B_PAD = 8                          # sublane-dense batch tile
L_PAD = 32                         # multiple of 8 -> tile-aligned reshapes
V_PAD = 128                        # one-hot vocab width (lane-dense)
C_PAD = 128                        # lane-dense conv channels
CLS_PAD = 128                      # lane-dense output store


def textcnn_kernel(tok_ref,   # (MAX_K, B_PAD*L_PAD, 1) int32 shifted token planes
                   g_ref,     # (MAX_K*V_PAD, N_BRANCH*C_PAD) fused emb@conv table
                   ball_ref,  # (N_BRANCH, C_PAD) conv biases
                   wfc_ref,   # (N_BRANCH*C_PAD, CLS_PAD)
                   bfc_ref,   # (1, CLS_PAD)
                   out_ref):  # (B_PAD, CLS_PAD)
    bl = B_PAD * L_PAD
    iota_v = jax.lax.broadcasted_iota(jnp.int32, (bl, V_PAD), 1)

    # Concatenated one-hot: column block j holds onehot(tok[b, t+j]).
    # All blocks are 128-lane aligned; no sublane-offset slices anywhere.
    onehot = jnp.concatenate(
        [(iota_v == tok_ref[j]).astype(jnp.float32) for j in range(MAX_K)],
        axis=1)                                            # (bl, MAX_K*V_PAD)

    # Single fused MXU matmul: time-aligned conv pre-activations for ALL
    # branches at once.  G[j*V_PAD+v, i*C_PAD+c] = (emb @ W_branch_i[tap j])[v,c],
    # zero for taps j >= kernel_size of branch i.
    y = jnp.dot(onehot, g_ref[...],
                preferred_element_type=jnp.float32)        # (bl, N_BRANCH*C_PAD)
    y3 = y.reshape(B_PAD, L_PAD, N_BRANCH * C_PAD)         # tile-aligned reshape

    # Mask invalid time positions to -inf, max over time, THEN bias + relu
    # (hoisted past the max: both are monotone and time-invariant).
    t_idx = jax.lax.broadcasted_iota(jnp.int32, (1, L_PAD, C_PAD), 1)
    pooled = []
    for i, k in enumerate(KERNEL_SIZES):
        l_out = MAX_LEN - k + 1                            # valid conv positions
        yb = y3[:, :, i * C_PAD:(i + 1) * C_PAD]           # lane-aligned slice
        yb = jnp.where(t_idx < l_out, yb, -jnp.inf)        # pad/overflow -> -inf
        m = jnp.max(yb, axis=1)                            # (B_PAD, C_PAD)
        pooled.append(jnp.maximum(m + ball_ref[i:i + 1, :], 0.0))

    feat = jnp.concatenate(pooled, axis=1)                 # (B_PAD, N_BRANCH*C_PAD)
    # TODO(synk): training-mode dropout (prng mask * 1/(1-p)) not implemented;
    # eval-mode dropout is identity.
    logits = jnp.dot(feat, wfc_ref[...],
                     preferred_element_type=jnp.float32) + bfc_ref[...]
    out_ref[...] = logits.astype(out_ref.dtype)            # lane+sublane dense store


@jax.jit
def textcnn_forward(tokens, padded_params):
    """tokens: (B, L<=30) int32 ; padded_params: dict from prepare_padded_params."""
    B, L = tokens.shape
    n_tiles = pl.cdiv(B, B_PAD)
    nb = n_tiles * B_PAD

    # Pad (token id 0 == <PAD>) and build MAX_K time-shifted token planes; the
    # kernel one-hots these directly, so no shift/roll/relayout is needed
    # in-kernel.  Shifted-in garbage only lands in positions masked to -inf.
    tok_pad = jnp.zeros((nb, L_PAD), jnp.int32).at[:B, :L].set(tokens)
    planes = jnp.stack([jnp.roll(tok_pad, -j, axis=1) for j in range(MAX_K)],
                       axis=0)                              # (MAX_K, nb, L_PAD)
    planes = planes.reshape(MAX_K, nb * L_PAD, 1)

    out = pl.pallas_call(
        textcnn_kernel,
        out_shape=jax.ShapeDtypeStruct((nb, CLS_PAD), jnp.float32),
        grid=(n_tiles,),
        in_specs=[
            # token planes: pipelined per batch tile
            pl.BlockSpec((MAX_K, B_PAD * L_PAD, 1), lambda i: (0, i, 0)),
            # weights: constant index_map -> fetched once, stay VMEM-resident
            pl.BlockSpec((MAX_K * V_PAD, N_BRANCH * C_PAD), lambda i: (0, 0)),
            pl.BlockSpec((N_BRANCH, C_PAD), lambda i: (0, 0)),
            pl.BlockSpec((N_BRANCH * C_PAD, CLS_PAD), lambda i: (0, 0)),
            pl.BlockSpec((1, CLS_PAD), lambda i: (0, 0)),
        ],
        out_specs=pl.BlockSpec((B_PAD, CLS_PAD), lambda i: (i, 0)),
        compiler_params=pltpu.CompilerParams(
            dimension_semantics=("parallel",)),   # v7x: shard batch tiles over 2 TCs
    )(planes, padded_params["g"], padded_params["ball"],
      padded_params["wfc"], padded_params["bfc"])
    return out[:B, :NUM_CLASSES]


def init_params(key):
    """Original (unpadded) synthetic parameters, kernel-friendly layouts."""
    ks = jax.random.split(key, 9)
    C = NUM_CHANNELS
    return {
        "embedding": jax.random.normal(ks[0], (VOCAB_SIZE, EMBED_DIM),
                                       jnp.float32) * 0.1,
        # conv weights stored as (k, E, C)  (PyTorch layout is (C, E, k))
        "w3": jax.random.normal(ks[1], (3, EMBED_DIM, C), jnp.float32) * 0.05,
        "b3": jax.random.normal(ks[2], (1, C), jnp.float32) * 0.05,
        "w4": jax.random.normal(ks[3], (4, EMBED_DIM, C), jnp.float32) * 0.05,
        "b4": jax.random.normal(ks[4], (1, C), jnp.float32) * 0.05,
        "w5": jax.random.normal(ks[5], (5, EMBED_DIM, C), jnp.float32) * 0.05,
        "b5": jax.random.normal(ks[6], (1, C), jnp.float32) * 0.05,
        # fc weight stored as (3C, num_classes) (transpose of PyTorch Linear)
        "wfc": jax.random.normal(ks[7], (3 * C, NUM_CLASSES), jnp.float32) * 0.05,
        "bfc": jax.random.normal(ks[8], (1, NUM_CLASSES), jnp.float32) * 0.05,
    }


def prepare_padded_params(params):
    """One-time fold of the embedding into the conv table + zero padding."""
    hi = jax.lax.Precision.HIGHEST
    emb = params["embedding"]                               # (V, E)

    # G[(tap j) block, (branch i) block] = emb @ W_branch_i[tap j]   (HIGHEST)
    g = jnp.zeros((MAX_K * V_PAD, N_BRANCH * C_PAD), jnp.float32)
    ball = jnp.zeros((N_BRANCH, C_PAD), jnp.float32)
    for i, k in enumerate(KERNEL_SIZES):
        w = params[f"w{k}"]                                 # (k, E, C)
        b = params[f"b{k}"]                                 # (1, C)
        for j in range(k):
            t = jnp.dot(emb, w[j], precision=hi)            # (V, C)
            g = g.at[j * V_PAD:j * V_PAD + VOCAB_SIZE,
                     i * C_PAD:i * C_PAD + NUM_CHANNELS].set(t)
        ball = ball.at[i, :NUM_CHANNELS].set(b[0])

    # FC: per-branch row blocks land at multiples of C_PAD; padded rows/cols zero.
    wfc = jnp.zeros((N_BRANCH * C_PAD, CLS_PAD), jnp.float32)
    for i in range(N_BRANCH):
        wfc = wfc.at[i * C_PAD:i * C_PAD + NUM_CHANNELS, :NUM_CLASSES].set(
            params["wfc"][i * NUM_CHANNELS:(i + 1) * NUM_CHANNELS, :])
    bfc = jnp.zeros((1, CLS_PAD), jnp.float32).at[:, :NUM_CLASSES].set(params["bfc"])

    return {"g": g, "ball": ball, "wfc": wfc, "bfc": bfc}


def reference_forward(tokens, params):
    """Pure-JAX reference mirroring the PyTorch forward (eval mode)."""
    hi = jax.lax.Precision.HIGHEST
    x = jnp.take(params["embedding"], tokens, axis=0)       # (B, L, E)
    feats = []
    for k in KERNEL_SIZES:
        w = params[f"w{k}"]                                 # (k, E, C)
        b = params[f"b{k}"]                                 # (1, C)
        l_out = x.shape[1] - k + 1
        acc = jnp.zeros((x.shape[0], l_out, NUM_CHANNELS), jnp.float32)
        for j in range(k):
            acc = acc + jnp.einsum("ble,ec->blc", x[:, j:j + l_out, :], w[j],
                                   precision=hi)
        acc = jnp.maximum(acc + b[None, :, :], 0.0)
        feats.append(jnp.max(acc, axis=1))
    feat = jnp.concatenate(feats, axis=1)
    return jnp.dot(feat, params["wfc"], precision=hi) + params["bfc"]


if __name__ == "__main__":
    key = jax.random.PRNGKey(0)
    pkey, tkey, tkey2 = jax.random.split(key, 3)
    params = init_params(pkey)
    padded = prepare_padded_params(params)

    # Small batch matching the PyTorch usage (B=4, L=30).
    tokens = jax.random.randint(tkey, (BATCH, MAX_LEN), 0, VOCAB_SIZE,
                                dtype=jnp.int32)
    out = jax.block_until_ready(textcnn_forward(tokens, padded))
    ref = reference_forward(tokens, params)
    assert out.shape == (BATCH, NUM_CLASSES), out.shape
    # Tolerance covers TPU default-matmul-precision / contraction-order
    # differences between the fused MXU path and the HIGHEST-precision reference.
    assert jnp.allclose(out, ref, atol=2e-3, rtol=2e-3), "mismatch vs reference (B=4)"

    # Larger batch exercising the multi-tile grid (resident weights, parallel axis).
    tokens2 = jax.random.randint(tkey2, (20, MAX_LEN), 0, VOCAB_SIZE,
                                 dtype=jnp.int32)
    out2 = jax.block_until_ready(textcnn_forward(tokens2, padded))
    ref2 = reference_forward(tokens2, params)
    assert out2.shape == (20, NUM_CLASSES), out2.shape
    assert jnp.allclose(out2, ref2, atol=2e-3, rtol=2e-3), "mismatch vs reference (B=20)"

    print("KERNEL_OK")
</pallas_src>

<mosaic_0001>
module attributes {stable_mosaic.version = 11 : i64} {
  func.func @textcnn_kernel(%arg0: i32, %arg1: memref<5x256x1xi32, #tpu.memory_space<vmem>>, %arg2: memref<640x384xf32, #tpu.memory_space<vmem>>, %arg3: memref<3x128xf32, #tpu.memory_space<vmem>>, %arg4: memref<384x128xf32, #tpu.memory_space<vmem>>, %arg5: memref<1x128xf32, #tpu.memory_space<vmem>>, %arg6: memref<8x128xf32, #tpu.memory_space<vmem>>) attributes {dimension_semantics = [#tpu.dimension_semantics<parallel>], iteration_bounds = array<i64: 1>, scalar_prefetch = 0 : i64, scratch_operands = 0 : i64, tpu.core_type = #tpu.core_type<tc>, window_params = [{transform_indices = @transform_0, window_bounds = array<i64: 5, 256, 1>}, {pipeline_mode = #tpu.pipeline_mode<synchronous>, transform_indices = @transform_1, window_bounds = array<i64: 640, 384>}, {pipeline_mode = #tpu.pipeline_mode<synchronous>, transform_indices = @transform_2, window_bounds = array<i64: 3, 128>}, {pipeline_mode = #tpu.pipeline_mode<synchronous>, transform_indices = @transform_3, window_bounds = array<i64: 384, 128>}, {pipeline_mode = #tpu.pipeline_mode<synchronous>, transform_indices = @transform_4, window_bounds = array<i64: 1, 128>}, {transform_indices = @transform_5, window_bounds = array<i64: 8, 128>}]} {
    %0 = tpu.iota {dimensions = array<i32: 1>} : vector<256x128xi32>
    %c0 = arith.constant 0 : index
    %c0_0 = arith.constant 0 : index
    %c0_1 = arith.constant 0 : index
    %1 = vector.load %arg1[%c0, %c0_0, %c0_1] : memref<5x256x1xi32, #tpu.memory_space<vmem>>, vector<1x256x1xi32>
    %2 = vector.shape_cast %1 : vector<1x256x1xi32> to vector<256x1xi32>
    %3 = vector.broadcast %2 : vector<256x1xi32> to vector<256x128xi32>
    %4 = arith.cmpi eq, %0, %3 : vector<256x128xi32>
    %5 = arith.extui %4 : vector<256x128xi1> to vector<256x128xi32>
    %6 = arith.sitofp %5 : vector<256x128xi32> to vector<256x128xf32>
    %c1 = arith.constant 1 : index
    %c0_2 = arith.constant 0 : index
    %c0_3 = arith.constant 0 : index
    %7 = vector.load %arg1[%c1, %c0_2, %c0_3] : memref<5x256x1xi32, #tpu.memory_space<vmem>>, vector<1x256x1xi32>
    %8 = vector.shape_cast %7 : vector<1x256x1xi32> to vector<256x1xi32>
    %9 = vector.broadcast %8 : vector<256x1xi32> to vector<256x128xi32>
    %10 = arith.cmpi eq, %0, %9 : vector<256x128xi32>
    %11 = arith.extui %10 : vector<256x128xi1> to vector<256x128xi32>
    %12 = arith.sitofp %11 : vector<256x128xi32> to vector<256x128xf32>
    %c2 = arith.constant 2 : index
    %c0_4 = arith.constant 0 : index
    %c0_5 = arith.constant 0 : index
    %13 = vector.load %arg1[%c2, %c0_4, %c0_5] : memref<5x256x1xi32, #tpu.memory_space<vmem>>, vector<1x256x1xi32>
    %14 = vector.shape_cast %13 : vector<1x256x1xi32> to vector<256x1xi32>
    %15 = vector.broadcast %14 : vector<256x1xi32> to vector<256x128xi32>
    %16 = arith.cmpi eq, %0, %15 : vector<256x128xi32>
    %17 = arith.extui %16 : vector<256x128xi1> to vector<256x128xi32>
    %18 = arith.sitofp %17 : vector<256x128xi32> to vector<256x128xf32>
    %c3 = arith.constant 3 : index
    %c0_6 = arith.constant 0 : index
    %c0_7 = arith.constant 0 : index
    %19 = vector.load %arg1[%c3, %c0_6, %c0_7] : memref<5x256x1xi32, #tpu.memory_space<vmem>>, vector<1x256x1xi32>
    %20 = vector.shape_cast %19 : vector<1x256x1xi32> to vector<256x1xi32>
    %21 = vector.broadcast %20 : vector<256x1xi32> to vector<256x128xi32>
    %22 = arith.cmpi eq, %0, %21 : vector<256x128xi32>
    %23 = arith.extui %22 : vector<256x128xi1> to vector<256x128xi32>
    %24 = arith.sitofp %23 : vector<256x128xi32> to vector<256x128xf32>
    %c4 = arith.constant 4 : index
    %c0_8 = arith.constant 0 : index
    %c0_9 = arith.constant 0 : index
    %25 = vector.load %arg1[%c4, %c0_8, %c0_9] : memref<5x256x1xi32, #tpu.memory_space<vmem>>, vector<1x256x1xi32>
    %26 = vector.shape_cast %25 : vector<1x256x1xi32> to vector<256x1xi32>
    %27 = vector.broadcast %26 : vector<256x1xi32> to vector<256x128xi32>
    %28 = arith.cmpi eq, %0, %27 : vector<256x128xi32>
    %29 = arith.extui %28 : vector<256x128xi1> to vector<256x128xi32>
    %30 = arith.sitofp %29 : vector<256x128xi32> to vector<256x128xf32>
    %31 = tpu.concatenate %6, %12, %18, %24, %30 in 1 : vector<256x128xf32>, vector<256x128xf32>, vector<256x128xf32>, vector<256x128xf32>, vector<256x128xf32> -> vector<256x640xf32>
    %c0_10 = arith.constant 0 : index
    %c0_11 = arith.constant 0 : index
    %32 = vector.load %arg2[%c0_10, %c0_11] : memref<640x384xf32, #tpu.memory_space<vmem>>, vector<640x384xf32>
    %cst = arith.constant dense<0.000000e+00> : vector<256x384xf32>
    %33 = tpu.matmul %31, %32, %cst {dimension_numbers = #tpu.dot_dimension_numbers<[1], [0], [0], [1], [0, 0, 1, 1], [], []>} : vector<256x640xf32>, vector<640x384xf32>, vector<256x384xf32> -> vector<256x384xf32>
    %34 = vector.shape_cast %33 : vector<256x384xf32> to vector<8x32x384xf32>
    %35 = tpu.iota {dimensions = array<i32: 1>} : vector<1x32x128xi32>
    %36 = vector.extract_strided_slice %34 {offsets = [0, 0, 0], sizes = [8, 32, 128], strides = [1, 1, 1]} : vector<8x32x384xf32> to vector<8x32x128xf32>
    %c28_i32 = arith.constant 28 : i32
    %37 = vector.broadcast %c28_i32 : i32 to vector<1x32x128xi32>
    %38 = arith.cmpi slt, %35, %37 : vector<1x32x128xi32>
    %cst_12 = arith.constant 0xFF800000 : f32
    %39 = vector.shape_cast %38 : vector<1x32x128xi1> to vector<1x32x128xi1>
    %40 = vector.broadcast %39 : vector<1x32x128xi1> to vector<8x32x128xi1>
    %41 = vector.broadcast %cst_12 : f32 to vector<8x32x128xf32>
    %42 = arith.select %40, %36, %41 : vector<8x32x128xi1>, vector<8x32x128xf32>
    %cst_13 = arith.constant dense<0xFF800000> : vector<8x128xf32>
    %43 = vector.multi_reduction <maximumf>, %42, %cst_13 [1] : vector<8x32x128xf32> to vector<8x128xf32>
    %c0_14 = arith.constant 0 : index
    %c0_15 = arith.constant 0 : index
    %44 = vector.load %arg3[%c0_14, %c0_15] : memref<3x128xf32, #tpu.memory_space<vmem>>, vector<1x128xf32>
    %45 = vector.broadcast %44 : vector<1x128xf32> to vector<8x128xf32>
    %46 = arith.addf %43, %45 : vector<8x128xf32>
    %cst_16 = arith.constant 0.000000e+00 : f32
    %47 = vector.broadcast %cst_16 : f32 to vector<8x128xf32>
    %48 = arith.maximumf %46, %47 : vector<8x128xf32>
    %49 = vector.extract_strided_slice %34 {offsets = [0, 0, 128], sizes = [8, 32, 128], strides = [1, 1, 1]} : vector<8x32x384xf32> to vector<8x32x128xf32>
    %c27_i32 = arith.constant 27 : i32
    %50 = vector.broadcast %c27_i32 : i32 to vector<1x32x128xi32>
    %51 = arith.cmpi slt, %35, %50 : vector<1x32x128xi32>
    %cst_17 = arith.constant 0xFF800000 : f32
    %52 = vector.shape_cast %51 : vector<1x32x128xi1> to vector<1x32x128xi1>
    %53 = vector.broadcast %52 : vector<1x32x128xi1> to vector<8x32x128xi1>
    %54 = vector.broadcast %cst_17 : f32 to vector<8x32x128xf32>
    %55 = arith.select %53, %49, %54 : vector<8x32x128xi1>, vector<8x32x128xf32>
    %cst_18 = arith.constant dense<0xFF800000> : vector<8x128xf32>
    %56 = vector.multi_reduction <maximumf>, %55, %cst_18 [1] : vector<8x32x128xf32> to vector<8x128xf32>
    %c1_19 = arith.constant 1 : index
    %c0_20 = arith.constant 0 : index
    %57 = vector.load %arg3[%c1_19, %c0_20] : memref<3x128xf32, #tpu.memory_space<vmem>>, vector<1x128xf32>
    %58 = vector.broadcast %57 : vector<1x128xf32> to vector<8x128xf32>
    %59 = arith.addf %56, %58 : vector<8x128xf32>
    %cst_21 = arith.constant 0.000000e+00 : f32
    %60 = vector.broadcast %cst_21 : f32 to vector<8x128xf32>
    %61 = arith.maximumf %59, %60 : vector<8x128xf32>
    %62 = vector.extract_strided_slice %34 {offsets = [0, 0, 256], sizes = [8, 32, 128], strides = [1, 1, 1]} : vector<8x32x384xf32> to vector<8x32x128xf32>
    %c26_i32 = arith.constant 26 : i32
    %63 = vector.broadcast %c26_i32 : i32 to vector<1x32x128xi32>
    %64 = arith.cmpi slt, %35, %63 : vector<1x32x128xi32>
    %cst_22 = arith.constant 0xFF800000 : f32
    %65 = vector.shape_cast %64 : vector<1x32x128xi1> to vector<1x32x128xi1>
    %66 = vector.broadcast %65 : vector<1x32x128xi1> to vector<8x32x128xi1>
    %67 = vector.broadcast %cst_22 : f32 to vector<8x32x128xf32>
    %68 = arith.select %66, %62, %67 : vector<8x32x128xi1>, vector<8x32x128xf32>
    %cst_23 = arith.constant dense<0xFF800000> : vector<8x128xf32>
    %69 = vector.multi_reduction <maximumf>, %68, %cst_23 [1] : vector<8x32x128xf32> to vector<8x128xf32>
    %c2_24 = arith.constant 2 : index
    %c0_25 = arith.constant 0 : index
    %70 = vector.load %arg3[%c2_24, %c0_25] : memref<3x128xf32, #tpu.memory_space<vmem>>, vector<1x128xf32>
    %71 = vector.broadcast %70 : vector<1x128xf32> to vector<8x128xf32>
    %72 = arith.addf %69, %71 : vector<8x128xf32>
    %cst_26 = arith.constant 0.000000e+00 : f32
    %73 = vector.broadcast %cst_26 : f32 to vector<8x128xf32>
    %74 = arith.maximumf %72, %73 : vector<8x128xf32>
    %75 = tpu.concatenate %48, %61, %74 in 1 : vector<8x128xf32>, vector<8x128xf32>, vector<8x128xf32> -> vector<8x384xf32>
    %c0_27 = arith.constant 0 : index
    %c0_28 = arith.constant 0 : index
    %76 = vector.load %arg4[%c0_27, %c0_28] : memref<384x128xf32, #tpu.memory_space<vmem>>, vector<384x128xf32>
    %cst_29 = arith.constant dense<0.000000e+00> : vector<8x128xf32>
    %77 = tpu.matmul %75, %76, %cst_29 {dimension_numbers = #tpu.dot_dimension_numbers<[1], [0], [0], [1], [0, 0, 1, 1], [], []>} : vector<8x384xf32>, vector<384x128xf32>, vector<8x128xf32> -> vector<8x128xf32>
    %c0_30 = arith.constant 0 : index
    %c0_31 = arith.constant 0 : index
    %78 = vector.load %arg5[%c0_30, %c0_31] : memref<1x128xf32, #tpu.memory_space<vmem>>, vector<1x128xf32>
    %79 = vector.broadcast %78 : vector<1x128xf32> to vector<8x128xf32>
    %80 = arith.addf %77, %79 : vector<8x128xf32>
    %c0_32 = arith.constant 0 : index
    %c0_33 = arith.constant 0 : index
    %81 = vector.load %arg6[%c0_32, %c0_33] : memref<8x128xf32, #tpu.memory_space<vmem>>, vector<8x128xf32>
    tpu.vector_store %arg6[%c0_32, %c0_33], %80 {strides = array<i32>} : memref<8x128xf32, #tpu.memory_space<vmem>>, vector<8x128xf32>,
    return
  }
  func.func @transform_0(%arg0: i32) -> (i32, i32, i32) {
    %c0_i32 = arith.constant 0 : i32
    %c0_i32_0 = arith.constant 0 : i32
    %c0_i32_1 = arith.constant 0 : i32
    return %c0_i32, %arg0, %c0_i32_0 : i32, i32, i32
  }
  func.func @transform_1(%arg0: i32) -> (i32, i32) {
    %c0_i32 = arith.constant 0 : i32
    %c0_i32_0 = arith.constant 0 : i32
    %c0_i32_1 = arith.constant 0 : i32
    return %c0_i32, %c0_i32_0 : i32, i32
  }
  func.func @transform_2(%arg0: i32) -> (i32, i32) {
    %c0_i32 = arith.constant 0 : i32
    %c0_i32_0 = arith.constant 0 : i32
    %c0_i32_1 = arith.constant 0 : i32
    return %c0_i32, %c0_i32_0 : i32, i32
  }
  func.func @transform_3(%arg0: i32) -> (i32, i32) {
    %c0_i32 = arith.constant 0 : i32
    %c0_i32_0 = arith.constant 0 : i32
    %c0_i32_1 = arith.constant 0 : i32
    return %c0_i32, %c0_i32_0 : i32, i32
  }
  func.func @transform_4(%arg0: i32) -> (i32, i32) {
    %c0_i32 = arith.constant 0 : i32
    %c0_i32_0 = arith.constant 0 : i32
    %c0_i32_1 = arith.constant 0 : i32
    return %c0_i32, %c0_i32_0 : i32, i32
  }
  func.func @transform_5(%arg0: i32) -> (i32, i32) {
    %c0_i32 = arith.constant 0 : i32
    %c0_i32_0 = arith.constant 0 : i32
    return %arg0, %c0_i32 : i32, i32
  }
}

</mosaic_0001>

<llo_original>
// kernel: textcnn_forward.1
$region0: #{textcnn_forward.1}
  #allocation0 [shape = 'u32[]', space=smem, size = 0x4, offset = 0x4, fixed_abs, tag = 'smem constant byte address 0x4 - core index']
  #allocation1 [shape = 'u32[144,128]{1,0:T(1,128)}', space=vmem, size = 0x12000, scoped, tag = 'internal scratch']
  %s0 = inlined_call_operand.vmem [shape: s32[5,256,1], index: 0, kind: input, shape index: {}]
  %s1 = inlined_call_operand.hbm [shape: f32[640,384], index: 1, kind: input, shape index: {}]
  %s2 = inlined_call_operand.vmem [shape: f32[3,128], index: 2, kind: input, shape index: {}]
  %s3 = inlined_call_operand.vmem [shape: f32[384,128], index: 3, kind: input, shape index: {}]
  %s4 = inlined_call_operand.vmem [shape: f32[1,128], index: 4, kind: input, shape index: {}]
  %s5 = inlined_call_operand.vmem [shape: f32[8,128], index: 5, kind: output, shape index: {}]
  %s6 = sld [smem:[#allocation0]]
  $region34: #{textcnn_forward.1} parent=0
    _
  %s8 = ssub.s32 1, %s6
  %s9 = scalar_select 0, %s8, %s6
  $region1: #{textcnn_forward.1} parent=0
    #allocation2 [shape = 'u8[983040]{0}', space=vmem, size = 0xf0000, scoped, tag = 'input window, operand 1, single buffered']
    #allocation3 [shape = 's32[1]{0}', space=sflag, size = 0x4, scoped, tag = 'scoped memory for textcnn_forward.1']
    %10 = vsyncpa [#allocation3], 0
    // Predicated region
    $region2: #{textcnn_forward.1} parent=1 // pred_check
      _
    $region3: #{textcnn_forward.1} parent=1 // pred_check_branch
      %12 = sbr.rel (0) target = $region5
    $region4: #{textcnn_forward.1} parent=1 // pred_region
      _
    $region5: #{textcnn_forward.1} parent=1 // pred_fallthru
      _
    // Predicated region
    $region6: #{textcnn_forward.1} parent=1 // pred_check
      _
    $region7: #{textcnn_forward.1} parent=1 // pred_check_branch
      %14 = sbr.rel (0) target = $region9
    $region8: #{textcnn_forward.1} parent=1 // pred_region
      %s16 = ssub.s32 30720, 30720
      %17 = vsyncadd [#allocation3], %s16
      %s18 = sshll.u32 [#allocation2], 4
      %s19 = int_to_ptr.vmem [resolvable:$true] %s18
      %24 = dma.hbm_to_vmem [thread:$0]  %s1, 30720, %s19, [#allocation3], 384, 384, 24
    $region9: #{textcnn_forward.1} parent=1 // pred_fallthru
      _
    // Predicated region
    $region10: #{textcnn_forward.1} parent=1 // pred_check
      _
    $region11: #{textcnn_forward.1} parent=1 // pred_check_branch
      %26 = sbr.rel (0) target = $region13
    $region12: #{textcnn_forward.1} parent=1 // pred_region
      _
    $region13: #{textcnn_forward.1} parent=1 // pred_fallthru
      _
    // Predicated region
    $region14: #{textcnn_forward.1} parent=1 // pred_check
      _
    $region15: #{textcnn_forward.1} parent=1 // pred_check_branch
      %28 = sbr.rel (0) target = $region17
    $region16: #{textcnn_forward.1} parent=1 // pred_region
      _
    $region17: #{textcnn_forward.1} parent=1 // pred_fallthru
      _
    // Predicated region
    $region18: #{textcnn_forward.1} parent=1 // pred_check
      _
    $region19: #{textcnn_forward.1} parent=1 // pred_check_branch
      %30 = sbr.rel (0) target = $region21
    $region20: #{textcnn_forward.1} parent=1 // pred_region
      _
    $region21: #{textcnn_forward.1} parent=1 // pred_fallthru
      _
    // Predicated region
    $region22: #{textcnn_forward.1} parent=1 // pred_check
      _
    $region23: #{textcnn_forward.1} parent=1 // pred_check_branch
      %32 = sbr.rel (0) target = $region25
    $region24: #{textcnn_forward.1} parent=1 // pred_region
      %33 = dma.done [#allocation3], 30720
    $region25: #{textcnn_forward.1} parent=1 // pred_fallthru
      _
    %v34 = vlaneseq
    %v35 = vand.u32 %v34, 127
    %v36 = vld [vmem:[%s0] sm:$0xff]
    %v37 = vld [vmem:[%s0 + $0x8] sm:$0xff]
    %v38 = vld [vmem:[%s0 + $0x10] sm:$0xff]
    %v39 = vld [vmem:[%s0 + $0x18] sm:$0xff]
    %v40 = vld [vmem:[%s0 + $0x20] sm:$0xff]
    %v41 = vld [vmem:[%s0 + $0x28] sm:$0xff]
    %v42 = vld [vmem:[%s0 + $0x30] sm:$0xff]
    %v43 = vld [vmem:[%s0 + $0x38] sm:$0xff]
    %v44 = vld [vmem:[%s0 + $0x40] sm:$0xff]
    %v45 = vld [vmem:[%s0 + $0x48] sm:$0xff]
    %v46 = vld [vmem:[%s0 + $0x50] sm:$0xff]
    %v47 = vld [vmem:[%s0 + $0x58] sm:$0xff]
    %v48 = vld [vmem:[%s0 + $0x60] sm:$0xff]
    %v49 = vld [vmem:[%s0 + $0x68] sm:$0xff]
    %v50 = vld [vmem:[%s0 + $0x70] sm:$0xff]
    %v51 = vld [vmem:[%s0 + $0x78] sm:$0xff]
    %v52 = vld [vmem:[%s0 + $0x80] sm:$0xff]
    %v53 = vld [vmem:[%s0 + $0x88] sm:$0xff]
    %v54 = vld [vmem:[%s0 + $0x90] sm:$0xff]
    %v55 = vld [vmem:[%s0 + $0x98] sm:$0xff]
    %v56 = vld [vmem:[%s0 + $0xa0] sm:$0xff]
    %v57 = vld [vmem:[%s0 + $0xa8] sm:$0xff]
    %v58 = vld [vmem:[%s0 + $0xb0] sm:$0xff]
    %v59 = vld [vmem:[%s0 + $0xb8] sm:$0xff]
    %v60 = vld [vmem:[%s0 + $0xc0] sm:$0xff]
    %v61 = vld [vmem:[%s0 + $0xc8] sm:$0xff]
    %v62 = vld [vmem:[%s0 + $0xd0] sm:$0xff]
    %v63 = vld [vmem:[%s0 + $0xd8] sm:$0xff]
    %v64 = vld [vmem:[%s0 + $0xe0] sm:$0xff]
    %v65 = vld [vmem:[%s0 + $0xe8] sm:$0xff]
    %v66 = vld [vmem:[%s0 + $0xf0] sm:$0xff]
    %v67 = vld [vmem:[%s0 + $0xf8] sm:$0xff]
    %68 = vset.pattern.permute.xlu0 0
    %69 = vperm.xlu0 %68, %v36
    %v70 = vpop.permute.xlu0 %69
    %71 = vset.pattern.permute.xlu0 0
    %72 = vperm.xlu0 %71, %v37
    %v73 = vpop.permute.xlu0 %72
    %74 = vset.pattern.permute.xlu0 0
    %75 = vperm.xlu0 %74, %v38
    %v76 = vpop.permute.xlu0 %75
    %77 = vset.pattern.permute.xlu0 0
    %78 = vperm.xlu0 %77, %v39
    %v79 = vpop.permute.xlu0 %78
    %80 = vset.pattern.permute.xlu0 0
    %81 = vperm.xlu0 %80, %v40
    %v82 = vpop.permute.xlu0 %81
    %83 = vset.pattern.permute.xlu0 0
    %84 = vperm.xlu0 %83, %v41
    %v85 = vpop.permute.xlu0 %84
    %86 = vset.pattern.permute.xlu0 0
    %87 = vperm.xlu0 %86, %v42
    %v88 = vpop.permute.xlu0 %87
    %89 = vset.pattern.permute.xlu0 0
    %90 = vperm.xlu0 %89, %v43
    %v91 = vpop.permute.xlu0 %90
    %92 = vset.pattern.permute.xlu0 0
    %93 = vperm.xlu0 %92, %v44
    %v94 = vpop.permute.xlu0 %93
    %95 = vset.pattern.permute.xlu0 0
    %96 = vperm.xlu0 %95, %v45
    %v97 = vpop.permute.xlu0 %96
    %98 = vset.pattern.permute.xlu0 0
    %99 = vperm.xlu0 %98, %v46
    %v100 = vpop.permute.xlu0 %99
    %101 = vset.pattern.permute.xlu0 0
    %102 = vperm.xlu0 %101, %v47
    %v103 = vpop.permute.xlu0 %102
    %104 = vset.pattern.permute.xlu0 0
    %105 = vperm.xlu0 %104, %v48
    %v106 = vpop.permute.xlu0 %105
    %107 = vset.pattern.permute.xlu0 0
    %108 = vperm.xlu0 %107, %v49
    %v109 = vpop.permute.xlu0 %108
    %110 = vset.pattern.permute.xlu0 0
    %111 = vperm.xlu0 %110, %v50
    %v112 = vpop.permute.xlu0 %111
    %113 = vset.pattern.permute.xlu0 0
    %114 = vperm.xlu0 %113, %v51
    %v115 = vpop.permute.xlu0 %114
    %116 = vset.pattern.permute.xlu0 0
    %117 = vperm.xlu0 %116, %v52
    %v118 = vpop.permute.xlu0 %117
    %119 = vset.pattern.permute.xlu0 0
    %120 = vperm.xlu0 %119, %v53
    %v121 = vpop.permute.xlu0 %120
    %122 = vset.pattern.permute.xlu0 0
    %123 = vperm.xlu0 %122, %v54
    %v124 = vpop.permute.xlu0 %123
    %125 = vset.pattern.permute.xlu0 0
    %126 = vperm.xlu0 %125, %v55
    %v127 = vpop.permute.xlu0 %126
    %128 = vset.pattern.permute.xlu0 0
    %129 = vperm.xlu0 %128, %v56
    %v130 = vpop.permute.xlu0 %129
    %131 = vset.pattern.permute.xlu0 0
    %132 = vperm.xlu0 %131, %v57
    %v133 = vpop.permute.xlu0 %132
    %134 = vset.pattern.permute.xlu0 0
    %135 = vperm.xlu0 %134, %v58
    %v136 = vpop.permute.xlu0 %135
    %137 = vset.pattern.permute.xlu0 0
    %138 = vperm.xlu0 %137, %v59
    %v139 = vpop.permute.xlu0 %138
    %140 = vset.pattern.permute.xlu0 0
    %141 = vperm.xlu0 %140, %v60
    %v142 = vpop.permute.xlu0 %141
    %143 = vset.pattern.permute.xlu0 0
    %144 = vperm.xlu0 %143, %v61
    %v145 = vpop.permute.xlu0 %144
    %146 = vset.pattern.permute.xlu0 0
    %147 = vperm.xlu0 %146, %v62
    %v148 = vpop.permute.xlu0 %147
    %149 = vset.pattern.permute.xlu0 0
    %150 = vperm.xlu0 %149, %v63
    %v151 = vpop.permute.xlu0 %150
    %152 = vset.pattern.permute.xlu0 0
    %153 = vperm.xlu0 %152, %v64
    %v154 = vpop.permute.xlu0 %153
    %155 = vset.pattern.permute.xlu0 0
    %156 = vperm.xlu0 %155, %v65
    %v157 = vpop.permute.xlu0 %156
    %158 = vset.pattern.permute.xlu0 0
    %159 = vperm.xlu0 %158, %v66
    %v160 = vpop.permute.xlu0 %159
    %161 = vset.pattern.permute.xlu0 0
    %162 = vperm.xlu0 %161, %v67
    %v163 = vpop.permute.xlu0 %162
    %vm164 = vcmp.eq.s32.totalorder %v35, %v70
    %vm165 = vcmp.eq.s32.totalorder %v35, %v73
    %vm166 = vcmp.eq.s32.totalorder %v35, %v76
    %vm167 = vcmp.eq.s32.totalorder %v35, %v79
    %vm168 = vcmp.eq.s32.totalorder %v35, %v82
    %vm169 = vcmp.eq.s32.totalorder %v35, %v85
    %vm170 = vcmp.eq.s32.totalorder %v35, %v88
    %vm171 = vcmp.eq.s32.totalorder %v35, %v91
    %vm172 = vcmp.eq.s32.totalorder %v35, %v94
    %vm173 = vcmp.eq.s32.totalorder %v35, %v97
    %vm174 = vcmp.eq.s32.totalorder %v35, %v100
    %vm175 = vcmp.eq.s32.totalorder %v35, %v103
    %vm176 = vcmp.eq.s32.totalorder %v35, %v106
    %vm177 = vcmp.eq.s32.totalorder %v35, %v109
    %vm178 = vcmp.eq.s32.totalorder %v35, %v112
    %vm179 = vcmp.eq.s32.totalorder %v35, %v115
    %vm180 = vcmp.eq.s32.totalorder %v35, %v118
    %vm181 = vcmp.eq.s32.totalorder %v35, %v121
    %vm182 = vcmp.eq.s32.totalorder %v35, %v124
    %vm183 = vcmp.eq.s32.totalorder %v35, %v127
    %vm184 = vcmp.eq.s32.totalorder %v35, %v130
    %vm185 = vcmp.eq.s32.totalorder %v35, %v133
    %vm186 = vcmp.eq.s32.totalorder %v35, %v136
    %vm187 = vcmp.eq.s32.totalorder %v35, %v139
    %vm188 = vcmp.eq.s32.totalorder %v35, %v142
    %vm189 = vcmp.eq.s32.totalorder %v35, %v145
    %vm190 = vcmp.eq.s32.totalorder %v35, %v148
    %vm191 = vcmp.eq.s32.totalorder %v35, %v151
    %vm192 = vcmp.eq.s32.totalorder %v35, %v154
    %vm193 = vcmp.eq.s32.totalorder %v35, %v157
    %vm194 = vcmp.eq.s32.totalorder %v35, %v160
    %vm195 = vcmp.eq.s32.totalorder %v35, %v163
    %v196 = vsel %vm164, 1, 0
    %v197 = vsel %vm165, 1, 0
    %v198 = vsel %vm166, 1, 0
    %v199 = vsel %vm167, 1, 0
    %v200 = vsel %vm168, 1, 0
    %v201 = vsel %vm169, 1, 0
    %v202 = vsel %vm170, 1, 0
    %v203 = vsel %vm171, 1, 0
    %v204 = vsel %vm172, 1, 0
    %v205 = vsel %vm173, 1, 0
    %v206 = vsel %vm174, 1, 0
    %v207 = vsel %vm175, 1, 0
    %v208 = vsel %vm176, 1, 0
    %v209 = vsel %vm177, 1, 0
    %v210 = vsel %vm178, 1, 0
    %v211 = vsel %vm179, 1, 0
    %v212 = vsel %vm180, 1, 0
    %v213 = vsel %vm181, 1, 0
    %v214 = vsel %vm182, 1, 0
    %v215 = vsel %vm183, 1, 0
    %v216 = vsel %vm184, 1, 0
    %v217 = vsel %vm185, 1, 0
    %v218 = vsel %vm186, 1, 0
    %v219 = vsel %vm187, 1, 0
    %v220 = vsel %vm188, 1, 0
    %v221 = vsel %vm189, 1, 0
    %v222 = vsel %vm190, 1, 0
    %v223 = vsel %vm191, 1, 0
    %v224 = vsel %vm192, 1, 0
    %v225 = vsel %vm193, 1, 0
    %v226 = vsel %vm194, 1, 0
    %v227 = vsel %vm195, 1, 0
    %v228 = vcvt.s32.f32 %v196
    %v229 = vcvt.s32.f32 %v197
    %v230 = vcvt.s32.f32 %v198
    %v231 = vcvt.s32.f32 %v199
    %v232 = vcvt.s32.f32 %v200
    %v233 = vcvt.s32.f32 %v201
    %v234 = vcvt.s32.f32 %v202
    %v235 = vcvt.s32.f32 %v203
    %v236 = vcvt.s32.f32 %v204
    %v237 = vcvt.s32.f32 %v205
    %v238 = vcvt.s32.f32 %v206
    %v239 = vcvt.s32.f32 %v207
    %v240 = vcvt.s32.f32 %v208
    %v241 = vcvt.s32.f32 %v209
    %v242 = vcvt.s32.f32 %v210
    %v243 = vcvt.s32.f32 %v211
    %v244 = vcvt.s32.f32 %v212
    %v245 = vcvt.s32.f32 %v213
    %v246 = vcvt.s32.f32 %v214
    %v247 = vcvt.s32.f32 %v215
    %v248 = vcvt.s32.f32 %v216
    %v249 = vcvt.s32.f32 %v217
    %v250 = vcvt.s32.f32 %v218
    %v251 = vcvt.s32.f32 %v219
    %v252 = vcvt.s32.f32 %v220
    %v253 = vcvt.s32.f32 %v221
    %v254 = vcvt.s32.f32 %v222
    %v255 = vcvt.s32.f32 %v223
    %v256 = vcvt.s32.f32 %v224
    %v257 = vcvt.s32.f32 %v225
    %v258 = vcvt.s32.f32 %v226
    %v259 = vcvt.s32.f32 %v227
    %s260 = scalar_lea.vmem %s0, 256
    %v261 = vld [vmem:[%s260] sm:$0xff]
    %v262 = vld [vmem:[%s260 + $0x8] sm:$0xff]
    %v263 = vld [vmem:[%s260 + $0x10] sm:$0xff]
    %v264 = vld [vmem:[%s260 + $0x18] sm:$0xff]
    %v265 = vld [vmem:[%s260 + $0x20] sm:$0xff]
    %v266 = vld [vmem:[%s260 + $0x28] sm:$0xff]
    %v267 = vld [vmem:[%s260 + $0x30] sm:$0xff]
    %v268 = vld [vmem:[%s260 + $0x38] sm:$0xff]
    %v269 = vld [vmem:[%s260 + $0x40] sm:$0xff]
    %v270 = vld [vmem:[%s260 + $0x48] sm:$0xff]
    %v271 = vld [vmem:[%s260 + $0x50] sm:$0xff]
    %v272 = vld [vmem:[%s260 + $0x58] sm:$0xff]
    %v273 = vld [vmem:[%s260 + $0x60] sm:$0xff]
    %v274 = vld [vmem:[%s260 + $0x68] sm:$0xff]
    %v275 = vld [vmem:[%s260 + $0x70] sm:$0xff]
    %v276 = vld [vmem:[%s260 + $0x78] sm:$0xff]
    %v277 = vld [vmem:[%s260 + $0x80] sm:$0xff]
    %v278 = vld [vmem:[%s260 + $0x88] sm:$0xff]
    %v279 = vld [vmem:[%s260 + $0x90] sm:$0xff]
    %v280 = vld [vmem:[%s260 + $0x98] sm:$0xff]
    %v281 = vld [vmem:[%s260 + $0xa0] sm:$0xff]
    %v282 = vld [vmem:[%s260 + $0xa8] sm:$0xff]
    %v283 = vld [vmem:[%s260 + $0xb0] sm:$0xff]
    %v284 = vld [vmem:[%s260 + $0xb8] sm:$0xff]
    %v285 = vld [vmem:[%s260 + $0xc0] sm:$0xff]
    %v286 = vld [vmem:[%s260 + $0xc8] sm:$0xff]
    %v287 = vld [vmem:[%s260 + $0xd0] sm:$0xff]
    %v288 = vld [vmem:[%s260 + $0xd8] sm:$0xff]
    %v289 = vld [vmem:[%s260 + $0xe0] sm:$0xff]
    %v290 = vld [vmem:[%s260 + $0xe8] sm:$0xff]
    %v291 = vld [vmem:[%s260 + $0xf0] sm:$0xff]
    %v292 = vld [vmem:[%s260 + $0xf8] sm:$0xff]
    %293 = vset.pattern.permute.xlu0 0
    %294 = vperm.xlu0 %293, %v261
    %v295 = vpop.permute.xlu0 %294
    %296 = vset.pattern.permute.xlu0 0
    %297 = vperm.xlu0 %296, %v262
    %v298 = vpop.permute.xlu0 %297
    %299 = vset.pattern.permute.xlu0 0
    %300 = vperm.xlu0 %299, %v263
    %v301 = vpop.permute.xlu0 %300
    %302 = vset.pattern.permute.xlu0 0
    %303 = vperm.xlu0 %302, %v264
    %v304 = vpop.permute.xlu0 %303
    %305 = vset.pattern.permute.xlu0 0
    %306 = vperm.xlu0 %305, %v265
    %v307 = vpop.permute.xlu0 %306
    %308 = vset.pattern.permute.xlu0 0
    %309 = vperm.xlu0 %308, %v266
    %v310 = vpop.permute.xlu0 %309
    %311 = vset.pattern.permute.xlu0 0
    %312 = vperm.xlu0 %311, %v267
    %v313 = vpop.permute.xlu0 %312
    %314 = vset.pattern.permute.xlu0 0
    %315 = vperm.xlu0 %314, %v268
    %v316 = vpop.permute.xlu0 %315
    %317 = vset.pattern.permute.xlu0 0
    %318 = vperm.xlu0 %317, %v269
    %v319 = vpop.permute.xlu0 %318
    %320 = vset.pattern.permute.xlu0 0
    %321 = vperm.xlu0 %320, %v270
    %v322 = vpop.permute.xlu0 %321
    %323 = vset.pattern.permute.xlu0 0
    %324 = vperm.xlu0 %323, %v271
    %v325 = vpop.permute.xlu0 %324
    %326 = vset.pattern.permute.xlu0 0
    %327 = vperm.xlu0 %326, %v272
    %v328 = vpop.permute.xlu0 %327
    %329 = vset.pattern.permute.xlu0 0
    %330 = vperm.xlu0 %329, %v273
    %v331 = vpop.permute.xlu0 %330
    %332 = vset.pattern.permute.xlu0 0
    %333 = vperm.xlu0 %332, %v274
    %v334 = vpop.permute.xlu0 %333
    %335 = vset.pattern.permute.xlu0 0
    %336 = vperm.xlu0 %335, %v275
    %v337 = vpop.permute.xlu0 %336
    %338 = vset.pattern.permute.xlu0 0
    %339 = vperm.xlu0 %338, %v276
    %v340 = vpop.permute.xlu0 %339
    %341 = vset.pattern.permute.xlu0 0
    %342 = vperm.xlu0 %341, %v277
    %v343 = vpop.permute.xlu0 %342
    %344 = vset.pattern.permute.xlu0 0
    %345 = vperm.xlu0 %344, %v278
    %v346 = vpop.permute.xlu0 %345
    %347 = vset.pattern.permute.xlu0 0
    %348 = vperm.xlu0 %347, %v279
    %v349 = vpop.permute.xlu0 %348
    %350 = vset.pattern.permute.xlu0 0
    %351 = vperm.xlu0 %350, %v280
    %v352 = vpop.permute.xlu0 %351
    %353 = vset.pattern.permute.xlu0 0
    %354 = vperm.xlu0 %353, %v281
    %v355 = vpop.permute.xlu0 %354
    %356 = vset.pattern.permute.xlu0 0
    %357 = vperm.xlu0 %356, %v282
    %v358 = vpop.permute.xlu0 %357
    %359 = vset.pattern.permute.xlu0 0
    %360 = vperm.xlu0 %359, %v283
    %v361 = vpop.permute.xlu0 %360
    %362 = vset.pattern.permute.xlu0 0
    %363 = vperm.xlu0 %362, %v284
    %v364 = vpop.permute.xlu0 %363
    %365 = vset.pattern.permute.xlu0 0
    %366 = vperm.xlu0 %365, %v285
    %v367 = vpop.permute.xlu0 %366
    %368 = vset.pattern.permute.xlu0 0
    %369 = vperm.xlu0 %368, %v286
    %v370 = vpop.permute.xlu0 %369
    %371 = vset.pattern.permute.xlu0 0
    %372 = vperm.xlu0 %371, %v287
    %v373 = vpop.permute.xlu0 %372
    %374 = vset.pattern.permute.xlu0 0
    %375 = vperm.xlu0 %374, %v288
    %v376 = vpop.permute.xlu0 %375
    %377 = vset.pattern.permute.xlu0 0
    %378 = vperm.xlu0 %377, %v289
    %v379 = vpop.permute.xlu0 %378
    %380 = vset.pattern.permute.xlu0 0
    %381 = vperm.xlu0 %380, %v290
    %v382 = vpop.permute.xlu0 %381
    %383 = vset.pattern.permute.xlu0 0
    %384 = vperm.xlu0 %383, %v291
    %v385 = vpop.permute.xlu0 %384
    %386 = vset.pattern.permute.xlu0 0
    %387 = vperm.xlu0 %386, %v292
    %v388 = vpop.permute.xlu0 %387
    %vm389 = vcmp.eq.s32.totalorder %v35, %v295
    %vm390 = vcmp.eq.s32.totalorder %v35, %v298
    %vm391 = vcmp.eq.s32.totalorder %v35, %v301
    %vm392 = vcmp.eq.s32.totalorder %v35, %v304
    %vm393 = vcmp.eq.s32.totalorder %v35, %v307
    %vm394 = vcmp.eq.s32.totalorder %v35, %v310
    %vm395 = vcmp.eq.s32.totalorder %v35, %v313
    %vm396 = vcmp.eq.s32.totalorder %v35, %v316
    %vm397 = vcmp.eq.s32.totalorder %v35, %v319
    %vm398 = vcmp.eq.s32.totalorder %v35, %v322
    %vm399 = vcmp.eq.s32.totalorder %v35, %v325
    %vm400 = vcmp.eq.s32.totalorder %v35, %v328
    %vm401 = vcmp.eq.s32.totalorder %v35, %v331
    %vm402 = vcmp.eq.s32.totalorder %v35, %v334
    %vm403 = vcmp.eq.s32.totalorder %v35, %v337
    %vm404 = vcmp.eq.s32.totalorder %v35, %v340
    %vm405 = vcmp.eq.s32.totalorder %v35, %v343
    %vm406 = vcmp.eq.s32.totalorder %v35, %v346
    %vm407 = vcmp.eq.s32.totalorder %v35, %v349
    %vm408 = vcmp.eq.s32.totalorder %v35, %v352
    %vm409 = vcmp.eq.s32.totalorder %v35, %v355
    %vm410 = vcmp.eq.s32.totalorder %v35, %v358
    %vm411 = vcmp.eq.s32.totalorder %v35, %v361
    %vm412 = vcmp.eq.s32.totalorder %v35, %v364
    %vm413 = vcmp.eq.s32.totalorder %v35, %v367
    %vm414 = vcmp.eq.s32.totalorder %v35, %v370
    %vm415 = vcmp.eq.s32.totalorder %v35, %v373
    %vm416 = vcmp.eq.s32.totalorder %v35, %v376
    %vm417 = vcmp.eq.s32.totalorder %v35, %v379
    %vm418 = vcmp.eq.s32.totalorder %v35, %v382
    %vm419 = vcmp.eq.s32.totalorder %v35, %v385
    %vm420 = vcmp.eq.s32.totalorder %v35, %v388
    %v421 = vsel %vm389, 1, 0
    %v422 = vsel %vm390, 1, 0
    %v423 = vsel %vm391, 1, 0
    %v424 = vsel %vm392, 1, 0
    %v425 = vsel %vm393, 1, 0
    %v426 = vsel %vm394, 1, 0
    %v427 = vsel %vm395, 1, 0
    %v428 = vsel %vm396, 1, 0
    %v429 = vsel %vm397, 1, 0
    %v430 = vsel %vm398, 1, 0
    %v431 = vsel %vm399, 1, 0
    %v432 = vsel %vm400, 1, 0
    %v433 = vsel %vm401, 1, 0
    %v434 = vsel %vm402, 1, 0
    %v435 = vsel %vm403, 1, 0
    %v436 = vsel %vm404, 1, 0
    %v437 = vsel %vm405, 1, 0
    %v438 = vsel %vm406, 1, 0
    %v439 = vsel %vm407, 1, 0
    %v440 = vsel %vm408, 1, 0
    %v441 = vsel %vm409, 1, 0
    %v442 = vsel %vm410, 1, 0
    %v443 = vsel %vm411, 1, 0
    %v444 = vsel %vm412, 1, 0
    %v445 = vsel %vm413, 1, 0
    %v446 = vsel %vm414, 1, 0
    %v447 = vsel %vm415, 1, 0
    %v448 = vsel %vm416, 1, 0
    %v449 = vsel %vm417, 1, 0
    %v450 = vsel %vm418, 1, 0
    %v451 = vsel %vm419, 1, 0
    %v452 = vsel %vm420, 1, 0
    %v453 = vcvt.s32.f32 %v421
    %v454 = vcvt.s32.f32 %v422
    %v455 = vcvt.s32.f32 %v423
    %v456 = vcvt.s32.f32 %v424
    %v457 = vcvt.s32.f32 %v425
    %v458 = vcvt.s32.f32 %v426
    %v459 = vcvt.s32.f32 %v427
    %v460 = vcvt.s32.f32 %v428
    %v461 = vcvt.s32.f32 %v429
    %v462 = vcvt.s32.f32 %v430
    %v463 = vcvt.s32.f32 %v431
    %v464 = vcvt.s32.f32 %v432
    %v465 = vcvt.s32.f32 %v433
    %v466 = vcvt.s32.f32 %v434
    %v467 = vcvt.s32.f32 %v435
    %v468 = vcvt.s32.f32 %v436
    %v469 = vcvt.s32.f32 %v437
    %v470 = vcvt.s32.f32 %v438
    %v471 = vcvt.s32.f32 %v439
    %v472 = vcvt.s32.f32 %v440
    %v473 = vcvt.s32.f32 %v441
    %v474 = vcvt.s32.f32 %v442
    %v475 = vcvt.s32.f32 %v443
    %v476 = vcvt.s32.f32 %v444
    %v477 = vcvt.s32.f32 %v445
    %v478 = vcvt.s32.f32 %v446
    %v479 = vcvt.s32.f32 %v447
    %v480 = vcvt.s32.f32 %v448
    %v481 = vcvt.s32.f32 %v449
    %v482 = vcvt.s32.f32 %v450
    %v483 = vcvt.s32.f32 %v451
    %v484 = vcvt.s32.f32 %v452
    %s485 = scalar_lea.vmem %s0, 512
    %v486 = vld [vmem:[%s485] sm:$0xff]
    %v487 = vld [vmem:[%s485 + $0x8] sm:$0xff]
    %v488 = vld [vmem:[%s485 + $0x10] sm:$0xff]
    %v489 = vld [vmem:[%s485 + $0x18] sm:$0xff]
    %v490 = vld [vmem:[%s485 + $0x20] sm:$0xff]
    %v491 = vld [vmem:[%s485 + $0x28] sm:$0xff]
    %v492 = vld [vmem:[%s485 + $0x30] sm:$0xff]
    %v493 = vld [vmem:[%s485 + $0x38] sm:$0xff]
    %v494 = vld [vmem:[%s485 + $0x40] sm:$0xff]
    %v495 = vld [vmem:[%s485 + $0x48] sm:$0xff]
    %v496 = vld [vmem:[%s485 + $0x50] sm:$0xff]
    %v497 = vld [vmem:[%s485 + $0x58] sm:$0xff]
    %v498 = vld [vmem:[%s485 + $0x60] sm:$0xff]
    %v499 = vld [vmem:[%s485 + $0x68] sm:$0xff]
    %v500 = vld [vmem:[%s485 + $0x70] sm:$0xff]
    %v501 = vld [vmem:[%s485 + $0x78] sm:$0xff]
    %v502 = vld [vmem:[%s485 + $0x80] sm:$0xff]
    %v503 = vld [vmem:[%s485 + $0x88] sm:$0xff]
    %v504 = vld [vmem:[%s485 + $0x90] sm:$0xff]
    %v505 = vld [vmem:[%s485 + $0x98] sm:$0xff]
    %v506 = vld [vmem:[%s485 + $0xa0] sm:$0xff]
    %v507 = vld [vmem:[%s485 + $0xa8] sm:$0xff]
    %v508 = vld [vmem:[%s485 + $0xb0] sm:$0xff]
    %v509 = vld [vmem:[%s485 + $0xb8] sm:$0xff]
    %v510 = vld [vmem:[%s485 + $0xc0] sm:$0xff]
    %v511 = vld [vmem:[%s485 + $0xc8] sm:$0xff]
    %v512 = vld [vmem:[%s485 + $0xd0] sm:$0xff]
    %v513 = vld [vmem:[%s485 + $0xd8] sm:$0xff]
    %v514 = vld [vmem:[%s485 + $0xe0] sm:$0xff]
    %v515 = vld [vmem:[%s485 + $0xe8] sm:$0xff]
    %v516 = vld [vmem:[%s485 + $0xf0] sm:$0xff]
    %v517 = vld [vmem:[%s485 + $0xf8] sm:$0xff]
    %518 = vset.pattern.permute.xlu0 0
    %519 = vperm.xlu0 %518, %v486
    %v520 = vpop.permute.xlu0 %519
    %521 = vset.pattern.permute.xlu0 0
    %522 = vperm.xlu0 %521, %v487
    %v523 = vpop.permute.xlu0 %522
    %524 = vset.pattern.permute.xlu0 0
    %525 = vperm.xlu0 %524, %v488
    %v526 = vpop.permute.xlu0 %525
    %527 = vset.pattern.permute.xlu0 0
    %528 = vperm.xlu0 %527, %v489
    %v529 = vpop.permute.xlu0 %528
    %530 = vset.pattern.permute.xlu0 0
    %531 = vperm.xlu0 %530, %v490
    %v532 = vpop.permute.xlu0 %531
    %533 = vset.pattern.permute.xlu0 0
    %534 = vperm.xlu0 %533, %v491
    %v535 = vpop.permute.xlu0 %534
    %536 = vset.pattern.permute.xlu0 0
    %537 = vperm.xlu0 %536, %v492
    %v538 = vpop.permute.xlu0 %537
    %539 = vset.pattern.permute.xlu0 0
    %540 = vperm.xlu0 %539, %v493
    %v541 = vpop.permute.xlu0 %540
    %542 = vset.pattern.permute.xlu0 0
    %543 = vperm.xlu0 %542, %v494
    %v544 = vpop.permute.xlu0 %543
    %545 = vset.pattern.permute.xlu0 0
    %546 = vperm.xlu0 %545, %v495
    %v547 = vpop.permute.xlu0 %546
    %548 = vset.pattern.permute.xlu0 0
    %549 = vperm.xlu0 %548, %v496
    %v550 = vpop.permute.xlu0 %549
    %551 = vset.pattern.permute.xlu0 0
    %552 = vperm.xlu0 %551, %v497
    %v553 = vpop.permute.xlu0 %552
    %554 = vset.pattern.permute.xlu0 0
    %555 = vperm.xlu0 %554, %v498
    %v556 = vpop.permute.xlu0 %555
    %557 = vset.pattern.permute.xlu0 0
    %558 = vperm.xlu0 %557, %v499
    %v559 = vpop.permute.xlu0 %558
    %560 = vset.pattern.permute.xlu0 0
    %561 = vperm.xlu0 %560, %v500
    %v562 = vpop.permute.xlu0 %561
    %563 = vset.pattern.permute.xlu0 0
    %564 = vperm.xlu0 %563, %v501
    %v565 = vpop.permute.xlu0 %564
    %566 = vset.pattern.permute.xlu0 0
    %567 = vperm.xlu0 %566, %v502
    %v568 = vpop.permute.xlu0 %567
    %569 = vset.pattern.permute.xlu0 0
    %570 = vperm.xlu0 %569, %v503
    %v571 = vpop.permute.xlu0 %570
    %572 = vset.pattern.permute.xlu0 0
    %573 = vperm.xlu0 %572, %v504
    %v574 = vpop.permute.xlu0 %573
    %575 = vset.pattern.permute.xlu0 0
    %576 = vperm.xlu0 %575, %v505
    %v577 = vpop.permute.xlu0 %576
    %578 = vset.pattern.permute.xlu0 0
    %579 = vperm.xlu0 %578, %v506
    %v580 = vpop.permute.xlu0 %579
    %581 = vset.pattern.permute.xlu0 0
    %582 = vperm.xlu0 %581, %v507
    %v583 = vpop.permute.xlu0 %582
    %584 = vset.pattern.permute.xlu0 0
    %585 = vperm.xlu0 %584, %v508
    %v586 = vpop.permute.xlu0 %585
    %587 = vset.pattern.permute.xlu0 0
    %588 = vperm.xlu0 %587, %v509
    %v589 = vpop.permute.xlu0 %588
    %590 = vset.pattern.permute.xlu0 0
    %591 = vperm.xlu0 %590, %v510
    %v592 = vpop.permute.xlu0 %591
    %593 = vset.pattern.permute.xlu0 0
    %594 = vperm.xlu0 %593, %v511
    %v595 = vpop.permute.xlu0 %594
    %596 = vset.pattern.permute.xlu0 0
    %597 = vperm.xlu0 %596, %v512
    %v598 = vpop.permute.xlu0 %597
    %599 = vset.pattern.permute.xlu0 0
    %600 = vperm.xlu0 %599, %v513
    %v601 = vpop.permute.xlu0 %600
    %602 = vset.pattern.permute.xlu0 0
    %603 = vperm.xlu0 %602, %v514
    %v604 = vpop.permute.xlu0 %603
    %605 = vset.pattern.permute.xlu0 0
    %606 = vperm.xlu0 %605, %v515
    %v607 = vpop.permute.xlu0 %606
    %608 = vset.pattern.permute.xlu0 0
    %609 = vperm.xlu0 %608, %v516
    %v610 = vpop.permute.xlu0 %609
    %611 = vset.pattern.permute.xlu0 0
    %612 = vperm.xlu0 %611, %v517
    %v613 = vpop.permute.xlu0 %612
    %vm614 = vcmp.eq.s32.totalorder %v35, %v520
    %vm615 = vcmp.eq.s32.totalorder %v35, %v523
    %vm616 = vcmp.eq.s32.totalorder %v35, %v526
    %vm617 = vcmp.eq.s32.totalorder %v35, %v529
    %vm618 = vcmp.eq.s32.totalorder %v35, %v532
    %vm619 = vcmp.eq.s32.totalorder %v35, %v535
    %vm620 = vcmp.eq.s32.totalorder %v35, %v538
    %vm621 = vcmp.eq.s32.totalorder %v35, %v541
    %vm622 = vcmp.eq.s32.totalorder %v35, %v544
    %vm623 = vcmp.eq.s32.totalorder %v35, %v547
    %vm624 = vcmp.eq.s32.totalorder %v35, %v550
    %vm625 = vcmp.eq.s32.totalorder %v35, %v553
    %vm626 = vcmp.eq.s32.totalorder %v35, %v556
    %vm627 = vcmp.eq.s32.totalorder %v35, %v559
    %vm628 = vcmp.eq.s32.totalorder %v35, %v562
    %vm629 = vcmp.eq.s32.totalorder %v35, %v565
    %vm630 = vcmp.eq.s32.totalorder %v35, %v568
    %vm631 = vcmp.eq.s32.totalorder %v35, %v571
    %vm632 = vcmp.eq.s32.totalorder %v35, %v574
    %vm633 = vcmp.eq.s32.totalorder %v35, %v577
    %vm634 = vcmp.eq.s32.totalorder %v35, %v580
    %vm635 = vcmp.eq.s32.totalorder %v35, %v583
    %vm636 = vcmp.eq.s32.totalorder %v35, %v586
    %vm637 = vcmp.eq.s32.totalorder %v35, %v589
    %vm638 = vcmp.eq.s32.totalorder %v35, %v592
    %vm639 = vcmp.eq.s32.totalorder %v35, %v595
    %vm640 = vcmp.eq.s32.totalorder %v35, %v598
    %vm641 = vcmp.eq.s32.totalorder %v35, %v601
    %vm642 = vcmp.eq.s32.totalorder %v35, %v604
    %vm643 = vcmp.eq.s32.totalorder %v35, %v607
    %vm644 = vcmp.eq.s32.totalorder %v35, %v610
    %vm645 = vcmp.eq.s32.totalorder %v35, %v613
    %v646 = vsel %vm614, 1, 0
    %v647 = vsel %vm615, 1, 0
    %v648 = vsel %vm616, 1, 0
    %v649 = vsel %vm617, 1, 0
    %v650 = vsel %vm618, 1, 0
    %v651 = vsel %vm619, 1, 0
    %v652 = vsel %vm620, 1, 0
    %v653 = vsel %vm621, 1, 0
    %v654 = vsel %vm622, 1, 0
    %v655 = vsel %vm623, 1, 0
    %v656 = vsel %vm624, 1, 0
    %v657 = vsel %vm625, 1, 0
    %v658 = vsel %vm626, 1, 0
    %v659 = vsel %vm627, 1, 0
    %v660 = vsel %vm628, 1, 0
    %v661 = vsel %vm629, 1, 0
    %v662 = vsel %vm630, 1, 0
    %v663 = vsel %vm631, 1, 0
    %v664 = vsel %vm632, 1, 0
    %v665 = vsel %vm633, 1, 0
    %v666 = vsel %vm634, 1, 0
    %v667 = vsel %vm635, 1, 0
    %v668 = vsel %vm636, 1, 0
    %v669 = vsel %vm637, 1, 0
    %v670 = vsel %vm638, 1, 0
    %v671 = vsel %vm639, 1, 0
    %v672 = vsel %vm640, 1, 0
    %v673 = vsel %vm641, 1, 0
    %v674 = vsel %vm642, 1, 0
    %v675 = vsel %vm643, 1, 0
    %v676 = vsel %vm644, 1, 0
    %v677 = vsel %vm645, 1, 0
    %v678 = vcvt.s32.f32 %v646
    %v679 = vcvt.s32.f32 %v647
    %v680 = vcvt.s32.f32 %v648
    %v681 = vcvt.s32.f32 %v649
    %v682 = vcvt.s32.f32 %v650
    %v683 = vcvt.s32.f32 %v651
    %v684 = vcvt.s32.f32 %v652
    %v685 = vcvt.s32.f32 %v653
    %v686 = vcvt.s32.f32 %v654
    %v687 = vcvt.s32.f32 %v655
    %v688 = vcvt.s32.f32 %v656
    %v689 = vcvt.s32.f32 %v657
    %v690 = vcvt.s32.f32 %v658
    %v691 = vcvt.s32.f32 %v659
    %v692 = vcvt.s32.f32 %v660
    %v693 = vcvt.s32.f32 %v661
    %v694 = vcvt.s32.f32 %v662
    %v695 = vcvt.s32.f32 %v663
    %v696 = vcvt.s32.f32 %v664
    %v697 = vcvt.s32.f32 %v665
    %v698 = vcvt.s32.f32 %v666
    %v699 = vcvt.s32.f32 %v667
    %v700 = vcvt.s32.f32 %v668
    %v701 = vcvt.s32.f32 %v669
    %v702 = vcvt.s32.f32 %v670
    %v703 = vcvt.s32.f32 %v671
    %v704 = vcvt.s32.f32 %v672
    %v705 = vcvt.s32.f32 %v673
    %v706 = vcvt.s32.f32 %v674
    %v707 = vcvt.s32.f32 %v675
    %v708 = vcvt.s32.f32 %v676
    %v709 = vcvt.s32.f32 %v677
    %s710 = scalar_lea.vmem %s0, 768
    %v711 = vld [vmem:[%s710] sm:$0xff]
    %v712 = vld [vmem:[%s710 + $0x8] sm:$0xff]
    %v713 = vld [vmem:[%s710 + $0x10] sm:$0xff]
    %v714 = vld [vmem:[%s710 + $0x18] sm:$0xff]
    %v715 = vld [vmem:[%s710 + $0x20] sm:$0xff]
    %v716 = vld [vmem:[%s710 + $0x28] sm:$0xff]
    %v717 = vld [vmem:[%s710 + $0x30] sm:$0xff]
    %v718 = vld [vmem:[%s710 + $0x38] sm:$0xff]
    %v719 = vld [vmem:[%s710 + $0x40] sm:$0xff]
    %v720 = vld [vmem:[%s710 + $0x48] sm:$0xff]
    %v721 = vld [vmem:[%s710 + $0x50] sm:$0xff]
    %v722 = vld [vmem:[%s710 + $0x58] sm:$0xff]
    %v723 = vld [vmem:[%s710 + $0x60] sm:$0xff]
    %v724 = vld [vmem:[%s710 + $0x68] sm:$0xff]
    %v725 = vld [vmem:[%s710 + $0x70] sm:$0xff]
    %v726 = vld [vmem:[%s710 + $0x78] sm:$0xff]
    %v727 = vld [vmem:[%s710 + $0x80] sm:$0xff]
    %v728 = vld [vmem:[%s710 + $0x88] sm:$0xff]
    %v729 = vld [vmem:[%s710 + $0x90] sm:$0xff]
    %v730 = vld [vmem:[%s710 + $0x98] sm:$0xff]
    %v731 = vld [vmem:[%s710 + $0xa0] sm:$0xff]
    %v732 = vld [vmem:[%s710 + $0xa8] sm:$0xff]
    %v733 = vld [vmem:[%s710 + $0xb0] sm:$0xff]
    %v734 = vld [vmem:[%s710 + $0xb8] sm:$0xff]
    %v735 = vld [vmem:[%s710 + $0xc0] sm:$0xff]
    %v736 = vld [vmem:[%s710 + $0xc8] sm:$0xff]
    %v737 = vld [vmem:[%s710 + $0xd0] sm:$0xff]
    %v738 = vld [vmem:[%s710 + $0xd8] sm:$0xff]
    %v739 = vld [vmem:[%s710 + $0xe0] sm:$0xff]
    %v740 = vld [vmem:[%s710 + $0xe8] sm:$0xff]
    %v741 = vld [vmem:[%s710 + $0xf0] sm:$0xff]
    %v742 = vld [vmem:[%s710 + $0xf8] sm:$0xff]
    %743 = vset.pattern.permute.xlu0 0
    %744 = vperm.xlu0 %743, %v711
    %v745 = vpop.permute.xlu0 %744
    %746 = vset.pattern.permute.xlu0 0
    %747 = vperm.xlu0 %746, %v712
    %v748 = vpop.permute.xlu0 %747
    %749 = vset.pattern.permute.xlu0 0
    %750 = vperm.xlu0 %749, %v713
    %v751 = vpop.permute.xlu0 %750
    %752 = vset.pattern.permute.xlu0 0
    %753 = vperm.xlu0 %752, %v714
    %v754 = vpop.permute.xlu0 %753
    %755 = vset.pattern.permute.xlu0 0
    %756 = vperm.xlu0 %755, %v715
    %v757 = vpop.permute.xlu0 %756
    %758 = vset.pattern.permute.xlu0 0
    %759 = vperm.xlu0 %758, %v716
    %v760 = vpop.permute.xlu0 %759
    %761 = vset.pattern.permute.xlu0 0
    %762 = vperm.xlu0 %761, %v717
    %v763 = vpop.permute.xlu0 %762
    %764 = vset.pattern.permute.xlu0 0
    %765 = vperm.xlu0 %764, %v718
    %v766 = vpop.permute.xlu0 %765
    %767 = vset.pattern.permute.xlu0 0
    %768 = vperm.xlu0 %767, %v719
    %v769 = vpop.permute.xlu0 %768
    %770 = vset.pattern.permute.xlu0 0
    %771 = vperm.xlu0 %770, %v720
    %v772 = vpop.permute.xlu0 %771
    %773 = vset.pattern.permute.xlu0 0
    %774 = vperm.xlu0 %773, %v721
    %v775 = vpop.permute.xlu0 %774
    %776 = vset.pattern.permute.xlu0 0
    %777 = vperm.xlu0 %776, %v722
    %v778 = vpop.permute.xlu0 %777
    %779 = vset.pattern.permute.xlu0 0
    %780 = vperm.xlu0 %779, %v723
    %v781 = vpop.permute.xlu0 %780
    %782 = vset.pattern.permute.xlu0 0
    %783 = vperm.xlu0 %782, %v724
    %v784 = vpop.permute.xlu0 %783
    %785 = vset.pattern.permute.xlu0 0
    %786 = vperm.xlu0 %785, %v725
    %v787 = vpop.permute.xlu0 %786
    %788 = vset.pattern.permute.xlu0 0
    %789 = vperm.xlu0 %788, %v726
    %v790 = vpop.permute.xlu0 %789
    %791 = vset.pattern.permute.xlu0 0
    %792 = vperm.xlu0 %791, %v727
    %v793 = vpop.permute.xlu0 %792
    %794 = vset.pattern.permute.xlu0 0
    %795 = vperm.xlu0 %794, %v728
    %v796 = vpop.permute.xlu0 %795
    %797 = vset.pattern.permute.xlu0 0
    %798 = vperm.xlu0 %797, %v729
    %v799 = vpop.permute.xlu0 %798
    %800 = vset.pattern.permute.xlu0 0
    %801 = vperm.xlu0 %800, %v730
    %v802 = vpop.permute.xlu0 %801
    %803 = vset.pattern.permute.xlu0 0
    %804 = vperm.xlu0 %803, %v731
    %v805 = vpop.permute.xlu0 %804
    %806 = vset.pattern.permute.xlu0 0
    %807 = vperm.xlu0 %806, %v732
    %v808 = vpop.permute.xlu0 %807
    %809 = vset.pattern.permute.xlu0 0
    %810 = vperm.xlu0 %809, %v733
    %v811 = vpop.permute.xlu0 %810
    %812 = vset.pattern.permute.xlu0 0
    %813 = vperm.xlu0 %812, %v734
    %v814 = vpop.permute.xlu0 %813
    %815 = vset.pattern.permute.xlu0 0
    %816 = vperm.xlu0 %815, %v735
    %v817 = vpop.permute.xlu0 %816
    %818 = vset.pattern.permute.xlu0 0
    %819 = vperm.xlu0 %818, %v736
    %v820 = vpop.permute.xlu0 %819
    %821 = vset.pattern.permute.xlu0 0
    %822 = vperm.xlu0 %821, %v737
    %v823 = vpop.permute.xlu0 %822
    %824 = vset.pattern.permute.xlu0 0
    %825 = vperm.xlu0 %824, %v738
    %v826 = vpop.permute.xlu0 %825
    %827 = vset.pattern.permute.xlu0 0
    %828 = vperm.xlu0 %827, %v739
    %v829 = vpop.permute.xlu0 %828
    %830 = vset.pattern.permute.xlu0 0
    %831 = vperm.xlu0 %830, %v740
    %v832 = vpop.permute.xlu0 %831
    %833 = vset.pattern.permute.xlu0 0
    %834 = vperm.xlu0 %833, %v741
    %v835 = vpop.permute.xlu0 %834
    %836 = vset.pattern.permute.xlu0 0
    %837 = vperm.xlu0 %836, %v742
    %v838 = vpop.permute.xlu0 %837
    %vm839 = vcmp.eq.s32.totalorder %v35, %v745
    %vm840 = vcmp.eq.s32.totalorder %v35, %v748
    %vm841 = vcmp.eq.s32.totalorder %v35, %v751
    %vm842 = vcmp.eq.s32.totalorder %v35, %v754
    %vm843 = vcmp.eq.s32.totalorder %v35, %v757
    %vm844 = vcmp.eq.s32.totalorder %v35, %v760
    %vm845 = vcmp.eq.s32.totalorder %v35, %v763
    %vm846 = vcmp.eq.s32.totalorder %v35, %v766
    %vm847 = vcmp.eq.s32.totalorder %v35, %v769
    %vm848 = vcmp.eq.s32.totalorder %v35, %v772
    %vm849 = vcmp.eq.s32.totalorder %v35, %v775
    %vm850 = vcmp.eq.s32.totalorder %v35, %v778
    %vm851 = vcmp.eq.s32.totalorder %v35, %v781
    %vm852 = vcmp.eq.s32.totalorder %v35, %v784
    %vm853 = vcmp.eq.s32.totalorder %v35, %v787
    %vm854 = vcmp.eq.s32.totalorder %v35, %v790
    %vm855 = vcmp.eq.s32.totalorder %v35, %v793
    %vm856 = vcmp.eq.s32.totalorder %v35, %v796
    %vm857 = vcmp.eq.s32.totalorder %v35, %v799
    %vm858 = vcmp.eq.s32.totalorder %v35, %v802
    %vm859 = vcmp.eq.s32.totalorder %v35, %v805
    %vm860 = vcmp.eq.s32.totalorder %v35, %v808
    %vm861 = vcmp.eq.s32.totalorder %v35, %v811
    %vm862 = vcmp.eq.s32.totalorder %v35, %v814
    %vm863 = vcmp.eq.s32.totalorder %v35, %v817
    %vm864 = vcmp.eq.s32.totalorder %v35, %v820
    %vm865 = vcmp.eq.s32.totalorder %v35, %v823
    %vm866 = vcmp.eq.s32.totalorder %v35, %v826
    %vm867 = vcmp.eq.s32.totalorder %v35, %v829
    %vm868 = vcmp.eq.s32.totalorder %v35, %v832
    %vm869 = vcmp.eq.s32.totalorder %v35, %v835
    %vm870 = vcmp.eq.s32.totalorder %v35, %v838
    %v871 = vsel %vm839, 1, 0
    %v872 = vsel %vm840, 1, 0
    %v873 = vsel %vm841, 1, 0
    %v874 = vsel %vm842, 1, 0
    %v875 = vsel %vm843, 1, 0
    %v876 = vsel %vm844, 1, 0
    %v877 = vsel %vm845, 1, 0
    %v878 = vsel %vm846, 1, 0
    %v879 = vsel %vm847, 1, 0
    %v880 = vsel %vm848, 1, 0
    %v881 = vsel %vm849, 1, 0
    %v882 = vsel %vm850, 1, 0
    %v883 = vsel %vm851, 1, 0
    %v884 = vsel %vm852, 1, 0
    %v885 = vsel %vm853, 1, 0
    %v886 = vsel %vm854, 1, 0
    %v887 = vsel %vm855, 1, 0
    %v888 = vsel %vm856, 1, 0
    %v889 = vsel %vm857, 1, 0
    %v890 = vsel %vm858, 1, 0
    %v891 = vsel %vm859, 1, 0
    %v892 = vsel %vm860, 1, 0
    %v893 = vsel %vm861, 1, 0
    %v894 = vsel %vm862, 1, 0
    %v895 = vsel %vm863, 1, 0
    %v896 = vsel %vm864, 1, 0
    %v897 = vsel %vm865, 1, 0
    %v898 = vsel %vm866, 1, 0
    %v899 = vsel %vm867, 1, 0
    %v900 = vsel %vm868, 1, 0
    %v901 = vsel %vm869, 1, 0
    %v902 = vsel %vm870, 1, 0
    %v903 = vcvt.s32.f32 %v871
    %v904 = vcvt.s32.f32 %v872
    %v905 = vcvt.s32.f32 %v873
    %v906 = vcvt.s32.f32 %v874
    %v907 = vcvt.s32.f32 %v875
    %v908 = vcvt.s32.f32 %v876
    %v909 = vcvt.s32.f32 %v877
    %v910 = vcvt.s32.f32 %v878
    %v911 = vcvt.s32.f32 %v879
    %v912 = vcvt.s32.f32 %v880
    %v913 = vcvt.s32.f32 %v881
    %v914 = vcvt.s32.f32 %v882
    %v915 = vcvt.s32.f32 %v883
    %v916 = vcvt.s32.f32 %v884
    %v917 = vcvt.s32.f32 %v885
    %v918 = vcvt.s32.f32 %v886
    %v919 = vcvt.s32.f32 %v887
    %v920 = vcvt.s32.f32 %v888
    %v921 = vcvt.s32.f32 %v889
    %v922 = vcvt.s32.f32 %v890
    %v923 = vcvt.s32.f32 %v891
    %v924 = vcvt.s32.f32 %v892
    %v925 = vcvt.s32.f32 %v893
    %v926 = vcvt.s32.f32 %v894
    %v927 = vcvt.s32.f32 %v895
    %v928 = vcvt.s32.f32 %v896
    %v929 = vcvt.s32.f32 %v897
    %v930 = vcvt.s32.f32 %v898
    %v931 = vcvt.s32.f32 %v899
    %v932 = vcvt.s32.f32 %v900
    %v933 = vcvt.s32.f32 %v901
    %v934 = vcvt.s32.f32 %v902
    %s935 = scalar_lea.vmem %s0, 1024
    %v936 = vld [vmem:[%s935] sm:$0xff]
    %v937 = vld [vmem:[%s935 + $0x8] sm:$0xff]
    %v938 = vld [vmem:[%s935 + $0x10] sm:$0xff]
    %v939 = vld [vmem:[%s935 + $0x18] sm:$0xff]
    %v940 = vld [vmem:[%s935 + $0x20] sm:$0xff]
    %v941 = vld [vmem:[%s935 + $0x28] sm:$0xff]
    %v942 = vld [vmem:[%s935 + $0x30] sm:$0xff]
    %v943 = vld [vmem:[%s935 + $0x38] sm:$0xff]
    %v944 = vld [vmem:[%s935 + $0x40] sm:$0xff]
    %v945 = vld [vmem:[%s935 + $0x48] sm:$0xff]
    %v946 = vld [vmem:[%s935 + $0x50] sm:$0xff]
    %v947 = vld [vmem:[%s935 + $0x58] sm:$0xff]
    %v948 = vld [vmem:[%s935 + $0x60] sm:$0xff]
    %v949 = vld [vmem:[%s935 + $0x68] sm:$0xff]
    %v950 = vld [vmem:[%s935 + $0x70] sm:$0xff]
    %v951 = vld [vmem:[%s935 + $0x78] sm:$0xff]
    %v952 = vld [vmem:[%s935 + $0x80] sm:$0xff]
    %v953 = vld [vmem:[%s935 + $0x88] sm:$0xff]
    %v954 = vld [vmem:[%s935 + $0x90] sm:$0xff]
    %v955 = vld [vmem:[%s935 + $0x98] sm:$0xff]
    %v956 = vld [vmem:[%s935 + $0xa0] sm:$0xff]
    %v957 = vld [vmem:[%s935 + $0xa8] sm:$0xff]
    %v958 = vld [vmem:[%s935 + $0xb0] sm:$0xff]
    %v959 = vld [vmem:[%s935 + $0xb8] sm:$0xff]
    %v960 = vld [vmem:[%s935 + $0xc0] sm:$0xff]
    %v961 = vld [vmem:[%s935 + $0xc8] sm:$0xff]
    %v962 = vld [vmem:[%s935 + $0xd0] sm:$0xff]
    %v963 = vld [vmem:[%s935 + $0xd8] sm:$0xff]
    %v964 = vld [vmem:[%s935 + $0xe0] sm:$0xff]
    %v965 = vld [vmem:[%s935 + $0xe8] sm:$0xff]
    %v966 = vld [vmem:[%s935 + $0xf0] sm:$0xff]
    %v967 = vld [vmem:[%s935 + $0xf8] sm:$0xff]
    %968 = vset.pattern.permute.xlu0 0
    %969 = vperm.xlu0 %968, %v936
    %v970 = vpop.permute.xlu0 %969
    %971 = vset.pattern.permute.xlu0 0
    %972 = vperm.xlu0 %971, %v937
    %v973 = vpop.permute.xlu0 %972
    %974 = vset.pattern.permute.xlu0 0
    %975 = vperm.xlu0 %974, %v938
    %v976 = vpop.permute.xlu0 %975
    %977 = vset.pattern.permute.xlu0 0
    %978 = vperm.xlu0 %977, %v939
    %v979 = vpop.permute.xlu0 %978
    %980 = vset.pattern.permute.xlu0 0
    %981 = vperm.xlu0 %980, %v940
    %v982 = vpop.permute.xlu0 %981
    %983 = vset.pattern.permute.xlu0 0
    %984 = vperm.xlu0 %983, %v941
    %v985 = vpop.permute.xlu0 %984
    %986 = vset.pattern.permute.xlu0 0
    %987 = vperm.xlu0 %986, %v942
    %v988 = vpop.permute.xlu0 %987
    %989 = vset.pattern.permute.xlu0 0
    %990 = vperm.xlu0 %989, %v943
    %v991 = vpop.permute.xlu0 %990
    %992 = vset.pattern.permute.xlu0 0
    %993 = vperm.xlu0 %992, %v944
    %v994 = vpop.permute.xlu0 %993
    %995 = vset.pattern.permute.xlu0 0
    %996 = vperm.xlu0 %995, %v945
    %v997 = vpop.permute.xlu0 %996
    %998 = vset.pattern.permute.xlu0 0
    %999 = vperm.xlu0 %998, %v946
    %v1000 = vpop.permute.xlu0 %999
    %1001 = vset.pattern.permute.xlu0 0
    %1002 = vperm.xlu0 %1001, %v947
    %v1003 = vpop.permute.xlu0 %1002
    %1004 = vset.pattern.permute.xlu0 0
    %1005 = vperm.xlu0 %1004, %v948
    %v1006 = vpop.permute.xlu0 %1005
    %1007 = vset.pattern.permute.xlu0 0
    %1008 = vperm.xlu0 %1007, %v949
    %v1009 = vpop.permute.xlu0 %1008
    %1010 = vset.pattern.permute.xlu0 0
    %1011 = vperm.xlu0 %1010, %v950
    %v1012 = vpop.permute.xlu0 %1011
    %1013 = vset.pattern.permute.xlu0 0
    %1014 = vperm.xlu0 %1013, %v951
    %v1015 = vpop.permute.xlu0 %1014
    %1016 = vset.pattern.permute.xlu0 0
    %1017 = vperm.xlu0 %1016, %v952
    %v1018 = vpop.permute.xlu0 %1017
    %1019 = vset.pattern.permute.xlu0 0
    %1020 = vperm.xlu0 %1019, %v953
    %v1021 = vpop.permute.xlu0 %1020
    %1022 = vset.pattern.permute.xlu0 0
    %1023 = vperm.xlu0 %1022, %v954
    %v1024 = vpop.permute.xlu0 %1023
    %1025 = vset.pattern.permute.xlu0 0
    %1026 = vperm.xlu0 %1025, %v955
    %v1027 = vpop.permute.xlu0 %1026
    %1028 = vset.pattern.permute.xlu0 0
    %1029 = vperm.xlu0 %1028, %v956
    %v1030 = vpop.permute.xlu0 %1029
    %1031 = vset.pattern.permute.xlu0 0
    %1032 = vperm.xlu0 %1031, %v957
    %v1033 = vpop.permute.xlu0 %1032
    %1034 = vset.pattern.permute.xlu0 0
    %1035 = vperm.xlu0 %1034, %v958
    %v1036 = vpop.permute.xlu0 %1035
    %1037 = vset.pattern.permute.xlu0 0
    %1038 = vperm.xlu0 %1037, %v959
    %v1039 = vpop.permute.xlu0 %1038
    %1040 = vset.pattern.permute.xlu0 0
    %1041 = vperm.xlu0 %1040, %v960
    %v1042 = vpop.permute.xlu0 %1041
    %1043 = vset.pattern.permute.xlu0 0
    %1044 = vperm.xlu0 %1043, %v961
    %v1045 = vpop.permute.xlu0 %1044
    %1046 = vset.pattern.permute.xlu0 0
    %1047 = vperm.xlu0 %1046, %v962
    %v1048 = vpop.permute.xlu0 %1047
    %1049 = vset.pattern.permute.xlu0 0
    %1050 = vperm.xlu0 %1049, %v963
    %v1051 = vpop.permute.xlu0 %1050
    %1052 = vset.pattern.permute.xlu0 0
    %1053 = vperm.xlu0 %1052, %v964
    %v1054 = vpop.permute.xlu0 %1053
    %1055 = vset.pattern.permute.xlu0 0
    %1056 = vperm.xlu0 %1055, %v965
    %v1057 = vpop.permute.xlu0 %1056
    %1058 = vset.pattern.permute.xlu0 0
    %1059 = vperm.xlu0 %1058, %v966
    %v1060 = vpop.permute.xlu0 %1059
    %1061 = vset.pattern.permute.xlu0 0
    %1062 = vperm.xlu0 %1061, %v967
    %v1063 = vpop.permute.xlu0 %1062
    %vm1064 = vcmp.eq.s32.totalorder %v35, %v970
    %vm1065 = vcmp.eq.s32.totalorder %v35, %v973
    %vm1066 = vcmp.eq.s32.totalorder %v35, %v976
    %vm1067 = vcmp.eq.s32.totalorder %v35, %v979
    %vm1068 = vcmp.eq.s32.totalorder %v35, %v982
    %vm1069 = vcmp.eq.s32.totalorder %v35, %v985
    %vm1070 = vcmp.eq.s32.totalorder %v35, %v988
    %vm1071 = vcmp.eq.s32.totalorder %v35, %v991
    %vm1072 = vcmp.eq.s32.totalorder %v35, %v994
    %vm1073 = vcmp.eq.s32.totalorder %v35, %v997
    %vm1074 = vcmp.eq.s32.totalorder %v35, %v1000
    %vm1075 = vcmp.eq.s32.totalorder %v35, %v1003
    %vm1076 = vcmp.eq.s32.totalorder %v35, %v1006
    %vm1077 = vcmp.eq.s32.totalorder %v35, %v1009
    %vm1078 = vcmp.eq.s32.totalorder %v35, %v1012
    %vm1079 = vcmp.eq.s32.totalorder %v35, %v1015
    %vm1080 = vcmp.eq.s32.totalorder %v35, %v1018
    %vm1081 = vcmp.eq.s32.totalorder %v35, %v1021
    %vm1082 = vcmp.eq.s32.totalorder %v35, %v1024
    %vm1083 = vcmp.eq.s32.totalorder %v35, %v1027
    %vm1084 = vcmp.eq.s32.totalorder %v35, %v1030
    %vm1085 = vcmp.eq.s32.totalorder %v35, %v1033
    %vm1086 = vcmp.eq.s32.totalorder %v35, %v1036
    %vm1087 = vcmp.eq.s32.totalorder %v35, %v1039
    %vm1088 = vcmp.eq.s32.totalorder %v35, %v1042
    %vm1089 = vcmp.eq.s32.totalorder %v35, %v1045
    %vm1090 = vcmp.eq.s32.totalorder %v35, %v1048
    %vm1091 = vcmp.eq.s32.totalorder %v35, %v1051
    %vm1092 = vcmp.eq.s32.totalorder %v35, %v1054
    %vm1093 = vcmp.eq.s32.totalorder %v35, %v1057
    %vm1094 = vcmp.eq.s32.totalorder %v35, %v1060
    %vm1095 = vcmp.eq.s32.totalorder %v35, %v1063
    %v1096 = vsel %vm1064, 1, 0
    %v1097 = vsel %vm1065, 1, 0
    %v1098 = vsel %vm1066, 1, 0
    %v1099 = vsel %vm1067, 1, 0
    %v1100 = vsel %vm1068, 1, 0
    %v1101 = vsel %vm1069, 1, 0
    %v1102 = vsel %vm1070, 1, 0
    %v1103 = vsel %vm1071, 1, 0
    %v1104 = vsel %vm1072, 1, 0
    %v1105 = vsel %vm1073, 1, 0
    %v1106 = vsel %vm1074, 1, 0
    %v1107 = vsel %vm1075, 1, 0
    %v1108 = vsel %vm1076, 1, 0
    %v1109 = vsel %vm1077, 1, 0
    %v1110 = vsel %vm1078, 1, 0
    %v1111 = vsel %vm1079, 1, 0
    %v1112 = vsel %vm1080, 1, 0
    %v1113 = vsel %vm1081, 1, 0
    %v1114 = vsel %vm1082, 1, 0
    %v1115 = vsel %vm1083, 1, 0
    %v1116 = vsel %vm1084, 1, 0
    %v1117 = vsel %vm1085, 1, 0
    %v1118 = vsel %vm1086, 1, 0
    %v1119 = vsel %vm1087, 1, 0
    %v1120 = vsel %vm1088, 1, 0
    %v1121 = vsel %vm1089, 1, 0
    %v1122 = vsel %vm1090, 1, 0
    %v1123 = vsel %vm1091, 1, 0
    %v1124 = vsel %vm1092, 1, 0
    %v1125 = vsel %vm1093, 1, 0
    %v1126 = vsel %vm1094, 1, 0
    %v1127 = vsel %vm1095, 1, 0
    %v1128 = vcvt.s32.f32 %v1096
    %v1129 = vcvt.s32.f32 %v1097
    %v1130 = vcvt.s32.f32 %v1098
    %v1131 = vcvt.s32.f32 %v1099
    %v1132 = vcvt.s32.f32 %v1100
    %v1133 = vcvt.s32.f32 %v1101
    %v1134 = vcvt.s32.f32 %v1102
    %v1135 = vcvt.s32.f32 %v1103
    %v1136 = vcvt.s32.f32 %v1104
    %v1137 = vcvt.s32.f32 %v1105
    %v1138 = vcvt.s32.f32 %v1106
    %v1139 = vcvt.s32.f32 %v1107
    %v1140 = vcvt.s32.f32 %v1108
    %v1141 = vcvt.s32.f32 %v1109
    %v1142 = vcvt.s32.f32 %v1110
    %v1143 = vcvt.s32.f32 %v1111
    %v1144 = vcvt.s32.f32 %v1112
    %v1145 = vcvt.s32.f32 %v1113
    %v1146 = vcvt.s32.f32 %v1114
    %v1147 = vcvt.s32.f32 %v1115
    %v1148 = vcvt.s32.f32 %v1116
    %v1149 = vcvt.s32.f32 %v1117
    %v1150 = vcvt.s32.f32 %v1118
    %v1151 = vcvt.s32.f32 %v1119
    %v1152 = vcvt.s32.f32 %v1120
    %v1153 = vcvt.s32.f32 %v1121
    %v1154 = vcvt.s32.f32 %v1122
    %v1155 = vcvt.s32.f32 %v1123
    %v1156 = vcvt.s32.f32 %v1124
    %v1157 = vcvt.s32.f32 %v1125
    %v1158 = vcvt.s32.f32 %v1126
    %v1159 = vcvt.s32.f32 %v1127
    %v1160 = vld [vmem:[#allocation2] sm:$0xff]
    %v1161 = vld [vmem:[#allocation2 + $0x8] sm:$0xff]
    %v1162 = vld [vmem:[#allocation2 + $0x10] sm:$0xff]
    %v1163 = vld [vmem:[#allocation2 + $0x18] sm:$0xff]
    %v1164 = vld [vmem:[#allocation2 + $0x20] sm:$0xff]
    %v1165 = vld [vmem:[#allocation2 + $0x28] sm:$0xff]
    %v1166 = vld [vmem:[#allocation2 + $0x30] sm:$0xff]
    %v1167 = vld [vmem:[#allocation2 + $0x38] sm:$0xff]
    %v1168 = vld [vmem:[#allocation2 + $0x40] sm:$0xff]
    %v1169 = vld [vmem:[#allocation2 + $0x48] sm:$0xff]
    %v1170 = vld [vmem:[#allocation2 + $0x50] sm:$0xff]
    %v1171 = vld [vmem:[#allocation2 + $0x58] sm:$0xff]
    %v1172 = vld [vmem:[#allocation2 + $0x60] sm:$0xff]
    %v1173 = vld [vmem:[#allocation2 + $0x68] sm:$0xff]
    %v1174 = vld [vmem:[#allocation2 + $0x70] sm:$0xff]
    %v1175 = vld [vmem:[#allocation2 + $0x78] sm:$0xff]
    %v1176 = vld [vmem:[#allocation2 + $0x80] sm:$0xff]
    %v1177 = vld [vmem:[#allocation2 + $0x88] sm:$0xff]
    %v1178 = vld [vmem:[#allocation2 + $0x90] sm:$0xff]
    %v1179 = vld [vmem:[#allocation2 + $0x98] sm:$0xff]
    %v1180 = vld [vmem:[#allocation2 + $0xa0] sm:$0xff]
    %v1181 = vld [vmem:[#allocation2 + $0xa8] sm:$0xff]
    %v1182 = vld [vmem:[#allocation2 + $0xb0] sm:$0xff]
    %v1183 = vld [vmem:[#allocation2 + $0xb8] sm:$0xff]
    %v1184 = vld [vmem:[#allocation2 + $0xc0] sm:$0xff]
    %v1185 = vld [vmem:[#allocation2 + $0xc8] sm:$0xff]
    %v1186 = vld [vmem:[#allocation2 + $0xd0] sm:$0xff]
    %v1187 = vld [vmem:[#allocation2 + $0xd8] sm:$0xff]
    %v1188 = vld [vmem:[#allocation2 + $0xe0] sm:$0xff]
    %v1189 = vld [vmem:[#allocation2 + $0xe8] sm:$0xff]
    %v1190 = vld [vmem:[#allocation2 + $0xf0] sm:$0xff]
    %v1191 = vld [vmem:[#allocation2 + $0xf8] sm:$0xff]
    %v1192 = vld [vmem:[#allocation2 + $0x100] sm:$0xff]
    %v1193 = vld [vmem:[#allocation2 + $0x108] sm:$0xff]
    %v1194 = vld [vmem:[#allocation2 + $0x110] sm:$0xff]
    %v1195 = vld [vmem:[#allocation2 + $0x118] sm:$0xff]
    %v1196 = vld [vmem:[#allocation2 + $0x120] sm:$0xff]
    %v1197 = vld [vmem:[#allocation2 + $0x128] sm:$0xff]
    %v1198 = vld [vmem:[#allocation2 + $0x130] sm:$0xff]
    %v1199 = vld [vmem:[#allocation2 + $0x138] sm:$0xff]
    %v1200 = vld [vmem:[#allocation2 + $0x140] sm:$0xff]
    %v1201 = vld [vmem:[#allocation2 + $0x148] sm:$0xff]
    %v1202 = vld [vmem:[#allocation2 + $0x150] sm:$0xff]
    %v1203 = vld [vmem:[#allocation2 + $0x158] sm:$0xff]
    %v1204 = vld [vmem:[#allocation2 + $0x160] sm:$0xff]
    %v1205 = vld [vmem:[#allocation2 + $0x168] sm:$0xff]
    %v1206 = vld [vmem:[#allocation2 + $0x170] sm:$0xff]
    %v1207 = vld [vmem:[#allocation2 + $0x178] sm:$0xff]
    %v1208 = vld [vmem:[#allocation2 + $0x180] sm:$0xff]
    %v1209 = vld [vmem:[#allocation2 + $0x188] sm:$0xff]
    %v1210 = vld [vmem:[#allocation2 + $0x190] sm:$0xff]
    %v1211 = vld [vmem:[#allocation2 + $0x198] sm:$0xff]
    %v1212 = vld [vmem:[#allocation2 + $0x1a0] sm:$0xff]
    %v1213 = vld [vmem:[#allocation2 + $0x1a8] sm:$0xff]
    %v1214 = vld [vmem:[#allocation2 + $0x1b0] sm:$0xff]
    %v1215 = vld [vmem:[#allocation2 + $0x1b8] sm:$0xff]
    %v1216 = vld [vmem:[#allocation2 + $0x1c0] sm:$0xff]
    %v1217 = vld [vmem:[#allocation2 + $0x1c8] sm:$0xff]
    %v1218 = vld [vmem:[#allocation2 + $0x1d0] sm:$0xff]
    %v1219 = vld [vmem:[#allocation2 + $0x1d8] sm:$0xff]
    %v1220 = vld [vmem:[#allocation2 + $0x1e0] sm:$0xff]
    %v1221 = vld [vmem:[#allocation2 + $0x1e8] sm:$0xff]
    %v1222 = vld [vmem:[#allocation2 + $0x1f0] sm:$0xff]
    %v1223 = vld [vmem:[#allocation2 + $0x1f8] sm:$0xff]
    %v1224 = vld [vmem:[#allocation2 + $0x200] sm:$0xff]
    %v1225 = vld [vmem:[#allocation2 + $0x208] sm:$0xff]
    %v1226 = vld [vmem:[#allocation2 + $0x210] sm:$0xff]
    %v1227 = vld [vmem:[#allocation2 + $0x218] sm:$0xff]
    %v1228 = vld [vmem:[#allocation2 + $0x220] sm:$0xff]
    %v1229 = vld [vmem:[#allocation2 + $0x228] sm:$0xff]
    %v1230 = vld [vmem:[#allocation2 + $0x230] sm:$0xff]
    %v1231 = vld [vmem:[#allocation2 + $0x238] sm:$0xff]
    %v1232 = vld [vmem:[#allocation2 + $0x240] sm:$0xff]
    %v1233 = vld [vmem:[#allocation2 + $0x248] sm:$0xff]
    %v1234 = vld [vmem:[#allocation2 + $0x250] sm:$0xff]
    %v1235 = vld [vmem:[#allocation2 + $0x258] sm:$0xff]
    %v1236 = vld [vmem:[#allocation2 + $0x260] sm:$0xff]
    %v1237 = vld [vmem:[#allocation2 + $0x268] sm:$0xff]
    %v1238 = vld [vmem:[#allocation2 + $0x270] sm:$0xff]
    %v1239 = vld [vmem:[#allocation2 + $0x278] sm:$0xff]
    %v1240 = vld [vmem:[#allocation2 + $0x280] sm:$0xff]
    %v1241 = vld [vmem:[#allocation2 + $0x288] sm:$0xff]
    %v1242 = vld [vmem:[#allocation2 + $0x290] sm:$0xff]
    %v1243 = vld [vmem:[#allocation2 + $0x298] sm:$0xff]
    %v1244 = vld [vmem:[#allocation2 + $0x2a0] sm:$0xff]
    %v1245 = vld [vmem:[#allocation2 + $0x2a8] sm:$0xff]
    %v1246 = vld [vmem:[#allocation2 + $0x2b0] sm:$0xff]
    %v1247 = vld [vmem:[#allocation2 + $0x2b8] sm:$0xff]
    %v1248 = vld [vmem:[#allocation2 + $0x2c0] sm:$0xff]
    %v1249 = vld [vmem:[#allocation2 + $0x2c8] sm:$0xff]
    %v1250 = vld [vmem:[#allocation2 + $0x2d0] sm:$0xff]
    %v1251 = vld [vmem:[#allocation2 + $0x2d8] sm:$0xff]
    %v1252 = vld [vmem:[#allocation2 + $0x2e0] sm:$0xff]
    %v1253 = vld [vmem:[#allocation2 + $0x2e8] sm:$0xff]
    %v1254 = vld [vmem:[#allocation2 + $0x2f0] sm:$0xff]
    %v1255 = vld [vmem:[#allocation2 + $0x2f8] sm:$0xff]
    %v1256 = vld [vmem:[#allocation2 + $0x300] sm:$0xff]
    %v1257 = vld [vmem:[#allocation2 + $0x308] sm:$0xff]
    %v1258 = vld [vmem:[#allocation2 + $0x310] sm:$0xff]
    %v1259 = vld [vmem:[#allocation2 + $0x318] sm:$0xff]
    %v1260 = vld [vmem:[#allocation2 + $0x320] sm:$0xff]
    %v1261 = vld [vmem:[#allocation2 + $0x328] sm:$0xff]
    %v1262 = vld [vmem:[#allocation2 + $0x330] sm:$0xff]
    %v1263 = vld [vmem:[#allocation2 + $0x338] sm:$0xff]
    %v1264 = vld [vmem:[#allocation2 + $0x340] sm:$0xff]
    %v1265 = vld [vmem:[#allocation2 + $0x348] sm:$0xff]
    %v1266 = vld [vmem:[#allocation2 + $0x350] sm:$0xff]
    %v1267 = vld [vmem:[#allocation2 + $0x358] sm:$0xff]
    %v1268 = vld [vmem:[#allocation2 + $0x360] sm:$0xff]
    %v1269 = vld [vmem:[#allocation2 + $0x368] sm:$0xff]
    %v1270 = vld [vmem:[#allocation2 + $0x370] sm:$0xff]
    %v1271 = vld [vmem:[#allocation2 + $0x378] sm:$0xff]
    %v1272 = vld [vmem:[#allocation2 + $0x380] sm:$0xff]
    %v1273 = vld [vmem:[#allocation2 + $0x388] sm:$0xff]
    %v1274 = vld [vmem:[#allocation2 + $0x390] sm:$0xff]
    %v1275 = vld [vmem:[#allocation2 + $0x398] sm:$0xff]
    %v1276 = vld [vmem:[#allocation2 + $0x3a0] sm:$0xff]
    %v1277 = vld [vmem:[#allocation2 + $0x3a8] sm:$0xff]
    %v1278 = vld [vmem:[#allocation2 + $0x3b0] sm:$0xff]
    %v1279 = vld [vmem:[#allocation2 + $0x3b8] sm:$0xff]
    %v1280 = vld [vmem:[#allocation2 + $0x3c0] sm:$0xff]
    %v1281 = vld [vmem:[#allocation2 + $0x3c8] sm:$0xff]
    %v1282 = vld [vmem:[#allocation2 + $0x3d0] sm:$0xff]
    %v1283 = vld [vmem:[#allocation2 + $0x3d8] sm:$0xff]
    %v1284 = vld [vmem:[#allocation2 + $0x3e0] sm:$0xff]
    %v1285 = vld [vmem:[#allocation2 + $0x3e8] sm:$0xff]
    %v1286 = vld [vmem:[#allocation2 + $0x3f0] sm:$0xff]
    %v1287 = vld [vmem:[#allocation2 + $0x3f8] sm:$0xff]
    %v1288 = vld [vmem:[#allocation2 + $0x400] sm:$0xff]
    %v1289 = vld [vmem:[#allocation2 + $0x408] sm:$0xff]
    %v1290 = vld [vmem:[#allocation2 + $0x410] sm:$0xff]
    %v1291 = vld [vmem:[#allocation2 + $0x418] sm:$0xff]
    %v1292 = vld [vmem:[#allocation2 + $0x420] sm:$0xff]
    %v1293 = vld [vmem:[#allocation2 + $0x428] sm:$0xff]
    %v1294 = vld [vmem:[#allocation2 + $0x430] sm:$0xff]
    %v1295 = vld [vmem:[#allocation2 + $0x438] sm:$0xff]
    %v1296 = vld [vmem:[#allocation2 + $0x440] sm:$0xff]
    %v1297 = vld [vmem:[#allocation2 + $0x448] sm:$0xff]
    %v1298 = vld [vmem:[#allocation2 + $0x450] sm:$0xff]
    %v1299 = vld [vmem:[#allocation2 + $0x458] sm:$0xff]
    %v1300 = vld [vmem:[#allocation2 + $0x460] sm:$0xff]
    %v1301 = vld [vmem:[#allocation2 + $0x468] sm:$0xff]
    %v1302 = vld [vmem:[#allocation2 + $0x470] sm:$0xff]
    %v1303 = vld [vmem:[#allocation2 + $0x478] sm:$0xff]
    %v1304 = vld [vmem:[#allocation2 + $0x480] sm:$0xff]
    %v1305 = vld [vmem:[#allocation2 + $0x488] sm:$0xff]
    %v1306 = vld [vmem:[#allocation2 + $0x490] sm:$0xff]
    %v1307 = vld [vmem:[#allocation2 + $0x498] sm:$0xff]
    %v1308 = vld [vmem:[#allocation2 + $0x4a0] sm:$0xff]
    %v1309 = vld [vmem:[#allocation2 + $0x4a8] sm:$0xff]
    %v1310 = vld [vmem:[#allocation2 + $0x4b0] sm:$0xff]
    %v1311 = vld [vmem:[#allocation2 + $0x4b8] sm:$0xff]
    %v1312 = vld [vmem:[#allocation2 + $0x4c0] sm:$0xff]
    %v1313 = vld [vmem:[#allocation2 + $0x4c8] sm:$0xff]
    %v1314 = vld [vmem:[#allocation2 + $0x4d0] sm:$0xff]
    %v1315 = vld [vmem:[#allocation2 + $0x4d8] sm:$0xff]
    %v1316 = vld [vmem:[#allocation2 + $0x4e0] sm:$0xff]
    %v1317 = vld [vmem:[#allocation2 + $0x4e8] sm:$0xff]
    %v1318 = vld [vmem:[#allocation2 + $0x4f0] sm:$0xff]
    %v1319 = vld [vmem:[#allocation2 + $0x4f8] sm:$0xff]
    %v1320 = vld [vmem:[#allocation2 + $0x500] sm:$0xff]
    %v1321 = vld [vmem:[#allocation2 + $0x508] sm:$0xff]
    %v1322 = vld [vmem:[#allocation2 + $0x510] sm:$0xff]
    %v1323 = vld [vmem:[#allocation2 + $0x518] sm:$0xff]
    %v1324 = vld [vmem:[#allocation2 + $0x520] sm:$0xff]
    %v1325 = vld [vmem:[#allocation2 + $0x528] sm:$0xff]
    %v1326 = vld [vmem:[#allocation2 + $0x530] sm:$0xff]
    %v1327 = vld [vmem:[#allocation2 + $0x538] sm:$0xff]
    %v1328 = vld [vmem:[#allocation2 + $0x540] sm:$0xff]
    %v1329 = vld [vmem:[#allocation2 + $0x548] sm:$0xff]
    %v1330 = vld [vmem:[#allocation2 + $0x550] sm:$0xff]
    %v1331 = vld [vmem:[#allocation2 + $0x558] sm:$0xff]
    %v1332 = vld [vmem:[#allocation2 + $0x560] sm:$0xff]
    %v1333 = vld [vmem:[#allocation2 + $0x568] sm:$0xff]
    %v1334 = vld [vmem:[#allocation2 + $0x570] sm:$0xff]
    %v1335 = vld [vmem:[#allocation2 + $0x578] sm:$0xff]
    %v1336 = vld [vmem:[#allocation2 + $0x580] sm:$0xff]
    %v1337 = vld [vmem:[#allocation2 + $0x588] sm:$0xff]
    %v1338 = vld [vmem:[#allocation2 + $0x590] sm:$0xff]
    %v1339 = vld [vmem:[#allocation2 + $0x598] sm:$0xff]
    %v1340 = vld [vmem:[#allocation2 + $0x5a0] sm:$0xff]
    %v1341 = vld [vmem:[#allocation2 + $0x5a8] sm:$0xff]
    %v1342 = vld [vmem:[#allocation2 + $0x5b0] sm:$0xff]
    %v1343 = vld [vmem:[#allocation2 + $0x5b8] sm:$0xff]
    %v1344 = vld [vmem:[#allocation2 + $0x5c0] sm:$0xff]
    %v1345 = vld [vmem:[#allocation2 + $0x5c8] sm:$0xff]
    %v1346 = vld [vmem:[#allocation2 + $0x5d0] sm:$0xff]
    %v1347 = vld [vmem:[#allocation2 + $0x5d8] sm:$0xff]
    %v1348 = vld [vmem:[#allocation2 + $0x5e0] sm:$0xff]
    %v1349 = vld [vmem:[#allocation2 + $0x5e8] sm:$0xff]
    %v1350 = vld [vmem:[#allocation2 + $0x5f0] sm:$0xff]
    %v1351 = vld [vmem:[#allocation2 + $0x5f8] sm:$0xff]
    %v1352 = vld [vmem:[#allocation2 + $0x600] sm:$0xff]
    %v1353 = vld [vmem:[#allocation2 + $0x608] sm:$0xff]
    %v1354 = vld [vmem:[#allocation2 + $0x610] sm:$0xff]
    %v1355 = vld [vmem:[#allocation2 + $0x618] sm:$0xff]
    %v1356 = vld [vmem:[#allocation2 + $0x620] sm:$0xff]
    %v1357 = vld [vmem:[#allocation2 + $0x628] sm:$0xff]
    %v1358 = vld [vmem:[#allocation2 + $0x630] sm:$0xff]
    %v1359 = vld [vmem:[#allocation2 + $0x638] sm:$0xff]
    %v1360 = vld [vmem:[#allocation2 + $0x640] sm:$0xff]
    %v1361 = vld [vmem:[#allocation2 + $0x648] sm:$0xff]
    %v1362 = vld [vmem:[#allocation2 + $0x650] sm:$0xff]
    %v1363 = vld [vmem:[#allocation2 + $0x658] sm:$0xff]
    %v1364 = vld [vmem:[#allocation2 + $0x660] sm:$0xff]
    %v1365 = vld [vmem:[#allocation2 + $0x668] sm:$0xff]
    %v1366 = vld [vmem:[#allocation2 + $0x670] sm:$0xff]
    %v1367 = vld [vmem:[#allocation2 + $0x678] sm:$0xff]
    %v1368 = vld [vmem:[#allocation2 + $0x680] sm:$0xff]
    %v1369 = vld [vmem:[#allocation2 + $0x688] sm:$0xff]
    %v1370 = vld [vmem:[#allocation2 + $0x690] sm:$0xff]
    %v1371 = vld [vmem:[#allocation2 + $0x698] sm:$0xff]
    %v1372 = vld [vmem:[#allocation2 + $0x6a0] sm:$0xff]
    %v1373 = vld [vmem:[#allocation2 + $0x6a8] sm:$0xff]
    %v1374 = vld [vmem:[#allocation2 + $0x6b0] sm:$0xff]
    %v1375 = vld [vmem:[#allocation2 + $0x6b8] sm:$0xff]
    %v1376 = vld [vmem:[#allocation2 + $0x6c0] sm:$0xff]
    %v1377 = vld [vmem:[#allocation2 + $0x6c8] sm:$0xff]
    %v1378 = vld [vmem:[#allocation2 + $0x6d0] sm:$0xff]
    %v1379 = vld [vmem:[#allocation2 + $0x6d8] sm:$0xff]
    %v1380 = vld [vmem:[#allocation2 + $0x6e0] sm:$0xff]
    %v1381 = vld [vmem:[#allocation2 + $0x6e8] sm:$0xff]
    %v1382 = vld [vmem:[#allocation2 + $0x6f0] sm:$0xff]
    %v1383 = vld [vmem:[#allocation2 + $0x6f8] sm:$0xff]
    %v1384 = vld [vmem:[#allocation2 + $0x700] sm:$0xff]
    %v1385 = vld [vmem:[#allocation2 + $0x708] sm:$0xff]
    %v1386 = vld [vmem:[#allocation2 + $0x710] sm:$0xff]
    %v1387 = vld [vmem:[#allocation2 + $0x718] sm:$0xff]
    %v1388 = vld [vmem:[#allocation2 + $0x720] sm:$0xff]
    %v1389 = vld [vmem:[#allocation2 + $0x728] sm:$0xff]
    %v1390 = vld [vmem:[#allocation2 + $0x730] sm:$0xff]
    %v1391 = vld [vmem:[#allocation2 + $0x738] sm:$0xff]
    %v1392 = vld [vmem:[#allocation2 + $0x740] sm:$0xff]
    %v1393 = vld [vmem:[#allocation2 + $0x748] sm:$0xff]
    %v1394 = vld [vmem:[#allocation2 + $0x750] sm:$0xff]
    %v1395 = vld [vmem:[#allocation2 + $0x758] sm:$0xff]
    %v1396 = vld [vmem:[#allocation2 + $0x760] sm:$0xff]
    %v1397 = vld [vmem:[#allocation2 + $0x768] sm:$0xff]
    %v1398 = vld [vmem:[#allocation2 + $0x770] sm:$0xff]
    %v1399 = vld [vmem:[#allocation2 + $0x778] sm:$0xff]
    %1400 = vmatprep.subr.mxu0 %v1206
    %1401 = vmatpush1.msra.mxu0 %v1205
    %1402 = vmatprep.subr.mxu0 %v1203
    %1403 = vmatpush1.msra.mxu0 %v1202
    %1404 = vmatprep.subr.mxu0 %v1200
    %1405 = vmatpush1.msra.mxu0 %v1199
    %1406 = vmatprep.subr.mxu0 %v1197
    %1407 = vmatpush1.msra.mxu0 %v1196
    %1408 = vmatprep.subr.mxu0 %v1194
    %1409 = vmatpush1.msra.mxu0 %v1193
    %1410 = vmatprep.subr.mxu0 %v1191
    %1411 = vmatpush1.msra.mxu0 %v1190
    %1412 = vmatprep.subr.mxu0 %v1188
    %1413 = vmatpush1.msra.mxu0 %v1187
    %1414 = vmatprep.subr.mxu0 %v1185
    %1415 = vmatpush1.msra.mxu0 %v1184
    %1416 = vmatprep.subr.mxu0 %v1182
    %1417 = vmatpush1.msra.mxu0 %v1181
    %1418 = vmatprep.subr.mxu0 %v1179
    %1419 = vmatpush1.msra.mxu0 %v1178
    %1420 = vmatprep.subr.mxu0 %v1176
    %1421 = vmatpush1.msra.mxu0 %v1175
    %1422 = vmatprep.subr.mxu0 %v1173
    %1423 = vmatpush1.msra.mxu0 %v1172
    %1424 = vmatprep.subr.mxu0 %v1170
    %1425 = vmatpush1.msra.mxu0 %v1169
    %1426 = vmatprep.subr.mxu0 %v1167
    %1427 = vmatpush1.msra.mxu0 %v1166
    %1428 = vmatprep.subr.mxu0 %v1164
    %1429 = vmatpush1.msra.mxu0 %v1163
    %1430 = vmatprep.subr.mxu0 %v1161
    %1431 = vmatpush1.msra.mxu0 %v1160
    %1432 = vmatprep.subr.mxu0 %v1254
    %1433 = vmatpush2.msra.mxu0 %v1253
    %1434 = vmatprep.subr.mxu0 %v1251
    %1435 = vmatpush2.msra.mxu0 %v1250
    %1436 = vmatprep.subr.mxu0 %v1248
    %1437 = vmatpush2.msra.mxu0 %v1247
    %1438 = vmatprep.subr.mxu0 %v1245
    %1439 = vmatpush2.msra.mxu0 %v1244
    %1440 = vmatprep.subr.mxu0 %v1242
    %1441 = vmatpush2.msra.mxu0 %v1241
    %1442 = vmatprep.subr.mxu0 %v1239
    %1443 = vmatpush2.msra.mxu0 %v1238
    %1444 = vmatprep.subr.mxu0 %v1236
    %1445 = vmatpush2.msra.mxu0 %v1235
    %1446 = vmatprep.subr.mxu0 %v1233
    %1447 = vmatpush2.msra.mxu0 %v1232
    %1448 = vmatprep.subr.mxu0 %v1230
    %1449 = vmatpush2.msra.mxu0 %v1229
    %1450 = vmatprep.subr.mxu0 %v1227
    %1451 = vmatpush2.msra.mxu0 %v1226
    %1452 = vmatprep.subr.mxu0 %v1224
    %1453 = vmatpush2.msra.mxu0 %v1223
    %1454 = vmatprep.subr.mxu0 %v1221
    %1455 = vmatpush2.msra.mxu0 %v1220
    %1456 = vmatprep.subr.mxu0 %v1218
    %1457 = vmatpush2.msra.mxu0 %v1217
    %1458 = vmatprep.subr.mxu0 %v1215
    %1459 = vmatpush2.msra.mxu0 %v1214
    %1460 = vmatprep.subr.mxu0 %v1212
    %1461 = vmatpush2.msra.mxu0 %v1211
    %1462 = vmatprep.subr.mxu0 %v1209
    %1463 = vmatpush2.msra.mxu0 %v1208
    %1464 = vmatprep.mubr.f32.mxu0 %v453
    %1465 = vmatmul.mubr.f32.gmra.mxu0 %v228
    %v1466 = vpop.f32.mrf.mxu0
    %v1467 = vadd.f32 0.0, %v1466
    %v1468 = vpop.f32.mrf.mxu0
    %v1469 = vadd.f32 0.0, %v1468
    %1470 = vmatprep.mubr.f32.mxu0 %v454
    %1471 = vmatmul.mubr.f32.gmra.mxu0 %v229
    %v1472 = vpop.f32.mrf.mxu0
    %v1473 = vadd.f32 0.0, %v1472
    %v1474 = vpop.f32.mrf.mxu0
    %v1475 = vadd.f32 0.0, %v1474
    %1476 = vmatprep.mubr.f32.mxu0 %v455
    %1477 = vmatmul.mubr.f32.gmra.mxu0 %v230
    %v1478 = vpop.f32.mrf.mxu0
    %v1479 = vadd.f32 0.0, %v1478
    %v1480 = vpop.f32.mrf.mxu0
    %v1481 = vadd.f32 0.0, %v1480
    %1482 = vmatprep.mubr.f32.mxu0 %v456
    %1483 = vmatmul.mubr.f32.gmra.mxu0 %v231
    %v1484 = vpop.f32.mrf.mxu0
    %v1485 = vadd.f32 0.0, %v1484
    %v1486 = vpop.f32.mrf.mxu0
    %v1487 = vadd.f32 0.0, %v1486
    %1488 = vmatprep.mubr.f32.mxu0 %v457
    %1489 = vmatmul.mubr.f32.gmra.mxu0 %v232
    %v1490 = vpop.f32.mrf.mxu0
    %v1491 = vadd.f32 0.0, %v1490
    %v1492 = vpop.f32.mrf.mxu0
    %v1493 = vadd.f32 0.0, %v1492
    %1494 = vmatprep.mubr.f32.mxu0 %v458
    %1495 = vmatmul.mubr.f32.gmra.mxu0 %v233
    %v1496 = vpop.f32.mrf.mxu0
    %v1497 = vadd.f32 0.0, %v1496
    %v1498 = vpop.f32.mrf.mxu0
    %v1499 = vadd.f32 0.0, %v1498
    %1500 = vmatprep.mubr.f32.mxu0 %v459
    %1501 = vmatmul.mubr.f32.gmra.mxu0 %v234
    %v1502 = vpop.f32.mrf.mxu0
    %v1503 = vadd.f32 0.0, %v1502
    %v1504 = vpop.f32.mrf.mxu0
    %v1505 = vadd.f32 0.0, %v1504
    %1506 = vmatprep.mubr.f32.mxu0 %v460
    %1507 = vmatmul.mubr.f32.gmra.mxu0 %v235
    %v1508 = vpop.f32.mrf.mxu0
    %v1509 = vadd.f32 0.0, %v1508
    %v1510 = vpop.f32.mrf.mxu0
    %v1511 = vadd.f32 0.0, %v1510
    %1512 = vmatprep.mubr.f32.mxu0 %v461
    %1513 = vmatmul.mubr.f32.gmra.mxu0 %v236
    %v1514 = vpop.f32.mrf.mxu0
    %v1515 = vadd.f32 0.0, %v1514
    %v1516 = vpop.f32.mrf.mxu0
    %v1517 = vadd.f32 0.0, %v1516
    %1518 = vmatprep.mubr.f32.mxu0 %v462
    %1519 = vmatmul.mubr.f32.gmra.mxu0 %v237
    %v1520 = vpop.f32.mrf.mxu0
    %v1521 = vadd.f32 0.0, %v1520
    %v1522 = vpop.f32.mrf.mxu0
    %v1523 = vadd.f32 0.0, %v1522
    %1524 = vmatprep.mubr.f32.mxu0 %v463
    %1525 = vmatmul.mubr.f32.gmra.mxu0 %v238
    %v1526 = vpop.f32.mrf.mxu0
    %v1527 = vadd.f32 0.0, %v1526
    %v1528 = vpop.f32.mrf.mxu0
    %v1529 = vadd.f32 0.0, %v1528
    %1530 = vmatprep.mubr.f32.mxu0 %v464
    %1531 = vmatmul.mubr.f32.gmra.mxu0 %v239
    %v1532 = vpop.f32.mrf.mxu0
    %v1533 = vadd.f32 0.0, %v1532
    %v1534 = vpop.f32.mrf.mxu0
    %v1535 = vadd.f32 0.0, %v1534
    %1536 = vmatprep.mubr.f32.mxu0 %v465
    %1537 = vmatmul.mubr.f32.gmra.mxu0 %v240
    %v1538 = vpop.f32.mrf.mxu0
    %v1539 = vadd.f32 0.0, %v1538
    %v1540 = vpop.f32.mrf.mxu0
    %v1541 = vadd.f32 0.0, %v1540
    %1542 = vmatprep.mubr.f32.mxu0 %v466
    %1543 = vmatmul.mubr.f32.gmra.mxu0 %v241
    %v1544 = vpop.f32.mrf.mxu0
    %v1545 = vadd.f32 0.0, %v1544
    %v1546 = vpop.f32.mrf.mxu0
    %v1547 = vadd.f32 0.0, %v1546
    %1548 = vmatprep.mubr.f32.mxu0 %v467
    %1549 = vmatmul.mubr.f32.gmra.mxu0 %v242
    %v1550 = vpop.f32.mrf.mxu0
    %v1551 = vadd.f32 0.0, %v1550
    %v1552 = vpop.f32.mrf.mxu0
    %v1553 = vadd.f32 0.0, %v1552
    %1554 = vmatprep.mubr.f32.mxu0 %v468
    %1555 = vmatmul.mubr.f32.gmra.mxu0 %v243
    %v1556 = vpop.f32.mrf.mxu0
    %v1557 = vadd.f32 0.0, %v1556
    %v1558 = vpop.f32.mrf.mxu0
    %v1559 = vadd.f32 0.0, %v1558
    %1560 = vmatprep.mubr.f32.mxu0 %v469
    %1561 = vmatmul.mubr.f32.gmra.mxu0 %v244
    %v1562 = vpop.f32.mrf.mxu0
    %v1563 = vadd.f32 0.0, %v1562
    %v1564 = vpop.f32.mrf.mxu0
    %v1565 = vadd.f32 0.0, %v1564
    %1566 = vmatprep.mubr.f32.mxu0 %v470
    %1567 = vmatmul.mubr.f32.gmra.mxu0 %v245
    %v1568 = vpop.f32.mrf.mxu0
    %v1569 = vadd.f32 0.0, %v1568
    %v1570 = vpop.f32.mrf.mxu0
    %v1571 = vadd.f32 0.0, %v1570
    %1572 = vmatprep.mubr.f32.mxu0 %v471
    %1573 = vmatmul.mubr.f32.gmra.mxu0 %v246
    %v1574 = vpop.f32.mrf.mxu0
    %v1575 = vadd.f32 0.0, %v1574
    %v1576 = vpop.f32.mrf.mxu0
    %v1577 = vadd.f32 0.0, %v1576
    %1578 = vmatprep.mubr.f32.mxu0 %v472
    %1579 = vmatmul.mubr.f32.gmra.mxu0 %v247
    %v1580 = vpop.f32.mrf.mxu0
    %v1581 = vadd.f32 0.0, %v1580
    %v1582 = vpop.f32.mrf.mxu0
    %v1583 = vadd.f32 0.0, %v1582
    %1584 = vmatprep.mubr.f32.mxu0 %v473
    %1585 = vmatmul.mubr.f32.gmra.mxu0 %v248
    %v1586 = vpop.f32.mrf.mxu0
    %v1587 = vadd.f32 0.0, %v1586
    %v1588 = vpop.f32.mrf.mxu0
    %v1589 = vadd.f32 0.0, %v1588
    %1590 = vmatprep.mubr.f32.mxu0 %v474
    %1591 = vmatmul.mubr.f32.gmra.mxu0 %v249
    %v1592 = vpop.f32.mrf.mxu0
    %v1593 = vadd.f32 0.0, %v1592
    %v1594 = vpop.f32.mrf.mxu0
    %v1595 = vadd.f32 0.0, %v1594
    %1596 = vmatprep.mubr.f32.mxu0 %v475
    %1597 = vmatmul.mubr.f32.gmra.mxu0 %v250
    %v1598 = vpop.f32.mrf.mxu0
    %v1599 = vadd.f32 0.0, %v1598
    %v1600 = vpop.f32.mrf.mxu0
    %v1601 = vadd.f32 0.0, %v1600
    %1602 = vmatprep.mubr.f32.mxu0 %v476
    %1603 = vmatmul.mubr.f32.gmra.mxu0 %v251
    %v1604 = vpop.f32.mrf.mxu0
    %v1605 = vadd.f32 0.0, %v1604
    %v1606 = vpop.f32.mrf.mxu0
    %v1607 = vadd.f32 0.0, %v1606
    %1608 = vmatprep.mubr.f32.mxu0 %v477
    %1609 = vmatmul.mubr.f32.gmra.mxu0 %v252
    %v1610 = vpop.f32.mrf.mxu0
    %v1611 = vadd.f32 0.0, %v1610
    %v1612 = vpop.f32.mrf.mxu0
    %v1613 = vadd.f32 0.0, %v1612
    %1614 = vmatprep.mubr.f32.mxu0 %v478
    %1615 = vmatmul.mubr.f32.gmra.mxu0 %v253
    %v1616 = vpop.f32.mrf.mxu0
    %v1617 = vadd.f32 0.0, %v1616
    %v1618 = vpop.f32.mrf.mxu0
    %v1619 = vadd.f32 0.0, %v1618
    %1620 = vmatprep.mubr.f32.mxu0 %v479
    %1621 = vmatmul.mubr.f32.gmra.mxu0 %v254
    %v1622 = vpop.f32.mrf.mxu0
    %v1623 = vadd.f32 0.0, %v1622
    %v1624 = vpop.f32.mrf.mxu0
    %v1625 = vadd.f32 0.0, %v1624
    %1626 = vmatprep.mubr.f32.mxu0 %v480
    %1627 = vmatmul.mubr.f32.gmra.mxu0 %v255
    %v1628 = vpop.f32.mrf.mxu0
    %v1629 = vadd.f32 0.0, %v1628
    %v1630 = vpop.f32.mrf.mxu0
    %v1631 = vadd.f32 0.0, %v1630
    %1632 = vmatprep.mubr.f32.mxu0 %v481
    %1633 = vmatmul.mubr.f32.gmra.mxu0 %v256
    %v1634 = vpop.f32.mrf.mxu0
    %v1635 = vadd.f32 0.0, %v1634
    %v1636 = vpop.f32.mrf.mxu0
    %v1637 = vadd.f32 0.0, %v1636
    %1638 = vmatprep.mubr.f32.mxu0 %v482
    %1639 = vmatmul.mubr.f32.gmra.mxu0 %v257
    %v1640 = vpop.f32.mrf.mxu0
    %v1641 = vadd.f32 0.0, %v1640
    %v1642 = vpop.f32.mrf.mxu0
    %v1643 = vadd.f32 0.0, %v1642
    %1644 = vmatprep.mubr.f32.mxu0 %v483
    %1645 = vmatmul.mubr.f32.gmra.mxu0 %v258
    %v1646 = vpop.f32.mrf.mxu0
    %v1647 = vadd.f32 0.0, %v1646
    %v1648 = vpop.f32.mrf.mxu0
    %v1649 = vadd.f32 0.0, %v1648
    %1650 = vmatprep.mubr.f32.mxu0 %v484
    %1651 = vmatmul.mubr.f32.gmra.mxu0 %v259
    %v1652 = vpop.f32.mrf.mxu0
    %v1653 = vadd.f32 0.0, %v1652
    %v1654 = vpop.f32.mrf.mxu0
    %v1655 = vadd.f32 0.0, %v1654
    %1656 = vdwg.mxu0
    %1657 = vmatprep.subr.mxu0 %v1302
    %1658 = vmatpush1.msra.mxu0 %v1301
    %1659 = vmatprep.subr.mxu0 %v1299
    %1660 = vmatpush1.msra.mxu0 %v1298
    %1661 = vmatprep.subr.mxu0 %v1296
    %1662 = vmatpush1.msra.mxu0 %v1295
    %1663 = vmatprep.subr.mxu0 %v1293
    %1664 = vmatpush1.msra.mxu0 %v1292
    %1665 = vmatprep.subr.mxu0 %v1290
    %1666 = vmatpush1.msra.mxu0 %v1289
    %1667 = vmatprep.subr.mxu0 %v1287
    %1668 = vmatpush1.msra.mxu0 %v1286
    %1669 = vmatprep.subr.mxu0 %v1284
    %1670 = vmatpush1.msra.mxu0 %v1283
    %1671 = vmatprep.subr.mxu0 %v1281
    %1672 = vmatpush1.msra.mxu0 %v1280
    %1673 = vmatprep.subr.mxu0 %v1278
    %1674 = vmatpush1.msra.mxu0 %v1277
    %1675 = vmatprep.subr.mxu0 %v1275
    %1676 = vmatpush1.msra.mxu0 %v1274
    %1677 = vmatprep.subr.mxu0 %v1272
    %1678 = vmatpush1.msra.mxu0 %v1271
    %1679 = vmatprep.subr.mxu0 %v1269
    %1680 = vmatpush1.msra.mxu0 %v1268
    %1681 = vmatprep.subr.mxu0 %v1266
    %1682 = vmatpush1.msra.mxu0 %v1265
    %1683 = vmatprep.subr.mxu0 %v1263
    %1684 = vmatpush1.msra.mxu0 %v1262
    %1685 = vmatprep.subr.mxu0 %v1260
    %1686 = vmatpush1.msra.mxu0 %v1259
    %1687 = vmatprep.subr.mxu0 %v1257
    %1688 = vmatpush1.msra.mxu0 %v1256
    %1689 = vmatprep.subr.mxu0 %v1350
    %1690 = vmatpush2.msra.mxu0 %v1349
    %1691 = vmatprep.subr.mxu0 %v1347
    %1692 = vmatpush2.msra.mxu0 %v1346
    %1693 = vmatprep.subr.mxu0 %v1344
    %1694 = vmatpush2.msra.mxu0 %v1343
    %1695 = vmatprep.subr.mxu0 %v1341
    %1696 = vmatpush2.msra.mxu0 %v1340
    %1697 = vmatprep.subr.mxu0 %v1338
    %1698 = vmatpush2.msra.mxu0 %v1337
    %1699 = vmatprep.subr.mxu0 %v1335
    %1700 = vmatpush2.msra.mxu0 %v1334
    %1701 = vmatprep.subr.mxu0 %v1332
    %1702 = vmatpush2.msra.mxu0 %v1331
    %1703 = vmatprep.subr.mxu0 %v1329
    %1704 = vmatpush2.msra.mxu0 %v1328
    %1705 = vmatprep.subr.mxu0 %v1326
    %1706 = vmatpush2.msra.mxu0 %v1325
    %1707 = vmatprep.subr.mxu0 %v1323
    %1708 = vmatpush2.msra.mxu0 %v1322
    %1709 = vmatprep.subr.mxu0 %v1320
    %1710 = vmatpush2.msra.mxu0 %v1319
    %1711 = vmatprep.subr.mxu0 %v1317
    %1712 = vmatpush2.msra.mxu0 %v1316
    %1713 = vmatprep.subr.mxu0 %v1314
    %1714 = vmatpush2.msra.mxu0 %v1313
    %1715 = vmatprep.subr.mxu0 %v1311
    %1716 = vmatpush2.msra.mxu0 %v1310
    %1717 = vmatprep.subr.mxu0 %v1308
    %1718 = vmatpush2.msra.mxu0 %v1307
    %1719 = vmatprep.subr.mxu0 %v1305
    %1720 = vmatpush2.msra.mxu0 %v1304
    %1721 = vmatprep.mubr.f32.mxu0 %v903
    %1722 = vmatmul.mubr.f32.gmra.mxu0 %v678
    %v1723 = vpop.f32.mrf.mxu0
    %v1724 = vadd.f32 %v1467, %v1723
    %v1725 = vpop.f32.mrf.mxu0
    %v1726 = vadd.f32 %v1469, %v1725
    %1727 = vmatprep.mubr.f32.mxu0 %v904
    %1728 = vmatmul.mubr.f32.gmra.mxu0 %v679
    %v1729 = vpop.f32.mrf.mxu0
    %v1730 = vadd.f32 %v1473, %v1729
    %v1731 = vpop.f32.mrf.mxu0
    %v1732 = vadd.f32 %v1475, %v1731
    %1733 = vmatprep.mubr.f32.mxu0 %v905
    %1734 = vmatmul.mubr.f32.gmra.mxu0 %v680
    %v1735 = vpop.f32.mrf.mxu0
    %v1736 = vadd.f32 %v1479, %v1735
    %v1737 = vpop.f32.mrf.mxu0
    %v1738 = vadd.f32 %v1481, %v1737
    %1739 = vmatprep.mubr.f32.mxu0 %v906
    %1740 = vmatmul.mubr.f32.gmra.mxu0 %v681
    %v1741 = vpop.f32.mrf.mxu0
    %v1742 = vadd.f32 %v1485, %v1741
    %v1743 = vpop.f32.mrf.mxu0
    %v1744 = vadd.f32 %v1487, %v1743
    %1745 = vmatprep.mubr.f32.mxu0 %v907
    %1746 = vmatmul.mubr.f32.gmra.mxu0 %v682
    %v1747 = vpop.f32.mrf.mxu0
    %v1748 = vadd.f32 %v1491, %v1747
    %v1749 = vpop.f32.mrf.mxu0
    %v1750 = vadd.f32 %v1493, %v1749
    %1751 = vmatprep.mubr.f32.mxu0 %v908
    %1752 = vmatmul.mubr.f32.gmra.mxu0 %v683
    %v1753 = vpop.f32.mrf.mxu0
    %v1754 = vadd.f32 %v1497, %v1753
    %v1755 = vpop.f32.mrf.mxu0
    %v1756 = vadd.f32 %v1499, %v1755
    %1757 = vmatprep.mubr.f32.mxu0 %v909
    %1758 = vmatmul.mubr.f32.gmra.mxu0 %v684
    %v1759 = vpop.f32.mrf.mxu0
    %v1760 = vadd.f32 %v1503, %v1759
    %v1761 = vpop.f32.mrf.mxu0
    %v1762 = vadd.f32 %v1505, %v1761
    %1763 = vmatprep.mubr.f32.mxu0 %v910
    %1764 = vmatmul.mubr.f32.gmra.mxu0 %v685
    %v1765 = vpop.f32.mrf.mxu0
    %v1766 = vadd.f32 %v1509, %v1765
    %v1767 = vpop.f32.mrf.mxu0
    %v1768 = vadd.f32 %v1511, %v1767
    %1769 = vmatprep.mubr.f32.mxu0 %v911
    %1770 = vmatmul.mubr.f32.gmra.mxu0 %v686
    %v1771 = vpop.f32.mrf.mxu0
    %v1772 = vadd.f32 %v1515, %v1771
    %v1773 = vpop.f32.mrf.mxu0
    %v1774 = vadd.f32 %v1517, %v1773
    %1775 = vmatprep.mubr.f32.mxu0 %v912
    %1776 = vmatmul.mubr.f32.gmra.mxu0 %v687
    %v1777 = vpop.f32.mrf.mxu0
    %v1778 = vadd.f32 %v1521, %v1777
    %v1779 = vpop.f32.mrf.mxu0
    %v1780 = vadd.f32 %v1523, %v1779
    %1781 = vmatprep.mubr.f32.mxu0 %v913
    %1782 = vmatmul.mubr.f32.gmra.mxu0 %v688
    %v1783 = vpop.f32.mrf.mxu0
    %v1784 = vadd.f32 %v1527, %v1783
    %v1785 = vpop.f32.mrf.mxu0
    %v1786 = vadd.f32 %v1529, %v1785
    %1787 = vmatprep.mubr.f32.mxu0 %v914
    %1788 = vmatmul.mubr.f32.gmra.mxu0 %v689
    %v1789 = vpop.f32.mrf.mxu0
    %v1790 = vadd.f32 %v1533, %v1789
    %v1791 = vpop.f32.mrf.mxu0
    %v1792 = vadd.f32 %v1535, %v1791
    %1793 = vmatprep.mubr.f32.mxu0 %v915
    %1794 = vmatmul.mubr.f32.gmra.mxu0 %v690
    %v1795 = vpop.f32.mrf.mxu0
    %v1796 = vadd.f32 %v1539, %v1795
    %v1797 = vpop.f32.mrf.mxu0
    %v1798 = vadd.f32 %v1541, %v1797
    %1799 = vmatprep.mubr.f32.mxu0 %v916
    %1800 = vmatmul.mubr.f32.gmra.mxu0 %v691
    %v1801 = vpop.f32.mrf.mxu0
    %v1802 = vadd.f32 %v1545, %v1801
    %v1803 = vpop.f32.mrf.mxu0
    %v1804 = vadd.f32 %v1547, %v1803
    %1805 = vmatprep.mubr.f32.mxu0 %v917
    %1806 = vmatmul.mubr.f32.gmra.mxu0 %v692
    %v1807 = vpop.f32.mrf.mxu0
    %v1808 = vadd.f32 %v1551, %v1807
    %v1809 = vpop.f32.mrf.mxu0
    %v1810 = vadd.f32 %v1553, %v1809
    %1811 = vmatprep.mubr.f32.mxu0 %v918
    %1812 = vmatmul.mubr.f32.gmra.mxu0 %v693
    %v1813 = vpop.f32.mrf.mxu0
    %v1814 = vadd.f32 %v1557, %v1813
    %v1815 = vpop.f32.mrf.mxu0
    %v1816 = vadd.f32 %v1559, %v1815
    %1817 = vmatprep.mubr.f32.mxu0 %v919
    %1818 = vmatmul.mubr.f32.gmra.mxu0 %v694
    %v1819 = vpop.f32.mrf.mxu0
    %v1820 = vadd.f32 %v1563, %v1819
    %v1821 = vpop.f32.mrf.mxu0
    %v1822 = vadd.f32 %v1565, %v1821
    %1823 = vmatprep.mubr.f32.mxu0 %v920
    %1824 = vmatmul.mubr.f32.gmra.mxu0 %v695
    %v1825 = vpop.f32.mrf.mxu0
    %v1826 = vadd.f32 %v1569, %v1825
    %v1827 = vpop.f32.mrf.mxu0
    %v1828 = vadd.f32 %v1571, %v1827
    %1829 = vmatprep.mubr.f32.mxu0 %v921
    %1830 = vmatmul.mubr.f32.gmra.mxu0 %v696
    %v1831 = vpop.f32.mrf.mxu0
    %v1832 = vadd.f32 %v1575, %v1831
    %v1833 = vpop.f32.mrf.mxu0
    %v1834 = vadd.f32 %v1577, %v1833
    %1835 = vmatprep.mubr.f32.mxu0 %v922
    %1836 = vmatmul.mubr.f32.gmra.mxu0 %v697
    %v1837 = vpop.f32.mrf.mxu0
    %v1838 = vadd.f32 %v1581, %v1837
    %v1839 = vpop.f32.mrf.mxu0
    %v1840 = vadd.f32 %v1583, %v1839
    %1841 = vmatprep.mubr.f32.mxu0 %v923
    %1842 = vmatmul.mubr.f32.gmra.mxu0 %v698
    %v1843 = vpop.f32.mrf.mxu0
    %v1844 = vadd.f32 %v1587, %v1843
    %v1845 = vpop.f32.mrf.mxu0
    %v1846 = vadd.f32 %v1589, %v1845
    %1847 = vmatprep.mubr.f32.mxu0 %v924
    %1848 = vmatmul.mubr.f32.gmra.mxu0 %v699
    %v1849 = vpop.f32.mrf.mxu0
    %v1850 = vadd.f32 %v1593, %v1849
    %v1851 = vpop.f32.mrf.mxu0
    %v1852 = vadd.f32 %v1595, %v1851
    %1853 = vmatprep.mubr.f32.mxu0 %v925
    %1854 = vmatmul.mubr.f32.gmra.mxu0 %v700
    %v1855 = vpop.f32.mrf.mxu0
    %v1856 = vadd.f32 %v1599, %v1855
    %v1857 = vpop.f32.mrf.mxu0
    %v1858 = vadd.f32 %v1601, %v1857
    %1859 = vmatprep.mubr.f32.mxu0 %v926
    %1860 = vmatmul.mubr.f32.gmra.mxu0 %v701
    %v1861 = vpop.f32.mrf.mxu0
    %v1862 = vadd.f32 %v1605, %v1861
    %v1863 = vpop.f32.mrf.mxu0
    %v1864 = vadd.f32 %v1607, %v1863
    %1865 = vmatprep.mubr.f32.mxu0 %v927
    %1866 = vmatmul.mubr.f32.gmra.mxu0 %v702
    %v1867 = vpop.f32.mrf.mxu0
    %v1868 = vadd.f32 %v1611, %v1867
    %v1869 = vpop.f32.mrf.mxu0
    %v1870 = vadd.f32 %v1613, %v1869
    %1871 = vmatprep.mubr.f32.mxu0 %v928
    %1872 = vmatmul.mubr.f32.gmra.mxu0 %v703
    %v1873 = vpop.f32.mrf.mxu0
    %v1874 = vadd.f32 %v1617, %v1873
    %v1875 = vpop.f32.mrf.mxu0
    %v1876 = vadd.f32 %v1619, %v1875
    %1877 = vmatprep.mubr.f32.mxu0 %v929
    %1878 = vmatmul.mubr.f32.gmra.mxu0 %v704
    %v1879 = vpop.f32.mrf.mxu0
    %v1880 = vadd.f32 %v1623, %v1879
    %v1881 = vpop.f32.mrf.mxu0
    %v1882 = vadd.f32 %v1625, %v1881
    %1883 = vmatprep.mubr.f32.mxu0 %v930
    %1884 = vmatmul.mubr.f32.gmra.mxu0 %v705
    %v1885 = vpop.f32.mrf.mxu0
    %v1886 = vadd.f32 %v1629, %v1885
    %v1887 = vpop.f32.mrf.mxu0
    %v1888 = vadd.f32 %v1631, %v1887
    %1889 = vmatprep.mubr.f32.mxu0 %v931
    %1890 = vmatmul.mubr.f32.gmra.mxu0 %v706
    %v1891 = vpop.f32.mrf.mxu0
    %v1892 = vadd.f32 %v1635, %v1891
    %v1893 = vpop.f32.mrf.mxu0
    %v1894 = vadd.f32 %v1637, %v1893
    %1895 = vmatprep.mubr.f32.mxu0 %v932
    %1896 = vmatmul.mubr.f32.gmra.mxu0 %v707
    %v1897 = vpop.f32.mrf.mxu0
    %v1898 = vadd.f32 %v1641, %v1897
    %v1899 = vpop.f32.mrf.mxu0
    %v1900 = vadd.f32 %v1643, %v1899
    %1901 = vmatprep.mubr.f32.mxu0 %v933
    %1902 = vmatmul.mubr.f32.gmra.mxu0 %v708
    %v1903 = vpop.f32.mrf.mxu0
    %v1904 = vadd.f32 %v1647, %v1903
    %v1905 = vpop.f32.mrf.mxu0
    %v1906 = vadd.f32 %v1649, %v1905
    %1907 = vmatprep.mubr.f32.mxu0 %v934
    %1908 = vmatmul.mubr.f32.gmra.mxu0 %v709
    %v1909 = vpop.f32.mrf.mxu0
    %v1910 = vadd.f32 %v1653, %v1909
    %v1911 = vpop.f32.mrf.mxu0
    %v1912 = vadd.f32 %v1655, %v1911
    %1913 = vdwg.mxu0
    %1914 = vmatprep.subr.mxu0 %v1398
    %1915 = vmatpush1.msra.mxu0 %v1397
    %1916 = vmatprep.subr.mxu0 %v1395
    %1917 = vmatpush1.msra.mxu0 %v1394
    %1918 = vmatprep.subr.mxu0 %v1392
    %1919 = vmatpush1.msra.mxu0 %v1391
    %1920 = vmatprep.subr.mxu0 %v1389
    %1921 = vmatpush1.msra.mxu0 %v1388
    %1922 = vmatprep.subr.mxu0 %v1386
    %1923 = vmatpush1.msra.mxu0 %v1385
    %1924 = vmatprep.subr.mxu0 %v1383
    %1925 = vmatpush1.msra.mxu0 %v1382
    %1926 = vmatprep.subr.mxu0 %v1380
    %1927 = vmatpush1.msra.mxu0 %v1379
    %1928 = vmatprep.subr.mxu0 %v1377
    %1929 = vmatpush1.msra.mxu0 %v1376
    %1930 = vmatprep.subr.mxu0 %v1374
    %1931 = vmatpush1.msra.mxu0 %v1373
    %1932 = vmatprep.subr.mxu0 %v1371
    %1933 = vmatpush1.msra.mxu0 %v1370
    %1934 = vmatprep.subr.mxu0 %v1368
    %1935 = vmatpush1.msra.mxu0 %v1367
    %1936 = vmatprep.subr.mxu0 %v1365
    %1937 = vmatpush1.msra.mxu0 %v1364
    %1938 = vmatprep.subr.mxu0 %v1362
    %1939 = vmatpush1.msra.mxu0 %v1361
    %1940 = vmatprep.subr.mxu0 %v1359
    %1941 = vmatpush1.msra.mxu0 %v1358
    %1942 = vmatprep.subr.mxu0 %v1356
    %1943 = vmatpush1.msra.mxu0 %v1355
    %1944 = vmatprep.subr.mxu0 %v1353
    %1945 = vmatpush1.msra.mxu0 %v1352
    %1946 = vmatprep.subr.mxu0 0.0
    %1947 = vmatpush2.msra.mxu0 0.0
    %1948 = vmatprep.subr.mxu0 0.0
    %1949 = vmatpush2.msra.mxu0 0.0
    %1950 = vmatprep.subr.mxu0 0.0
    %1951 = vmatpush2.msra.mxu0 0.0
    %1952 = vmatprep.subr.mxu0 0.0
    %1953 = vmatpush2.msra.mxu0 0.0
    %1954 = vmatprep.subr.mxu0 0.0
    %1955 = vmatpush2.msra.mxu0 0.0
    %1956 = vmatprep.subr.mxu0 0.0
    %1957 = vmatpush2.msra.mxu0 0.0
    %1958 = vmatprep.subr.mxu0 0.0
    %1959 = vmatpush2.msra.mxu0 0.0
    %1960 = vmatprep.subr.mxu0 0.0
    %1961 = vmatpush2.msra.mxu0 0.0
    %1962 = vmatprep.subr.mxu0 0.0
    %1963 = vmatpush2.msra.mxu0 0.0
    %1964 = vmatprep.subr.mxu0 0.0
    %1965 = vmatpush2.msra.mxu0 0.0
    %1966 = vmatprep.subr.mxu0 0.0
    %1967 = vmatpush2.msra.mxu0 0.0
    %1968 = vmatprep.subr.mxu0 0.0
    %1969 = vmatpush2.msra.mxu0 0.0
    %1970 = vmatprep.subr.mxu0 0.0
    %1971 = vmatpush2.msra.mxu0 0.0
    %1972 = vmatprep.subr.mxu0 0.0
    %1973 = vmatpush2.msra.mxu0 0.0
    %1974 = vmatprep.subr.mxu0 0.0
    %1975 = vmatpush2.msra.mxu0 0.0
    %1976 = vmatprep.subr.mxu0 0.0
    %1977 = vmatpush2.msra.mxu0 0.0
    %1978 = vmatprep.mubr.f32.mxu0 0.0
    %1979 = vmatmul.mubr.f32.gmra.mxu0 %v1128
    %v1980 = vpop.f32.mrf.mxu0
    %v1981 = vadd.f32 %v1724, %v1980
    %v1982 = vpop.f32.mrf.mxu0
    %v1983 = vadd.f32 %v1726, %v1982
    %1984 = vmatprep.mubr.f32.mxu0 0.0
    %1985 = vmatmul.mubr.f32.gmra.mxu0 %v1129
    %v1986 = vpop.f32.mrf.mxu0
    %v1987 = vadd.f32 %v1730, %v1986
    %v1988 = vpop.f32.mrf.mxu0
    %v1989 = vadd.f32 %v1732, %v1988
    %1990 = vmatprep.mubr.f32.mxu0 0.0
    %1991 = vmatmul.mubr.f32.gmra.mxu0 %v1130
    %v1992 = vpop.f32.mrf.mxu0
    %v1993 = vadd.f32 %v1736, %v1992
    %v1994 = vpop.f32.mrf.mxu0
    %v1995 = vadd.f32 %v1738, %v1994
    %1996 = vmatprep.mubr.f32.mxu0 0.0
    %1997 = vmatmul.mubr.f32.gmra.mxu0 %v1131
    %v1998 = vpop.f32.mrf.mxu0
    %v1999 = vadd.f32 %v1742, %v1998
    %v2000 = vpop.f32.mrf.mxu0
    %v2001 = vadd.f32 %v1744, %v2000
    %2002 = vmatprep.mubr.f32.mxu0 0.0
    %2003 = vmatmul.mubr.f32.gmra.mxu0 %v1132
    %v2004 = vpop.f32.mrf.mxu0
    %v2005 = vadd.f32 %v1748, %v2004
    %v2006 = vpop.f32.mrf.mxu0
    %v2007 = vadd.f32 %v1750, %v2006
    %2008 = vmatprep.mubr.f32.mxu0 0.0
    %2009 = vmatmul.mubr.f32.gmra.mxu0 %v1133
    %v2010 = vpop.f32.mrf.mxu0
    %v2011 = vadd.f32 %v1754, %v2010
    %v2012 = vpop.f32.mrf.mxu0
    %v2013 = vadd.f32 %v1756, %v2012
    %2014 = vmatprep.mubr.f32.mxu0 0.0
    %2015 = vmatmul.mubr.f32.gmra.mxu0 %v1134
    %v2016 = vpop.f32.mrf.mxu0
    %v2017 = vadd.f32 %v1760, %v2016
    %v2018 = vpop.f32.mrf.mxu0
    %v2019 = vadd.f32 %v1762, %v2018
    %2020 = vmatprep.mubr.f32.mxu0 0.0
    %2021 = vmatmul.mubr.f32.gmra.mxu0 %v1135
    %v2022 = vpop.f32.mrf.mxu0
    %v2023 = vadd.f32 %v1766, %v2022
    %v2024 = vpop.f32.mrf.mxu0
    %v2025 = vadd.f32 %v1768, %v2024
    %2026 = vmatprep.mubr.f32.mxu0 0.0
    %2027 = vmatmul.mubr.f32.gmra.mxu0 %v1136
    %v2028 = vpop.f32.mrf.mxu0
    %v2029 = vadd.f32 %v1772, %v2028
    %v2030 = vpop.f32.mrf.mxu0
    %v2031 = vadd.f32 %v1774, %v2030
    %2032 = vmatprep.mubr.f32.mxu0 0.0
    %2033 = vmatmul.mubr.f32.gmra.mxu0 %v1137
    %v2034 = vpop.f32.mrf.mxu0
    %v2035 = vadd.f32 %v1778, %v2034
    %v2036 = vpop.f32.mrf.mxu0
    %v2037 = vadd.f32 %v1780, %v2036
    %2038 = vmatprep.mubr.f32.mxu0 0.0
    %2039 = vmatmul.mubr.f32.gmra.mxu0 %v1138
    %v2040 = vpop.f32.mrf.mxu0
    %v2041 = vadd.f32 %v1784, %v2040
    %v2042 = vpop.f32.mrf.mxu0
    %v2043 = vadd.f32 %v1786, %v2042
    %2044 = vmatprep.mubr.f32.mxu0 0.0
    %2045 = vmatmul.mubr.f32.gmra.mxu0 %v1139
    %v2046 = vpop.f32.mrf.mxu0
    %v2047 = vadd.f32 %v1790, %v2046
    %v2048 = vpop.f32.mrf.mxu0
    %v2049 = vadd.f32 %v1792, %v2048
    %2050 = vmatprep.mubr.f32.mxu0 0.0
    %2051 = vmatmul.mubr.f32.gmra.mxu0 %v1140
    %v2052 = vpop.f32.mrf.mxu0
    %v2053 = vadd.f32 %v1796, %v2052
    %v2054 = vpop.f32.mrf.mxu0
    %v2055 = vadd.f32 %v1798, %v2054
    %2056 = vmatprep.mubr.f32.mxu0 0.0
    %2057 = vmatmul.mubr.f32.gmra.mxu0 %v1141
    %v2058 = vpop.f32.mrf.mxu0
    %v2059 = vadd.f32 %v1802, %v2058
    %v2060 = vpop.f32.mrf.mxu0
    %v2061 = vadd.f32 %v1804, %v2060
    %2062 = vmatprep.mubr.f32.mxu0 0.0
    %2063 = vmatmul.mubr.f32.gmra.mxu0 %v1142
    %v2064 = vpop.f32.mrf.mxu0
    %v2065 = vadd.f32 %v1808, %v2064
    %v2066 = vpop.f32.mrf.mxu0
    %v2067 = vadd.f32 %v1810, %v2066
    %2068 = vmatprep.mubr.f32.mxu0 0.0
    %2069 = vmatmul.mubr.f32.gmra.mxu0 %v1143
    %v2070 = vpop.f32.mrf.mxu0
    %v2071 = vadd.f32 %v1814, %v2070
    %v2072 = vpop.f32.mrf.mxu0
    %v2073 = vadd.f32 %v1816, %v2072
    %2074 = vmatprep.mubr.f32.mxu0 0.0
    %2075 = vmatmul.mubr.f32.gmra.mxu0 %v1144
    %v2076 = vpop.f32.mrf.mxu0
    %v2077 = vadd.f32 %v1820, %v2076
    %v2078 = vpop.f32.mrf.mxu0
    %v2079 = vadd.f32 %v1822, %v2078
    %2080 = vmatprep.mubr.f32.mxu0 0.0
    %2081 = vmatmul.mubr.f32.gmra.mxu0 %v1145
    %v2082 = vpop.f32.mrf.mxu0
    %v2083 = vadd.f32 %v1826, %v2082
    %v2084 = vpop.f32.mrf.mxu0
    %v2085 = vadd.f32 %v1828, %v2084
    %2086 = vmatprep.mubr.f32.mxu0 0.0
    %2087 = vmatmul.mubr.f32.gmra.mxu0 %v1146
    %v2088 = vpop.f32.mrf.mxu0
    %v2089 = vadd.f32 %v1832, %v2088
    %v2090 = vpop.f32.mrf.mxu0
    %v2091 = vadd.f32 %v1834, %v2090
    %2092 = vmatprep.mubr.f32.mxu0 0.0
    %2093 = vmatmul.mubr.f32.gmra.mxu0 %v1147
    %v2094 = vpop.f32.mrf.mxu0
    %v2095 = vadd.f32 %v1838, %v2094
    %v2096 = vpop.f32.mrf.mxu0
    %v2097 = vadd.f32 %v1840, %v2096
    %2098 = vmatprep.mubr.f32.mxu0 0.0
    %2099 = vmatmul.mubr.f32.gmra.mxu0 %v1148
    %v2100 = vpop.f32.mrf.mxu0
    %v2101 = vadd.f32 %v1844, %v2100
    %v2102 = vpop.f32.mrf.mxu0
    %v2103 = vadd.f32 %v1846, %v2102
    %2104 = vmatprep.mubr.f32.mxu0 0.0
    %2105 = vmatmul.mubr.f32.gmra.mxu0 %v1149
    %v2106 = vpop.f32.mrf.mxu0
    %v2107 = vadd.f32 %v1850, %v2106
    %v2108 = vpop.f32.mrf.mxu0
    %v2109 = vadd.f32 %v1852, %v2108
    %2110 = vmatprep.mubr.f32.mxu0 0.0
    %2111 = vmatmul.mubr.f32.gmra.mxu0 %v1150
    %v2112 = vpop.f32.mrf.mxu0
    %v2113 = vadd.f32 %v1856, %v2112
    %v2114 = vpop.f32.mrf.mxu0
    %v2115 = vadd.f32 %v1858, %v2114
    %2116 = vmatprep.mubr.f32.mxu0 0.0
    %2117 = vmatmul.mubr.f32.gmra.mxu0 %v1151
    %v2118 = vpop.f32.mrf.mxu0
    %v2119 = vadd.f32 %v1862, %v2118
    %v2120 = vpop.f32.mrf.mxu0
    %v2121 = vadd.f32 %v1864, %v2120
    %2122 = vmatprep.mubr.f32.mxu0 0.0
    %2123 = vmatmul.mubr.f32.gmra.mxu0 %v1152
    %v2124 = vpop.f32.mrf.mxu0
    %v2125 = vadd.f32 %v1868, %v2124
    %v2126 = vpop.f32.mrf.mxu0
    %v2127 = vadd.f32 %v1870, %v2126
    %2128 = vmatprep.mubr.f32.mxu0 0.0
    %2129 = vmatmul.mubr.f32.gmra.mxu0 %v1153
    %v2130 = vpop.f32.mrf.mxu0
    %v2131 = vadd.f32 %v1874, %v2130
    %v2132 = vpop.f32.mrf.mxu0
    %v2133 = vadd.f32 %v1876, %v2132
    %2134 = vmatprep.mubr.f32.mxu0 0.0
    %2135 = vmatmul.mubr.f32.gmra.mxu0 %v1154
    %v2136 = vpop.f32.mrf.mxu0
    %v2137 = vadd.f32 %v1880, %v2136
    %v2138 = vpop.f32.mrf.mxu0
    %v2139 = vadd.f32 %v1882, %v2138
    %2140 = vmatprep.mubr.f32.mxu0 0.0
    %2141 = vmatmul.mubr.f32.gmra.mxu0 %v1155
    %v2142 = vpop.f32.mrf.mxu0
    %v2143 = vadd.f32 %v1886, %v2142
    %v2144 = vpop.f32.mrf.mxu0
    %v2145 = vadd.f32 %v1888, %v2144
    %2146 = vmatprep.mubr.f32.mxu0 0.0
    %2147 = vmatmul.mubr.f32.gmra.mxu0 %v1156
    %v2148 = vpop.f32.mrf.mxu0
    %v2149 = vadd.f32 %v1892, %v2148
    %v2150 = vpop.f32.mrf.mxu0
    %v2151 = vadd.f32 %v1894, %v2150
    %2152 = vmatprep.mubr.f32.mxu0 0.0
    %2153 = vmatmul.mubr.f32.gmra.mxu0 %v1157
    %v2154 = vpop.f32.mrf.mxu0
    %v2155 = vadd.f32 %v1898, %v2154
    %v2156 = vpop.f32.mrf.mxu0
    %v2157 = vadd.f32 %v1900, %v2156
    %2158 = vmatprep.mubr.f32.mxu0 0.0
    %2159 = vmatmul.mubr.f32.gmra.mxu0 %v1158
    %v2160 = vpop.f32.mrf.mxu0
    %v2161 = vadd.f32 %v1904, %v2160
    %v2162 = vpop.f32.mrf.mxu0
    %v2163 = vadd.f32 %v1906, %v2162
    %2164 = vmatprep.mubr.f32.mxu0 0.0
    %2165 = vmatmul.mubr.f32.gmra.mxu0 %v1159
    %v2166 = vpop.f32.mrf.mxu0
    %v2167 = vadd.f32 %v1910, %v2166
    %v2168 = vpop.f32.mrf.mxu0
    %v2169 = vadd.f32 %v1912, %v2168
    %2170 = vdwg.mxu0
    %2171 = vmatprep.subr.mxu0 0.0
    %2172 = vmatpush1.msra.mxu0 %v1207
    %2173 = vmatprep.subr.mxu0 0.0
    %2174 = vmatpush1.msra.mxu0 %v1204
    %2175 = vmatprep.subr.mxu0 0.0
    %2176 = vmatpush1.msra.mxu0 %v1201
    %2177 = vmatprep.subr.mxu0 0.0
    %2178 = vmatpush1.msra.mxu0 %v1198
    %2179 = vmatprep.subr.mxu0 0.0
    %2180 = vmatpush1.msra.mxu0 %v1195
    %2181 = vmatprep.subr.mxu0 0.0
    %2182 = vmatpush1.msra.mxu0 %v1192
    %2183 = vmatprep.subr.mxu0 0.0
    %2184 = vmatpush1.msra.mxu0 %v1189
    %2185 = vmatprep.subr.mxu0 0.0
    %2186 = vmatpush1.msra.mxu0 %v1186
    %2187 = vmatprep.subr.mxu0 0.0
    %2188 = vmatpush1.msra.mxu0 %v1183
    %2189 = vmatprep.subr.mxu0 0.0
    %2190 = vmatpush1.msra.mxu0 %v1180
    %2191 = vmatprep.subr.mxu0 0.0
    %2192 = vmatpush1.msra.mxu0 %v1177
    %2193 = vmatprep.subr.mxu0 0.0
    %2194 = vmatpush1.msra.mxu0 %v1174
    %2195 = vmatprep.subr.mxu0 0.0
    %2196 = vmatpush1.msra.mxu0 %v1171
    %2197 = vmatprep.subr.mxu0 0.0
    %2198 = vmatpush1.msra.mxu0 %v1168
    %2199 = vmatprep.subr.mxu0 0.0
    %2200 = vmatpush1.msra.mxu0 %v1165
    %2201 = vmatprep.subr.mxu0 0.0
    %2202 = vmatpush1.msra.mxu0 %v1162
    %2203 = vmatprep.subr.mxu0 0.0
    %2204 = vmatpush2.msra.mxu0 %v1255
    %2205 = vmatprep.subr.mxu0 0.0
    %2206 = vmatpush2.msra.mxu0 %v1252
    %2207 = vmatprep.subr.mxu0 0.0
    %2208 = vmatpush2.msra.mxu0 %v1249
    %2209 = vmatprep.subr.mxu0 0.0
    %2210 = vmatpush2.msra.mxu0 %v1246
    %2211 = vmatprep.subr.mxu0 0.0
    %2212 = vmatpush2.msra.mxu0 %v1243
    %2213 = vmatprep.subr.mxu0 0.0
    %2214 = vmatpush2.msra.mxu0 %v1240
    %2215 = vmatprep.subr.mxu0 0.0
    %2216 = vmatpush2.msra.mxu0 %v1237
    %2217 = vmatprep.subr.mxu0 0.0
    %2218 = vmatpush2.msra.mxu0 %v1234
    %2219 = vmatprep.subr.mxu0 0.0
    %2220 = vmatpush2.msra.mxu0 %v1231
    %2221 = vmatprep.subr.mxu0 0.0
    %2222 = vmatpush2.msra.mxu0 %v1228
    %2223 = vmatprep.subr.mxu0 0.0
    %2224 = vmatpush2.msra.mxu0 %v1225
    %2225 = vmatprep.subr.mxu0 0.0
    %2226 = vmatpush2.msra.mxu0 %v1222
    %2227 = vmatprep.subr.mxu0 0.0
    %2228 = vmatpush2.msra.mxu0 %v1219
    %2229 = vmatprep.subr.mxu0 0.0
    %2230 = vmatpush2.msra.mxu0 %v1216
    %2231 = vmatprep.subr.mxu0 0.0
    %2232 = vmatpush2.msra.mxu0 %v1213
    %2233 = vmatprep.subr.mxu0 0.0
    %2234 = vmatpush2.msra.mxu0 %v1210
    %2235 = vmatprep.mubr.f32.mxu0 %v453
    %2236 = vmatmul.mubr.f32.gmra.mxu0 %v228
    %v2237 = vpop.f32.mrf.mxu0
    %v2238 = vadd.f32 0.0, %v2237
    %v2239 = vpop.f32.mrf.mxu0
    %2240 = vmatprep.mubr.f32.mxu0 %v454
    %2241 = vmatmul.mubr.f32.gmra.mxu0 %v229
    %v2242 = vpop.f32.mrf.mxu0
    %v2243 = vadd.f32 0.0, %v2242
    %v2244 = vpop.f32.mrf.mxu0
    %2245 = vmatprep.mubr.f32.mxu0 %v455
    %2246 = vmatmul.mubr.f32.gmra.mxu0 %v230
    %v2247 = vpop.f32.mrf.mxu0
    %v2248 = vadd.f32 0.0, %v2247
    %v2249 = vpop.f32.mrf.mxu0
    %2250 = vmatprep.mubr.f32.mxu0 %v456
    %2251 = vmatmul.mubr.f32.gmra.mxu0 %v231
    %v2252 = vpop.f32.mrf.mxu0
    %v2253 = vadd.f32 0.0, %v2252
    %v2254 = vpop.f32.mrf.mxu0
    %2255 = vmatprep.mubr.f32.mxu0 %v457
    %2256 = vmatmul.mubr.f32.gmra.mxu0 %v232
    %v2257 = vpop.f32.mrf.mxu0
    %v2258 = vadd.f32 0.0, %v2257
    %v2259 = vpop.f32.mrf.mxu0
    %2260 = vmatprep.mubr.f32.mxu0 %v458
    %2261 = vmatmul.mubr.f32.gmra.mxu0 %v233
    %v2262 = vpop.f32.mrf.mxu0
    %v2263 = vadd.f32 0.0, %v2262
    %v2264 = vpop.f32.mrf.mxu0
    %2265 = vmatprep.mubr.f32.mxu0 %v459
    %2266 = vmatmul.mubr.f32.gmra.mxu0 %v234
    %v2267 = vpop.f32.mrf.mxu0
    %v2268 = vadd.f32 0.0, %v2267
    %v2269 = vpop.f32.mrf.mxu0
    %2270 = vmatprep.mubr.f32.mxu0 %v460
    %2271 = vmatmul.mubr.f32.gmra.mxu0 %v235
    %v2272 = vpop.f32.mrf.mxu0
    %v2273 = vadd.f32 0.0, %v2272
    %v2274 = vpop.f32.mrf.mxu0
    %2275 = vmatprep.mubr.f32.mxu0 %v461
    %2276 = vmatmul.mubr.f32.gmra.mxu0 %v236
    %v2277 = vpop.f32.mrf.mxu0
    %v2278 = vadd.f32 0.0, %v2277
    %v2279 = vpop.f32.mrf.mxu0
    %2280 = vmatprep.mubr.f32.mxu0 %v462
    %2281 = vmatmul.mubr.f32.gmra.mxu0 %v237
    %v2282 = vpop.f32.mrf.mxu0
    %v2283 = vadd.f32 0.0, %v2282
    %v2284 = vpop.f32.mrf.mxu0
    %2285 = vmatprep.mubr.f32.mxu0 %v463
    %2286 = vmatmul.mubr.f32.gmra.mxu0 %v238
    %v2287 = vpop.f32.mrf.mxu0
    %v2288 = vadd.f32 0.0, %v2287
    %v2289 = vpop.f32.mrf.mxu0
    %2290 = vmatprep.mubr.f32.mxu0 %v464
    %2291 = vmatmul.mubr.f32.gmra.mxu0 %v239
    %v2292 = vpop.f32.mrf.mxu0
    %v2293 = vadd.f32 0.0, %v2292
    %v2294 = vpop.f32.mrf.mxu0
    %2295 = vmatprep.mubr.f32.mxu0 %v465
    %2296 = vmatmul.mubr.f32.gmra.mxu0 %v240
    %v2297 = vpop.f32.mrf.mxu0
    %v2298 = vadd.f32 0.0, %v2297
    %v2299 = vpop.f32.mrf.mxu0
    %2300 = vmatprep.mubr.f32.mxu0 %v466
    %2301 = vmatmul.mubr.f32.gmra.mxu0 %v241
    %v2302 = vpop.f32.mrf.mxu0
    %v2303 = vadd.f32 0.0, %v2302
    %v2304 = vpop.f32.mrf.mxu0
    %2305 = vmatprep.mubr.f32.mxu0 %v467
    %2306 = vmatmul.mubr.f32.gmra.mxu0 %v242
    %v2307 = vpop.f32.mrf.mxu0
    %v2308 = vadd.f32 0.0, %v2307
    %v2309 = vpop.f32.mrf.mxu0
    %2310 = vmatprep.mubr.f32.mxu0 %v468
    %2311 = vmatmul.mubr.f32.gmra.mxu0 %v243
    %v2312 = vpop.f32.mrf.mxu0
    %v2313 = vadd.f32 0.0, %v2312
    %v2314 = vpop.f32.mrf.mxu0
    %2315 = vmatprep.mubr.f32.mxu0 %v469
    %2316 = vmatmul.mubr.f32.gmra.mxu0 %v244
    %v2317 = vpop.f32.mrf.mxu0
    %v2318 = vadd.f32 0.0, %v2317
    %v2319 = vpop.f32.mrf.mxu0
    %2320 = vmatprep.mubr.f32.mxu0 %v470
    %2321 = vmatmul.mubr.f32.gmra.mxu0 %v245
    %v2322 = vpop.f32.mrf.mxu0
    %v2323 = vadd.f32 0.0, %v2322
    %v2324 = vpop.f32.mrf.mxu0
    %2325 = vmatprep.mubr.f32.mxu0 %v471
    %2326 = vmatmul.mubr.f32.gmra.mxu0 %v246
    %v2327 = vpop.f32.mrf.mxu0
    %v2328 = vadd.f32 0.0, %v2327
    %v2329 = vpop.f32.mrf.mxu0
    %2330 = vmatprep.mubr.f32.mxu0 %v472
    %2331 = vmatmul.mubr.f32.gmra.mxu0 %v247
    %v2332 = vpop.f32.mrf.mxu0
    %v2333 = vadd.f32 0.0, %v2332
    %v2334 = vpop.f32.mrf.mxu0
    %2335 = vmatprep.mubr.f32.mxu0 %v473
    %2336 = vmatmul.mubr.f32.gmra.mxu0 %v248
    %v2337 = vpop.f32.mrf.mxu0
    %v2338 = vadd.f32 0.0, %v2337
    %v2339 = vpop.f32.mrf.mxu0
    %2340 = vmatprep.mubr.f32.mxu0 %v474
    %2341 = vmatmul.mubr.f32.gmra.mxu0 %v249
    %v2342 = vpop.f32.mrf.mxu0
    %v2343 = vadd.f32 0.0, %v2342
    %v2344 = vpop.f32.mrf.mxu0
    %2345 = vmatprep.mubr.f32.mxu0 %v475
    %2346 = vmatmul.mubr.f32.gmra.mxu0 %v250
    %v2347 = vpop.f32.mrf.mxu0
    %v2348 = vadd.f32 0.0, %v2347
    %v2349 = vpop.f32.mrf.mxu0
    %2350 = vmatprep.mubr.f32.mxu0 %v476
    %2351 = vmatmul.mubr.f32.gmra.mxu0 %v251
    %v2352 = vpop.f32.mrf.mxu0
    %v2353 = vadd.f32 0.0, %v2352
    %v2354 = vpop.f32.mrf.mxu0
    %2355 = vmatprep.mubr.f32.mxu0 %v477
    %2356 = vmatmul.mubr.f32.gmra.mxu0 %v252
    %v2357 = vpop.f32.mrf.mxu0
    %v2358 = vadd.f32 0.0, %v2357
    %v2359 = vpop.f32.mrf.mxu0
    %2360 = vmatprep.mubr.f32.mxu0 %v478
    %2361 = vmatmul.mubr.f32.gmra.mxu0 %v253
    %v2362 = vpop.f32.mrf.mxu0
    %v2363 = vadd.f32 0.0, %v2362
    %v2364 = vpop.f32.mrf.mxu0
    %2365 = vmatprep.mubr.f32.mxu0 %v479
    %2366 = vmatmul.mubr.f32.gmra.mxu0 %v254
    %v2367 = vpop.f32.mrf.mxu0
    %v2368 = vadd.f32 0.0, %v2367
    %v2369 = vpop.f32.mrf.mxu0
    %2370 = vmatprep.mubr.f32.mxu0 %v480
    %2371 = vmatmul.mubr.f32.gmra.mxu0 %v255
    %v2372 = vpop.f32.mrf.mxu0
    %v2373 = vadd.f32 0.0, %v2372
    %v2374 = vpop.f32.mrf.mxu0
    %2375 = vmatprep.mubr.f32.mxu0 %v481
    %2376 = vmatmul.mubr.f32.gmra.mxu0 %v256
    %v2377 = vpop.f32.mrf.mxu0
    %v2378 = vadd.f32 0.0, %v2377
    %v2379 = vpop.f32.mrf.mxu0
    %2380 = vmatprep.mubr.f32.mxu0 %v482
    %2381 = vmatmul.mubr.f32.gmra.mxu0 %v257
    %v2382 = vpop.f32.mrf.mxu0
    %v2383 = vadd.f32 0.0, %v2382
    %v2384 = vpop.f32.mrf.mxu0
    %2385 = vmatprep.mubr.f32.mxu0 %v483
    %2386 = vmatmul.mubr.f32.gmra.mxu0 %v258
    %v2387 = vpop.f32.mrf.mxu0
    %v2388 = vadd.f32 0.0, %v2387
    %v2389 = vpop.f32.mrf.mxu0
    %2390 = vmatprep.mubr.f32.mxu0 %v484
    %2391 = vmatmul.mubr.f32.gmra.mxu0 %v259
    %v2392 = vpop.f32.mrf.mxu0
    %v2393 = vadd.f32 0.0, %v2392
    %v2394 = vpop.f32.mrf.mxu0
    %2395 = vdwg.mxu0
    %2396 = vmatprep.subr.mxu0 0.0
    %2397 = vmatpush1.msra.mxu0 %v1303
    %2398 = vmatprep.subr.mxu0 0.0
    %2399 = vmatpush1.msra.mxu0 %v1300
    %2400 = vmatprep.subr.mxu0 0.0
    %2401 = vmatpush1.msra.mxu0 %v1297
    %2402 = vmatprep.subr.mxu0 0.0
    %2403 = vmatpush1.msra.mxu0 %v1294
    %2404 = vmatprep.subr.mxu0 0.0
    %2405 = vmatpush1.msra.mxu0 %v1291
    %2406 = vmatprep.subr.mxu0 0.0
    %2407 = vmatpush1.msra.mxu0 %v1288
    %2408 = vmatprep.subr.mxu0 0.0
    %2409 = vmatpush1.msra.mxu0 %v1285
    %2410 = vmatprep.subr.mxu0 0.0
    %2411 = vmatpush1.msra.mxu0 %v1282
    %2412 = vmatprep.subr.mxu0 0.0
    %2413 = vmatpush1.msra.mxu0 %v1279
    %2414 = vmatprep.subr.mxu0 0.0
    %2415 = vmatpush1.msra.mxu0 %v1276
    %2416 = vmatprep.subr.mxu0 0.0
    %2417 = vmatpush1.msra.mxu0 %v1273
    %2418 = vmatprep.subr.mxu0 0.0
    %2419 = vmatpush1.msra.mxu0 %v1270
    %2420 = vmatprep.subr.mxu0 0.0
    %2421 = vmatpush1.msra.mxu0 %v1267
    %2422 = vmatprep.subr.mxu0 0.0
    %2423 = vmatpush1.msra.mxu0 %v1264
    %2424 = vmatprep.subr.mxu0 0.0
    %2425 = vmatpush1.msra.mxu0 %v1261
    %2426 = vmatprep.subr.mxu0 0.0
    %2427 = vmatpush1.msra.mxu0 %v1258
    %2428 = vmatprep.subr.mxu0 0.0
    %2429 = vmatpush2.msra.mxu0 %v1351
    %2430 = vmatprep.subr.mxu0 0.0
    %2431 = vmatpush2.msra.mxu0 %v1348
    %2432 = vmatprep.subr.mxu0 0.0
    %2433 = vmatpush2.msra.mxu0 %v1345
    %2434 = vmatprep.subr.mxu0 0.0
    %2435 = vmatpush2.msra.mxu0 %v1342
    %2436 = vmatprep.subr.mxu0 0.0
    %2437 = vmatpush2.msra.mxu0 %v1339
    %2438 = vmatprep.subr.mxu0 0.0
    %2439 = vmatpush2.msra.mxu0 %v1336
    %2440 = vmatprep.subr.mxu0 0.0
    %2441 = vmatpush2.msra.mxu0 %v1333
    %2442 = vmatprep.subr.mxu0 0.0
    %2443 = vmatpush2.msra.mxu0 %v1330
    %2444 = vmatprep.subr.mxu0 0.0
    %2445 = vmatpush2.msra.mxu0 %v1327
    %2446 = vmatprep.subr.mxu0 0.0
    %2447 = vmatpush2.msra.mxu0 %v1324
    %2448 = vmatprep.subr.mxu0 0.0
    %2449 = vmatpush2.msra.mxu0 %v1321
    %2450 = vmatprep.subr.mxu0 0.0
    %2451 = vmatpush2.msra.mxu0 %v1318
    %2452 = vmatprep.subr.mxu0 0.0
    %2453 = vmatpush2.msra.mxu0 %v1315
    %2454 = vmatprep.subr.mxu0 0.0
    %2455 = vmatpush2.msra.mxu0 %v1312
    %2456 = vmatprep.subr.mxu0 0.0
    %2457 = vmatpush2.msra.mxu0 %v1309
    %2458 = vmatprep.subr.mxu0 0.0
    %2459 = vmatpush2.msra.mxu0 %v1306
    %2460 = vmatprep.mubr.f32.mxu0 %v903
    %2461 = vmatmul.mubr.f32.gmra.mxu0 %v678
    %v2462 = vpop.f32.mrf.mxu0
    %v2463 = vadd.f32 %v2238, %v2462
    %v2464 = vpop.f32.mrf.mxu0
    %2465 = vmatprep.mubr.f32.mxu0 %v904
    %2466 = vmatmul.mubr.f32.gmra.mxu0 %v679
    %v2467 = vpop.f32.mrf.mxu0
    %v2468 = vadd.f32 %v2243, %v2467
    %v2469 = vpop.f32.mrf.mxu0
    %2470 = vmatprep.mubr.f32.mxu0 %v905
    %2471 = vmatmul.mubr.f32.gmra.mxu0 %v680
    %v2472 = vpop.f32.mrf.mxu0
    %v2473 = vadd.f32 %v2248, %v2472
    %v2474 = vpop.f32.mrf.mxu0
    %2475 = vmatprep.mubr.f32.mxu0 %v906
    %2476 = vmatmul.mubr.f32.gmra.mxu0 %v681
    %v2477 = vpop.f32.mrf.mxu0
    %v2478 = vadd.f32 %v2253, %v2477
    %v2479 = vpop.f32.mrf.mxu0
    %2480 = vmatprep.mubr.f32.mxu0 %v907
    %2481 = vmatmul.mubr.f32.gmra.mxu0 %v682
    %v2482 = vpop.f32.mrf.mxu0
    %v2483 = vadd.f32 %v2258, %v2482
    %v2484 = vpop.f32.mrf.mxu0
    %2485 = vmatprep.mubr.f32.mxu0 %v908
    %2486 = vmatmul.mubr.f32.gmra.mxu0 %v683
    %v2487 = vpop.f32.mrf.mxu0
    %v2488 = vadd.f32 %v2263, %v2487
    %v2489 = vpop.f32.mrf.mxu0
    %2490 = vmatprep.mubr.f32.mxu0 %v909
    %2491 = vmatmul.mubr.f32.gmra.mxu0 %v684
    %v2492 = vpop.f32.mrf.mxu0
    %v2493 = vadd.f32 %v2268, %v2492
    %v2494 = vpop.f32.mrf.mxu0
    %2495 = vmatprep.mubr.f32.mxu0 %v910
    %2496 = vmatmul.mubr.f32.gmra.mxu0 %v685
    %v2497 = vpop.f32.mrf.mxu0
    %v2498 = vadd.f32 %v2273, %v2497
    %v2499 = vpop.f32.mrf.mxu0
    %2500 = vmatprep.mubr.f32.mxu0 %v911
    %2501 = vmatmul.mubr.f32.gmra.mxu0 %v686
    %v2502 = vpop.f32.mrf.mxu0
    %v2503 = vadd.f32 %v2278, %v2502
    %v2504 = vpop.f32.mrf.mxu0
    %2505 = vmatprep.mubr.f32.mxu0 %v912
    %2506 = vmatmul.mubr.f32.gmra.mxu0 %v687
    %v2507 = vpop.f32.mrf.mxu0
    %v2508 = vadd.f32 %v2283, %v2507
    %v2509 = vpop.f32.mrf.mxu0
    %2510 = vmatprep.mubr.f32.mxu0 %v913
    %2511 = vmatmul.mubr.f32.gmra.mxu0 %v688
    %v2512 = vpop.f32.mrf.mxu0
    %v2513 = vadd.f32 %v2288, %v2512
    %v2514 = vpop.f32.mrf.mxu0
    %2515 = vmatprep.mubr.f32.mxu0 %v914
    %2516 = vmatmul.mubr.f32.gmra.mxu0 %v689
    %v2517 = vpop.f32.mrf.mxu0
    %v2518 = vadd.f32 %v2293, %v2517
    %v2519 = vpop.f32.mrf.mxu0
    %2520 = vmatprep.mubr.f32.mxu0 %v915
    %2521 = vmatmul.mubr.f32.gmra.mxu0 %v690
    %v2522 = vpop.f32.mrf.mxu0
    %v2523 = vadd.f32 %v2298, %v2522
    %v2524 = vpop.f32.mrf.mxu0
    %2525 = vmatprep.mubr.f32.mxu0 %v916
    %2526 = vmatmul.mubr.f32.gmra.mxu0 %v691
    %v2527 = vpop.f32.mrf.mxu0
    %v2528 = vadd.f32 %v2303, %v2527
    %v2529 = vpop.f32.mrf.mxu0
    %2530 = vmatprep.mubr.f32.mxu0 %v917
    %2531 = vmatmul.mubr.f32.gmra.mxu0 %v692
    %v2532 = vpop.f32.mrf.mxu0
    %v2533 = vadd.f32 %v2308, %v2532
    %v2534 = vpop.f32.mrf.mxu0
    %2535 = vmatprep.mubr.f32.mxu0 %v918
    %2536 = vmatmul.mubr.f32.gmra.mxu0 %v693
    %v2537 = vpop.f32.mrf.mxu0
    %v2538 = vadd.f32 %v2313, %v2537
    %v2539 = vpop.f32.mrf.mxu0
    %2540 = vmatprep.mubr.f32.mxu0 %v919
    %2541 = vmatmul.mubr.f32.gmra.mxu0 %v694
    %v2542 = vpop.f32.mrf.mxu0
    %v2543 = vadd.f32 %v2318, %v2542
    %v2544 = vpop.f32.mrf.mxu0
    %2545 = vmatprep.mubr.f32.mxu0 %v920
    %2546 = vmatmul.mubr.f32.gmra.mxu0 %v695
    %v2547 = vpop.f32.mrf.mxu0
    %v2548 = vadd.f32 %v2323, %v2547
    %v2549 = vpop.f32.mrf.mxu0
    %2550 = vmatprep.mubr.f32.mxu0 %v921
    %2551 = vmatmul.mubr.f32.gmra.mxu0 %v696
    %v2552 = vpop.f32.mrf.mxu0
    %v2553 = vadd.f32 %v2328, %v2552
    %v2554 = vpop.f32.mrf.mxu0
    %2555 = vmatprep.mubr.f32.mxu0 %v922
    %2556 = vmatmul.mubr.f32.gmra.mxu0 %v697
    %v2557 = vpop.f32.mrf.mxu0
    %v2558 = vadd.f32 %v2333, %v2557
    %v2559 = vpop.f32.mrf.mxu0
    %2560 = vmatprep.mubr.f32.mxu0 %v923
    %2561 = vmatmul.mubr.f32.gmra.mxu0 %v698
    %v2562 = vpop.f32.mrf.mxu0
    %v2563 = vadd.f32 %v2338, %v2562
    %v2564 = vpop.f32.mrf.mxu0
    %2565 = vmatprep.mubr.f32.mxu0 %v924
    %2566 = vmatmul.mubr.f32.gmra.mxu0 %v699
    %v2567 = vpop.f32.mrf.mxu0
    %v2568 = vadd.f32 %v2343, %v2567
    %v2569 = vpop.f32.mrf.mxu0
    %2570 = vmatprep.mubr.f32.mxu0 %v925
    %2571 = vmatmul.mubr.f32.gmra.mxu0 %v700
    %v2572 = vpop.f32.mrf.mxu0
    %v2573 = vadd.f32 %v2348, %v2572
    %v2574 = vpop.f32.mrf.mxu0
    %2575 = vmatprep.mubr.f32.mxu0 %v926
    %2576 = vmatmul.mubr.f32.gmra.mxu0 %v701
    %v2577 = vpop.f32.mrf.mxu0
    %v2578 = vadd.f32 %v2353, %v2577
    %v2579 = vpop.f32.mrf.mxu0
    %2580 = vmatprep.mubr.f32.mxu0 %v927
    %2581 = vmatmul.mubr.f32.gmra.mxu0 %v702
    %v2582 = vpop.f32.mrf.mxu0
    %v2583 = vadd.f32 %v2358, %v2582
    %v2584 = vpop.f32.mrf.mxu0
    %2585 = vmatprep.mubr.f32.mxu0 %v928
    %2586 = vmatmul.mubr.f32.gmra.mxu0 %v703
    %v2587 = vpop.f32.mrf.mxu0
    %v2588 = vadd.f32 %v2363, %v2587
    %v2589 = vpop.f32.mrf.mxu0
    %2590 = vmatprep.mubr.f32.mxu0 %v929
    %2591 = vmatmul.mubr.f32.gmra.mxu0 %v704
    %v2592 = vpop.f32.mrf.mxu0
    %v2593 = vadd.f32 %v2368, %v2592
    %v2594 = vpop.f32.mrf.mxu0
    %2595 = vmatprep.mubr.f32.mxu0 %v930
    %2596 = vmatmul.mubr.f32.gmra.mxu0 %v705
    %v2597 = vpop.f32.mrf.mxu0
    %v2598 = vadd.f32 %v2373, %v2597
    %v2599 = vpop.f32.mrf.mxu0
    %2600 = vmatprep.mubr.f32.mxu0 %v931
    %2601 = vmatmul.mubr.f32.gmra.mxu0 %v706
    %v2602 = vpop.f32.mrf.mxu0
    %v2603 = vadd.f32 %v2378, %v2602
    %v2604 = vpop.f32.mrf.mxu0
    %2605 = vmatprep.mubr.f32.mxu0 %v932
    %2606 = vmatmul.mubr.f32.gmra.mxu0 %v707
    %v2607 = vpop.f32.mrf.mxu0
    %v2608 = vadd.f32 %v2383, %v2607
    %v2609 = vpop.f32.mrf.mxu0
    %2610 = vmatprep.mubr.f32.mxu0 %v933
    %2611 = vmatmul.mubr.f32.gmra.mxu0 %v708
    %v2612 = vpop.f32.mrf.mxu0
    %v2613 = vadd.f32 %v2388, %v2612
    %v2614 = vpop.f32.mrf.mxu0
    %2615 = vmatprep.mubr.f32.mxu0 %v934
    %2616 = vmatmul.mubr.f32.gmra.mxu0 %v709
    %v2617 = vpop.f32.mrf.mxu0
    %v2618 = vadd.f32 %v2393, %v2617
    %v2619 = vpop.f32.mrf.mxu0
    %2620 = vdwg.mxu0
    %2621 = vmatprep.subr.mxu0 0.0
    %2622 = vmatpush1.msra.mxu0 %v1399
    %2623 = vmatprep.subr.mxu0 0.0
    %2624 = vmatpush1.msra.mxu0 %v1396
    %2625 = vmatprep.subr.mxu0 0.0
    %2626 = vmatpush1.msra.mxu0 %v1393
    %2627 = vmatprep.subr.mxu0 0.0
    %2628 = vmatpush1.msra.mxu0 %v1390
    %2629 = vmatprep.subr.mxu0 0.0
    %2630 = vmatpush1.msra.mxu0 %v1387
    %2631 = vmatprep.subr.mxu0 0.0
    %2632 = vmatpush1.msra.mxu0 %v1384
    %2633 = vmatprep.subr.mxu0 0.0
    %2634 = vmatpush1.msra.mxu0 %v1381
    %2635 = vmatprep.subr.mxu0 0.0
    %2636 = vmatpush1.msra.mxu0 %v1378
    %2637 = vmatprep.subr.mxu0 0.0
    %2638 = vmatpush1.msra.mxu0 %v1375
    %2639 = vmatprep.subr.mxu0 0.0
    %2640 = vmatpush1.msra.mxu0 %v1372
    %2641 = vmatprep.subr.mxu0 0.0
    %2642 = vmatpush1.msra.mxu0 %v1369
    %2643 = vmatprep.subr.mxu0 0.0
    %2644 = vmatpush1.msra.mxu0 %v1366
    %2645 = vmatprep.subr.mxu0 0.0
    %2646 = vmatpush1.msra.mxu0 %v1363
    %2647 = vmatprep.subr.mxu0 0.0
    %2648 = vmatpush1.msra.mxu0 %v1360
    %2649 = vmatprep.subr.mxu0 0.0
    %2650 = vmatpush1.msra.mxu0 %v1357
    %2651 = vmatprep.subr.mxu0 0.0
    %2652 = vmatpush1.msra.mxu0 %v1354
    %2653 = vmatprep.subr.mxu0 0.0
    %2654 = vmatpush2.msra.mxu0 0.0
    %2655 = vmatprep.subr.mxu0 0.0
    %2656 = vmatpush2.msra.mxu0 0.0
    %2657 = vmatprep.subr.mxu0 0.0
    %2658 = vmatpush2.msra.mxu0 0.0
    %2659 = vmatprep.subr.mxu0 0.0
    %2660 = vmatpush2.msra.mxu0 0.0
    %2661 = vmatprep.subr.mxu0 0.0
    %2662 = vmatpush2.msra.mxu0 0.0
    %2663 = vmatprep.subr.mxu0 0.0
    %2664 = vmatpush2.msra.mxu0 0.0
    %2665 = vmatprep.subr.mxu0 0.0
    %2666 = vmatpush2.msra.mxu0 0.0
    %2667 = vmatprep.subr.mxu0 0.0
    %2668 = vmatpush2.msra.mxu0 0.0
    %2669 = vmatprep.subr.mxu0 0.0
    %2670 = vmatpush2.msra.mxu0 0.0
    %2671 = vmatprep.subr.mxu0 0.0
    %2672 = vmatpush2.msra.mxu0 0.0
    %2673 = vmatprep.subr.mxu0 0.0
    %2674 = vmatpush2.msra.mxu0 0.0
    %2675 = vmatprep.subr.mxu0 0.0
    %2676 = vmatpush2.msra.mxu0 0.0
    %2677 = vmatprep.subr.mxu0 0.0
    %2678 = vmatpush2.msra.mxu0 0.0
    %2679 = vmatprep.subr.mxu0 0.0
    %2680 = vmatpush2.msra.mxu0 0.0
    %2681 = vmatprep.subr.mxu0 0.0
    %2682 = vmatpush2.msra.mxu0 0.0
    %2683 = vmatprep.subr.mxu0 0.0
    %2684 = vmatpush2.msra.mxu0 0.0
    %2685 = vmatprep.mubr.f32.mxu0 0.0
    %2686 = vmatmul.mubr.f32.gmra.mxu0 %v1128
    %v2687 = vpop.f32.mrf.mxu0
    %v2688 = vadd.f32 %v2463, %v2687
    %v2689 = vpop.f32.mrf.mxu0
    %2690 = vmatprep.mubr.f32.mxu0 0.0
    %2691 = vmatmul.mubr.f32.gmra.mxu0 %v1129
    %v2692 = vpop.f32.mrf.mxu0
    %v2693 = vadd.f32 %v2468, %v2692
    %v2694 = vpop.f32.mrf.mxu0
    %2695 = vmatprep.mubr.f32.mxu0 0.0
    %2696 = vmatmul.mubr.f32.gmra.mxu0 %v1130
    %v2697 = vpop.f32.mrf.mxu0
    %v2698 = vadd.f32 %v2473, %v2697
    %v2699 = vpop.f32.mrf.mxu0
    %2700 = vmatprep.mubr.f32.mxu0 0.0
    %2701 = vmatmul.mubr.f32.gmra.mxu0 %v1131
    %v2702 = vpop.f32.mrf.mxu0
    %v2703 = vadd.f32 %v2478, %v2702
    %v2704 = vpop.f32.mrf.mxu0
    %2705 = vmatprep.mubr.f32.mxu0 0.0
    %2706 = vmatmul.mubr.f32.gmra.mxu0 %v1132
    %v2707 = vpop.f32.mrf.mxu0
    %v2708 = vadd.f32 %v2483, %v2707
    %v2709 = vpop.f32.mrf.mxu0
    %2710 = vmatprep.mubr.f32.mxu0 0.0
    %2711 = vmatmul.mubr.f32.gmra.mxu0 %v1133
    %v2712 = vpop.f32.mrf.mxu0
    %v2713 = vadd.f32 %v2488, %v2712
    %v2714 = vpop.f32.mrf.mxu0
    %2715 = vmatprep.mubr.f32.mxu0 0.0
    %2716 = vmatmul.mubr.f32.gmra.mxu0 %v1134
    %v2717 = vpop.f32.mrf.mxu0
    %v2718 = vadd.f32 %v2493, %v2717
    %v2719 = vpop.f32.mrf.mxu0
    %2720 = vmatprep.mubr.f32.mxu0 0.0
    %2721 = vmatmul.mubr.f32.gmra.mxu0 %v1135
    %v2722 = vpop.f32.mrf.mxu0
    %v2723 = vadd.f32 %v2498, %v2722
    %v2724 = vpop.f32.mrf.mxu0
    %2725 = vmatprep.mubr.f32.mxu0 0.0
    %2726 = vmatmul.mubr.f32.gmra.mxu0 %v1136
    %v2727 = vpop.f32.mrf.mxu0
    %v2728 = vadd.f32 %v2503, %v2727
    %v2729 = vpop.f32.mrf.mxu0
    %2730 = vmatprep.mubr.f32.mxu0 0.0
    %2731 = vmatmul.mubr.f32.gmra.mxu0 %v1137
    %v2732 = vpop.f32.mrf.mxu0
    %v2733 = vadd.f32 %v2508, %v2732
    %v2734 = vpop.f32.mrf.mxu0
    %2735 = vmatprep.mubr.f32.mxu0 0.0
    %2736 = vmatmul.mubr.f32.gmra.mxu0 %v1138
    %v2737 = vpop.f32.mrf.mxu0
    %v2738 = vadd.f32 %v2513, %v2737
    %v2739 = vpop.f32.mrf.mxu0
    %2740 = vmatprep.mubr.f32.mxu0 0.0
    %2741 = vmatmul.mubr.f32.gmra.mxu0 %v1139
    %v2742 = vpop.f32.mrf.mxu0
    %v2743 = vadd.f32 %v2518, %v2742
    %v2744 = vpop.f32.mrf.mxu0
    %2745 = vmatprep.mubr.f32.mxu0 0.0
    %2746 = vmatmul.mubr.f32.gmra.mxu0 %v1140
    %v2747 = vpop.f32.mrf.mxu0
    %v2748 = vadd.f32 %v2523, %v2747
    %v2749 = vpop.f32.mrf.mxu0
    %2750 = vmatprep.mubr.f32.mxu0 0.0
    %2751 = vmatmul.mubr.f32.gmra.mxu0 %v1141
    %v2752 = vpop.f32.mrf.mxu0
    %v2753 = vadd.f32 %v2528, %v2752
    %v2754 = vpop.f32.mrf.mxu0
    %2755 = vmatprep.mubr.f32.mxu0 0.0
    %2756 = vmatmul.mubr.f32.gmra.mxu0 %v1142
    %v2757 = vpop.f32.mrf.mxu0
    %v2758 = vadd.f32 %v2533, %v2757
    %v2759 = vpop.f32.mrf.mxu0
    %2760 = vmatprep.mubr.f32.mxu0 0.0
    %2761 = vmatmul.mubr.f32.gmra.mxu0 %v1143
    %v2762 = vpop.f32.mrf.mxu0
    %v2763 = vadd.f32 %v2538, %v2762
    %v2764 = vpop.f32.mrf.mxu0
    %2765 = vmatprep.mubr.f32.mxu0 0.0
    %2766 = vmatmul.mubr.f32.gmra.mxu0 %v1144
    %v2767 = vpop.f32.mrf.mxu0
    %v2768 = vadd.f32 %v2543, %v2767
    %v2769 = vpop.f32.mrf.mxu0
    %2770 = vmatprep.mubr.f32.mxu0 0.0
    %2771 = vmatmul.mubr.f32.gmra.mxu0 %v1145
    %v2772 = vpop.f32.mrf.mxu0
    %v2773 = vadd.f32 %v2548, %v2772
    %v2774 = vpop.f32.mrf.mxu0
    %2775 = vmatprep.mubr.f32.mxu0 0.0
    %2776 = vmatmul.mubr.f32.gmra.mxu0 %v1146
    %v2777 = vpop.f32.mrf.mxu0
    %v2778 = vadd.f32 %v2553, %v2777
    %v2779 = vpop.f32.mrf.mxu0
    %2780 = vmatprep.mubr.f32.mxu0 0.0
    %2781 = vmatmul.mubr.f32.gmra.mxu0 %v1147
    %v2782 = vpop.f32.mrf.mxu0
    %v2783 = vadd.f32 %v2558, %v2782
    %v2784 = vpop.f32.mrf.mxu0
    %2785 = vmatprep.mubr.f32.mxu0 0.0
    %2786 = vmatmul.mubr.f32.gmra.mxu0 %v1148
    %v2787 = vpop.f32.mrf.mxu0
    %v2788 = vadd.f32 %v2563, %v2787
    %v2789 = vpop.f32.mrf.mxu0
    %2790 = vmatprep.mubr.f32.mxu0 0.0
    %2791 = vmatmul.mubr.f32.gmra.mxu0 %v1149
    %v2792 = vpop.f32.mrf.mxu0
    %v2793 = vadd.f32 %v2568, %v2792
    %v2794 = vpop.f32.mrf.mxu0
    %2795 = vmatprep.mubr.f32.mxu0 0.0
    %2796 = vmatmul.mubr.f32.gmra.mxu0 %v1150
    %v2797 = vpop.f32.mrf.mxu0
    %v2798 = vadd.f32 %v2573, %v2797
    %v2799 = vpop.f32.mrf.mxu0
    %2800 = vmatprep.mubr.f32.mxu0 0.0
    %2801 = vmatmul.mubr.f32.gmra.mxu0 %v1151
    %v2802 = vpop.f32.mrf.mxu0
    %v2803 = vadd.f32 %v2578, %v2802
    %v2804 = vpop.f32.mrf.mxu0
    %2805 = vmatprep.mubr.f32.mxu0 0.0
    %2806 = vmatmul.mubr.f32.gmra.mxu0 %v1152
    %v2807 = vpop.f32.mrf.mxu0
    %v2808 = vadd.f32 %v2583, %v2807
    %v2809 = vpop.f32.mrf.mxu0
    %2810 = vmatprep.mubr.f32.mxu0 0.0
    %2811 = vmatmul.mubr.f32.gmra.mxu0 %v1153
    %v2812 = vpop.f32.mrf.mxu0
    %v2813 = vadd.f32 %v2588, %v2812
    %v2814 = vpop.f32.mrf.mxu0
    %2815 = vmatprep.mubr.f32.mxu0 0.0
    %2816 = vmatmul.mubr.f32.gmra.mxu0 %v1154
    %v2817 = vpop.f32.mrf.mxu0
    %v2818 = vadd.f32 %v2593, %v2817
    %v2819 = vpop.f32.mrf.mxu0
    %2820 = vmatprep.mubr.f32.mxu0 0.0
    %2821 = vmatmul.mubr.f32.gmra.mxu0 %v1155
    %v2822 = vpop.f32.mrf.mxu0
    %v2823 = vadd.f32 %v2598, %v2822
    %v2824 = vpop.f32.mrf.mxu0
    %2825 = vmatprep.mubr.f32.mxu0 0.0
    %2826 = vmatmul.mubr.f32.gmra.mxu0 %v1156
    %v2827 = vpop.f32.mrf.mxu0
    %v2828 = vadd.f32 %v2603, %v2827
    %v2829 = vpop.f32.mrf.mxu0
    %2830 = vmatprep.mubr.f32.mxu0 0.0
    %2831 = vmatmul.mubr.f32.gmra.mxu0 %v1157
    %v2832 = vpop.f32.mrf.mxu0
    %v2833 = vadd.f32 %v2608, %v2832
    %v2834 = vpop.f32.mrf.mxu0
    %2835 = vmatprep.mubr.f32.mxu0 0.0
    %2836 = vmatmul.mubr.f32.gmra.mxu0 %v1158
    %v2837 = vpop.f32.mrf.mxu0
    %v2838 = vadd.f32 %v2613, %v2837
    %v2839 = vpop.f32.mrf.mxu0
    %2840 = vmatprep.mubr.f32.mxu0 0.0
    %2841 = vmatmul.mubr.f32.gmra.mxu0 %v1159
    %v2842 = vpop.f32.mrf.mxu0
    %v2843 = vadd.f32 %v2618, %v2842
    %v2844 = vpop.f32.mrf.mxu0
    %2845 = vdwg.mxu0
    %v2846 = vlaneseq
    %v2847 = vshrl.u32 %v2846, 7
    %v2848 = vadd.s32 %v2847, 8
    %v2849 = vadd.s32 %v2847, 16
    %v2850 = vadd.s32 %v2847, 24
    %vm2851 = vcmp.lt.s32.totalorder %v2847, 28
    %vm2852 = vcmp.lt.s32.totalorder %v2848, 28
    %vm2853 = vcmp.lt.s32.totalorder %v2849, 28
    %vm2854 = vcmp.lt.s32.totalorder %v2850, 28
    %v2855 = vsel %vm2851, 1, 0
    %v2856 = vsel %vm2852, 1, 0
    %v2857 = vsel %vm2853, 1, 0
    %v2858 = vsel %vm2854, 1, 0
    %vm2859 = vcmp.eq.s32.totalorder %v2855, 1
    %vm2860 = vcmp.eq.s32.totalorder %v2856, 1
    %vm2861 = vcmp.eq.s32.totalorder %v2857, 1
    %vm2862 = vcmp.eq.s32.totalorder %v2858, 1
    %v2863 = vsel %vm2859, %v1981, -inf
    %v2864 = vsel %vm2860, %v1987, -inf
    %v2865 = vsel %vm2861, %v1993, -inf
    %v2866 = vsel %vm2862, %v1999, -inf
    %v2867 = vsel %vm2859, %v2005, -inf
    %v2868 = vsel %vm2860, %v2011, -inf
    %v2869 = vsel %vm2861, %v2017, -inf
    %v2870 = vsel %vm2862, %v2023, -inf
    %v2871 = vsel %vm2859, %v2029, -inf
    %v2872 = vsel %vm2860, %v2035, -inf
    %v2873 = vsel %vm2861, %v2041, -inf
    %v2874 = vsel %vm2862, %v2047, -inf
    %v2875 = vsel %vm2859, %v2053, -inf
    %v2876 = vsel %vm2860, %v2059, -inf
    %v2877 = vsel %vm2861, %v2065, -inf
    %v2878 = vsel %vm2862, %v2071, -inf
    %v2879 = vsel %vm2859, %v2077, -inf
    %v2880 = vsel %vm2860, %v2083, -inf
    %v2881 = vsel %vm2861, %v2089, -inf
    %v2882 = vsel %vm2862, %v2095, -inf
    %v2883 = vsel %vm2859, %v2101, -inf
    %v2884 = vsel %vm2860, %v2107, -inf
    %v2885 = vsel %vm2861, %v2113, -inf
    %v2886 = vsel %vm2862, %v2119, -inf
    %v2887 = vsel %vm2859, %v2125, -inf
    %v2888 = vsel %vm2860, %v2131, -inf
    %v2889 = vsel %vm2861, %v2137, -inf
    %v2890 = vsel %vm2862, %v2143, -inf
    %v2891 = vsel %vm2859, %v2149, -inf
    %v2892 = vsel %vm2860, %v2155, -inf
    %v2893 = vsel %vm2861, %v2161, -inf
    %v2894 = vsel %vm2862, %v2167, -inf
    %v2895 = vmax.f32 %v2863, %v2864
    %v2896 = vmax.f32 %v2895, %v2865
    %v2897 = vmax.f32 %v2896, %v2866
    %v2898 = vrot.slane %v2897, 4
    %v2899 = vmax.f32 %v2897, %v2898
    %v2900 = vrot.slane %v2899, 2
    %v2901 = vmax.f32 %v2899, %v2900
    %v2902 = vrot.slane %v2901, 1
    %v2903 = vmax.f32 %v2901, %v2902
    %v2904 = vmax.f32 %v2867, %v2868
    %v2905 = vmax.f32 %v2904, %v2869
    %v2906 = vmax.f32 %v2905, %v2870
    %v2907 = vrot.slane %v2906, 4
    %v2908 = vmax.f32 %v2906, %v2907
    %v2909 = vrot.slane %v2908, 2
    %v2910 = vmax.f32 %v2908, %v2909
    %v2911 = vrot.slane %v2910, 1
    %v2912 = vmax.f32 %v2910, %v2911
    %v2913 = vmax.f32 %v2871, %v2872
    %v2914 = vmax.f32 %v2913, %v2873
    %v2915 = vmax.f32 %v2914, %v2874
    %v2916 = vrot.slane %v2915, 4
    %v2917 = vmax.f32 %v2915, %v2916
    %v2918 = vrot.slane %v2917, 2
    %v2919 = vmax.f32 %v2917, %v2918
    %v2920 = vrot.slane %v2919, 1
    %v2921 = vmax.f32 %v2919, %v2920
    %v2922 = vmax.f32 %v2875, %v2876
    %v2923 = vmax.f32 %v2922, %v2877
    %v2924 = vmax.f32 %v2923, %v2878
    %v2925 = vrot.slane %v2924, 4
    %v2926 = vmax.f32 %v2924, %v2925
    %v2927 = vrot.slane %v2926, 2
    %v2928 = vmax.f32 %v2926, %v2927
    %v2929 = vrot.slane %v2928, 1
    %v2930 = vmax.f32 %v2928, %v2929
    %v2931 = vmax.f32 %v2879, %v2880
    %v2932 = vmax.f32 %v2931, %v2881
    %v2933 = vmax.f32 %v2932, %v2882
    %v2934 = vrot.slane %v2933, 4
    %v2935 = vmax.f32 %v2933, %v2934
    %v2936 = vrot.slane %v2935, 2
    %v2937 = vmax.f32 %v2935, %v2936
    %v2938 = vrot.slane %v2937, 1
    %v2939 = vmax.f32 %v2937, %v2938
    %v2940 = vmax.f32 %v2883, %v2884
    %v2941 = vmax.f32 %v2940, %v2885
    %v2942 = vmax.f32 %v2941, %v2886
    %v2943 = vrot.slane %v2942, 4
    %v2944 = vmax.f32 %v2942, %v2943
    %v2945 = vrot.slane %v2944, 2
    %v2946 = vmax.f32 %v2944, %v2945
    %v2947 = vrot.slane %v2946, 1
    %v2948 = vmax.f32 %v2946, %v2947
    %v2949 = vmax.f32 %v2887, %v2888
    %v2950 = vmax.f32 %v2949, %v2889
    %v2951 = vmax.f32 %v2950, %v2890
    %v2952 = vrot.slane %v2951, 4
    %v2953 = vmax.f32 %v2951, %v2952
    %v2954 = vrot.slane %v2953, 2
    %v2955 = vmax.f32 %v2953, %v2954
    %v2956 = vrot.slane %v2955, 1
    %v2957 = vmax.f32 %v2955, %v2956
    %v2958 = vmax.f32 %v2891, %v2892
    %v2959 = vmax.f32 %v2958, %v2893
    %v2960 = vmax.f32 %v2959, %v2894
    %v2961 = vrot.slane %v2960, 4
    %v2962 = vmax.f32 %v2960, %v2961
    %v2963 = vrot.slane %v2962, 2
    %v2964 = vmax.f32 %v2962, %v2963
    %v2965 = vrot.slane %v2964, 1
    %v2966 = vmax.f32 %v2964, %v2965
    %v2967 = vld [vmem:[%s2] sm:$0x1]
    %v2968 = vlaneseq
    %v2969 = vshrl.u32 %v2968, 7
    %v2970 = vsub.s32 0, %v2969
    %v2971 = vrot.slane %v2967, %v2970
    %v2972 = vadd.f32 %v2903, %v2971
    %v2973 = vadd.f32 %v2912, %v2971
    %v2974 = vadd.f32 %v2921, %v2971
    %v2975 = vadd.f32 %v2930, %v2971
    %v2976 = vadd.f32 %v2939, %v2971
    %v2977 = vadd.f32 %v2948, %v2971
    %v2978 = vadd.f32 %v2957, %v2971
    %v2979 = vadd.f32 %v2966, %v2971
    %v2980 = vmax.f32 %v2972, 0.0
    %v2981 = vmax.f32 %v2973, 0.0
    %v2982 = vmax.f32 %v2974, 0.0
    %v2983 = vmax.f32 %v2975, 0.0
    %v2984 = vmax.f32 %v2976, 0.0
    %v2985 = vmax.f32 %v2977, 0.0
    %v2986 = vmax.f32 %v2978, 0.0
    %v2987 = vmax.f32 %v2979, 0.0
    %vm2988 = vcmp.lt.s32.totalorder %v2847, 27
    %vm2989 = vcmp.lt.s32.totalorder %v2848, 27
    %vm2990 = vcmp.lt.s32.totalorder %v2849, 27
    %vm2991 = vcmp.lt.s32.totalorder %v2850, 27
    %v2992 = vsel %vm2988, 1, 0
    %v2993 = vsel %vm2989, 1, 0
    %v2994 = vsel %vm2990, 1, 0
    %v2995 = vsel %vm2991, 1, 0
    %vm2996 = vcmp.eq.s32.totalorder %v2992, 1
    %vm2997 = vcmp.eq.s32.totalorder %v2993, 1
    %vm2998 = vcmp.eq.s32.totalorder %v2994, 1
    %vm2999 = vcmp.eq.s32.totalorder %v2995, 1
    %v3000 = vsel %vm2996, %v1983, -inf
    %v3001 = vsel %vm2997, %v1989, -inf
    %v3002 = vsel %vm2998, %v1995, -inf
    %v3003 = vsel %vm2999, %v2001, -inf
    %v3004 = vsel %vm2996, %v2007, -inf
    %v3005 = vsel %vm2997, %v2013, -inf
    %v3006 = vsel %vm2998, %v2019, -inf
    %v3007 = vsel %vm2999, %v2025, -inf
    %v3008 = vsel %vm2996, %v2031, -inf
    %v3009 = vsel %vm2997, %v2037, -inf
    %v3010 = vsel %vm2998, %v2043, -inf
    %v3011 = vsel %vm2999, %v2049, -inf
    %v3012 = vsel %vm2996, %v2055, -inf
    %v3013 = vsel %vm2997, %v2061, -inf
    %v3014 = vsel %vm2998, %v2067, -inf
    %v3015 = vsel %vm2999, %v2073, -inf
    %v3016 = vsel %vm2996, %v2079, -inf
    %v3017 = vsel %vm2997, %v2085, -inf
    %v3018 = vsel %vm2998, %v2091, -inf
    %v3019 = vsel %vm2999, %v2097, -inf
    %v3020 = vsel %vm2996, %v2103, -inf
    %v3021 = vsel %vm2997, %v2109, -inf
    %v3022 = vsel %vm2998, %v2115, -inf
    %v3023 = vsel %vm2999, %v2121, -inf
    %v3024 = vsel %vm2996, %v2127, -inf
    %v3025 = vsel %vm2997, %v2133, -inf
    %v3026 = vsel %vm2998, %v2139, -inf
    %v3027 = vsel %vm2999, %v2145, -inf
    %v3028 = vsel %vm2996, %v2151, -inf
    %v3029 = vsel %vm2997, %v2157, -inf
    %v3030 = vsel %vm2998, %v2163, -inf
    %v3031 = vsel %vm2999, %v2169, -inf
    %v3032 = vmax.f32 %v3000, %v3001
    %v3033 = vmax.f32 %v3032, %v3002
    %v3034 = vmax.f32 %v3033, %v3003
    %v3035 = vrot.slane %v3034, 4
    %v3036 = vmax.f32 %v3034, %v3035
    %v3037 = vrot.slane %v3036, 2
    %v3038 = vmax.f32 %v3036, %v3037
    %v3039 = vrot.slane %v3038, 1
    %v3040 = vmax.f32 %v3038, %v3039
    %v3041 = vmax.f32 %v3004, %v3005
    %v3042 = vmax.f32 %v3041, %v3006
    %v3043 = vmax.f32 %v3042, %v3007
    %v3044 = vrot.slane %v3043, 4
    %v3045 = vmax.f32 %v3043, %v3044
    %v3046 = vrot.slane %v3045, 2
    %v3047 = vmax.f32 %v3045, %v3046
    %v3048 = vrot.slane %v3047, 1
    %v3049 = vmax.f32 %v3047, %v3048
    %v3050 = vmax.f32 %v3008, %v3009
    %v3051 = vmax.f32 %v3050, %v3010
    %v3052 = vmax.f32 %v3051, %v3011
    %v3053 = vrot.slane %v3052, 4
    %v3054 = vmax.f32 %v3052, %v3053
    %v3055 = vrot.slane %v3054, 2
    %v3056 = vmax.f32 %v3054, %v3055
    %v3057 = vrot.slane %v3056, 1
    %v3058 = vmax.f32 %v3056, %v3057
    %v3059 = vmax.f32 %v3012, %v3013
    %v3060 = vmax.f32 %v3059, %v3014
    %v3061 = vmax.f32 %v3060, %v3015
    %v3062 = vrot.slane %v3061, 4
    %v3063 = vmax.f32 %v3061, %v3062
    %v3064 = vrot.slane %v3063, 2
    %v3065 = vmax.f32 %v3063, %v3064
    %v3066 = vrot.slane %v3065, 1
    %v3067 = vmax.f32 %v3065, %v3066
    %v3068 = vmax.f32 %v3016, %v3017
    %v3069 = vmax.f32 %v3068, %v3018
    %v3070 = vmax.f32 %v3069, %v3019
    %v3071 = vrot.slane %v3070, 4
    %v3072 = vmax.f32 %v3070, %v3071
    %v3073 = vrot.slane %v3072, 2
    %v3074 = vmax.f32 %v3072, %v3073
    %v3075 = vrot.slane %v3074, 1
    %v3076 = vmax.f32 %v3074, %v3075
    %v3077 = vmax.f32 %v3020, %v3021
    %v3078 = vmax.f32 %v3077, %v3022
    %v3079 = vmax.f32 %v3078, %v3023
    %v3080 = vrot.slane %v3079, 4
    %v3081 = vmax.f32 %v3079, %v3080
    %v3082 = vrot.slane %v3081, 2
    %v3083 = vmax.f32 %v3081, %v3082
    %v3084 = vrot.slane %v3083, 1
    %v3085 = vmax.f32 %v3083, %v3084
    %v3086 = vmax.f32 %v3024, %v3025
    %v3087 = vmax.f32 %v3086, %v3026
    %v3088 = vmax.f32 %v3087, %v3027
    %v3089 = vrot.slane %v3088, 4
    %v3090 = vmax.f32 %v3088, %v3089
    %v3091 = vrot.slane %v3090, 2
    %v3092 = vmax.f32 %v3090, %v3091
    %v3093 = vrot.slane %v3092, 1
    %v3094 = vmax.f32 %v3092, %v3093
    %v3095 = vmax.f32 %v3028, %v3029
    %v3096 = vmax.f32 %v3095, %v3030
    %v3097 = vmax.f32 %v3096, %v3031
    %v3098 = vrot.slane %v3097, 4
    %v3099 = vmax.f32 %v3097, %v3098
    %v3100 = vrot.slane %v3099, 2
    %v3101 = vmax.f32 %v3099, %v3100
    %v3102 = vrot.slane %v3101, 1
    %v3103 = vmax.f32 %v3101, %v3102
    %v3104 = vld [vmem:[%s2 + $0x1] sm:$0x1]
    %v3105 = vlaneseq
    %v3106 = vshrl.u32 %v3105, 7
    %v3107 = vsub.s32 0, %v3106
    %v3108 = vrot.slane %v3104, %v3107
    %v3109 = vadd.f32 %v3040, %v3108
    %v3110 = vadd.f32 %v3049, %v3108
    %v3111 = vadd.f32 %v3058, %v3108
    %v3112 = vadd.f32 %v3067, %v3108
    %v3113 = vadd.f32 %v3076, %v3108
    %v3114 = vadd.f32 %v3085, %v3108
    %v3115 = vadd.f32 %v3094, %v3108
    %v3116 = vadd.f32 %v3103, %v3108
    %v3117 = vmax.f32 %v3109, 0.0
    %v3118 = vmax.f32 %v3110, 0.0
    %v3119 = vmax.f32 %v3111, 0.0
    %v3120 = vmax.f32 %v3112, 0.0
    %v3121 = vmax.f32 %v3113, 0.0
    %v3122 = vmax.f32 %v3114, 0.0
    %v3123 = vmax.f32 %v3115, 0.0
    %v3124 = vmax.f32 %v3116, 0.0
    %vm3125 = vcmp.lt.s32.totalorder %v2847, 26
    %vm3126 = vcmp.lt.s32.totalorder %v2848, 26
    %vm3127 = vcmp.lt.s32.totalorder %v2849, 26
    %vm3128 = vcmp.lt.s32.totalorder %v2850, 26
    %v3129 = vsel %vm3125, 1, 0
    %v3130 = vsel %vm3126, 1, 0
    %v3131 = vsel %vm3127, 1, 0
    %v3132 = vsel %vm3128, 1, 0
    %vm3133 = vcmp.eq.s32.totalorder %v3129, 1
    %vm3134 = vcmp.eq.s32.totalorder %v3130, 1
    %vm3135 = vcmp.eq.s32.totalorder %v3131, 1
    %vm3136 = vcmp.eq.s32.totalorder %v3132, 1
    %v3137 = vsel %vm3133, %v2688, -inf
    %v3138 = vsel %vm3134, %v2693, -inf
    %v3139 = vsel %vm3135, %v2698, -inf
    %v3140 = vsel %vm3136, %v2703, -inf
    %v3141 = vsel %vm3133, %v2708, -inf
    %v3142 = vsel %vm3134, %v2713, -inf
    %v3143 = vsel %vm3135, %v2718, -inf
    %v3144 = vsel %vm3136, %v2723, -inf
    %v3145 = vsel %vm3133, %v2728, -inf
    %v3146 = vsel %vm3134, %v2733, -inf
    %v3147 = vsel %vm3135, %v2738, -inf
    %v3148 = vsel %vm3136, %v2743, -inf
    %v3149 = vsel %vm3133, %v2748, -inf
    %v3150 = vsel %vm3134, %v2753, -inf
    %v3151 = vsel %vm3135, %v2758, -inf
    %v3152 = vsel %vm3136, %v2763, -inf
    %v3153 = vsel %vm3133, %v2768, -inf
    %v3154 = vsel %vm3134, %v2773, -inf
    %v3155 = vsel %vm3135, %v2778, -inf
    %v3156 = vsel %vm3136, %v2783, -inf
    %v3157 = vsel %vm3133, %v2788, -inf
    %v3158 = vsel %vm3134, %v2793, -inf
    %v3159 = vsel %vm3135, %v2798, -inf
    %v3160 = vsel %vm3136, %v2803, -inf
    %v3161 = vsel %vm3133, %v2808, -inf
    %v3162 = vsel %vm3134, %v2813, -inf
    %v3163 = vsel %vm3135, %v2818, -inf
    %v3164 = vsel %vm3136, %v2823, -inf
    %v3165 = vsel %vm3133, %v2828, -inf
    %v3166 = vsel %vm3134, %v2833, -inf
    %v3167 = vsel %vm3135, %v2838, -inf
    %v3168 = vsel %vm3136, %v2843, -inf
    %v3169 = vmax.f32 %v3137, %v3138
    %v3170 = vmax.f32 %v3169, %v3139
    %v3171 = vmax.f32 %v3170, %v3140
    %v3172 = vrot.slane %v3171, 4
    %v3173 = vmax.f32 %v3171, %v3172
    %v3174 = vrot.slane %v3173, 2
    %v3175 = vmax.f32 %v3173, %v3174
    %v3176 = vrot.slane %v3175, 1
    %v3177 = vmax.f32 %v3175, %v3176
    %v3178 = vmax.f32 %v3141, %v3142
    %v3179 = vmax.f32 %v3178, %v3143
    %v3180 = vmax.f32 %v3179, %v3144
    %v3181 = vrot.slane %v3180, 4
    %v3182 = vmax.f32 %v3180, %v3181
    %v3183 = vrot.slane %v3182, 2
    %v3184 = vmax.f32 %v3182, %v3183
    %v3185 = vrot.slane %v3184, 1
    %v3186 = vmax.f32 %v3184, %v3185
    %v3187 = vmax.f32 %v3145, %v3146
    %v3188 = vmax.f32 %v3187, %v3147
    %v3189 = vmax.f32 %v3188, %v3148
    %v3190 = vrot.slane %v3189, 4
    %v3191 = vmax.f32 %v3189, %v3190
    %v3192 = vrot.slane %v3191, 2
    %v3193 = vmax.f32 %v3191, %v3192
    %v3194 = vrot.slane %v3193, 1
    %v3195 = vmax.f32 %v3193, %v3194
    %v3196 = vmax.f32 %v3149, %v3150
    %v3197 = vmax.f32 %v3196, %v3151
    %v3198 = vmax.f32 %v3197, %v3152
    %v3199 = vrot.slane %v3198, 4
    %v3200 = vmax.f32 %v3198, %v3199
    %v3201 = vrot.slane %v3200, 2
    %v3202 = vmax.f32 %v3200, %v3201
    %v3203 = vrot.slane %v3202, 1
    %v3204 = vmax.f32 %v3202, %v3203
    %v3205 = vmax.f32 %v3153, %v3154
    %v3206 = vmax.f32 %v3205, %v3155
    %v3207 = vmax.f32 %v3206, %v3156
    %v3208 = vrot.slane %v3207, 4
    %v3209 = vmax.f32 %v3207, %v3208
    %v3210 = vrot.slane %v3209, 2
    %v3211 = vmax.f32 %v3209, %v3210
    %v3212 = vrot.slane %v3211, 1
    %v3213 = vmax.f32 %v3211, %v3212
    %v3214 = vmax.f32 %v3157, %v3158
    %v3215 = vmax.f32 %v3214, %v3159
    %v3216 = vmax.f32 %v3215, %v3160
    %v3217 = vrot.slane %v3216, 4
    %v3218 = vmax.f32 %v3216, %v3217
    %v3219 = vrot.slane %v3218, 2
    %v3220 = vmax.f32 %v3218, %v3219
    %v3221 = vrot.slane %v3220, 1
    %v3222 = vmax.f32 %v3220, %v3221
    %v3223 = vmax.f32 %v3161, %v3162
    %v3224 = vmax.f32 %v3223, %v3163
    %v3225 = vmax.f32 %v3224, %v3164
    %v3226 = vrot.slane %v3225, 4
    %v3227 = vmax.f32 %v3225, %v3226
    %v3228 = vrot.slane %v3227, 2
    %v3229 = vmax.f32 %v3227, %v3228
    %v3230 = vrot.slane %v3229, 1
    %v3231 = vmax.f32 %v3229, %v3230
    %v3232 = vmax.f32 %v3165, %v3166
    %v3233 = vmax.f32 %v3232, %v3167
    %v3234 = vmax.f32 %v3233, %v3168
    %v3235 = vrot.slane %v3234, 4
    %v3236 = vmax.f32 %v3234, %v3235
    %v3237 = vrot.slane %v3236, 2
    %v3238 = vmax.f32 %v3236, %v3237
    %v3239 = vrot.slane %v3238, 1
    %v3240 = vmax.f32 %v3238, %v3239
    %v3241 = vld [vmem:[%s2 + $0x2] sm:$0x1]
    %v3242 = vlaneseq
    %v3243 = vshrl.u32 %v3242, 7
    %v3244 = vsub.s32 0, %v3243
    %v3245 = vrot.slane %v3241, %v3244
    %v3246 = vadd.f32 %v3177, %v3245
    %v3247 = vadd.f32 %v3186, %v3245
    %v3248 = vadd.f32 %v3195, %v3245
    %v3249 = vadd.f32 %v3204, %v3245
    %v3250 = vadd.f32 %v3213, %v3245
    %v3251 = vadd.f32 %v3222, %v3245
    %v3252 = vadd.f32 %v3231, %v3245
    %v3253 = vadd.f32 %v3240, %v3245
    %v3254 = vmax.f32 %v3246, 0.0
    %v3255 = vmax.f32 %v3247, 0.0
    %v3256 = vmax.f32 %v3248, 0.0
    %v3257 = vmax.f32 %v3249, 0.0
    %v3258 = vmax.f32 %v3250, 0.0
    %v3259 = vmax.f32 %v3251, 0.0
    %v3260 = vmax.f32 %v3252, 0.0
    %v3261 = vmax.f32 %v3253, 0.0
    %v3270 = vrot.slane %v2981, 7
    %vm3271 = vcmask 1041409
    %v3272 = vsel %vm3271, %v3270, %v2980
    %v3273 = vrot.slane %v2982, 6
    %vm3274 = vcmask 1042434
    %v3275 = vsel %vm3274, %v3273, %v3272
    %v3276 = vrot.slane %v2983, 5
    %vm3277 = vcmask 1043459
    %v3278 = vsel %vm3277, %v3276, %v3275
    %v3279 = vrot.slane %v2984, 4
    %vm3280 = vcmask 1044484
    %v3281 = vsel %vm3280, %v3279, %v3278
    %v3282 = vrot.slane %v2985, 3
    %vm3283 = vcmask 1045509
    %v3284 = vsel %vm3283, %v3282, %v3281
    %v3285 = vrot.slane %v2986, 2
    %vm3286 = vcmask 1046534
    %v3287 = vsel %vm3286, %v3285, %v3284
    %v3288 = vrot.slane %v2987, 1
    %vm3289 = vcmask 1047559
    %v3290 = vsel %vm3289, %v3288, %v3287
    %v3300 = vrot.slane %v3118, 7
    %v3301 = vsel %vm3271, %v3300, %v3117
    %v3302 = vrot.slane %v3119, 6
    %v3303 = vsel %vm3274, %v3302, %v3301
    %v3304 = vrot.slane %v3120, 5
    %v3305 = vsel %vm3277, %v3304, %v3303
    %v3306 = vrot.slane %v3121, 4
    %v3307 = vsel %vm3280, %v3306, %v3305
    %v3308 = vrot.slane %v3122, 3
    %v3309 = vsel %vm3283, %v3308, %v3307
    %v3310 = vrot.slane %v3123, 2
    %v3311 = vsel %vm3286, %v3310, %v3309
    %v3312 = vrot.slane %v3124, 1
    %v3313 = vsel %vm3289, %v3312, %v3311
    %v3323 = vrot.slane %v3255, 7
    %v3324 = vsel %vm3271, %v3323, %v3254
    %v3325 = vrot.slane %v3256, 6
    %v3326 = vsel %vm3274, %v3325, %v3324
    %v3327 = vrot.slane %v3257, 5
    %v3328 = vsel %vm3277, %v3327, %v3326
    %v3329 = vrot.slane %v3258, 4
    %v3330 = vsel %vm3280, %v3329, %v3328
    %v3331 = vrot.slane %v3259, 3
    %v3332 = vsel %vm3283, %v3331, %v3330
    %v3333 = vrot.slane %v3260, 2
    %v3334 = vsel %vm3286, %v3333, %v3332
    %v3335 = vrot.slane %v3261, 1
    %v3336 = vsel %vm3289, %v3335, %v3334
    %v3338 = vld [vmem:[%s3] sm:$0xff]
    %v3339 = vld [vmem:[%s3 + $0x8] sm:$0xff]
    %v3340 = vld [vmem:[%s3 + $0x10] sm:$0xff]
    %v3341 = vld [vmem:[%s3 + $0x18] sm:$0xff]
    %v3342 = vld [vmem:[%s3 + $0x20] sm:$0xff]
    %v3343 = vld [vmem:[%s3 + $0x28] sm:$0xff]
    %v3344 = vld [vmem:[%s3 + $0x30] sm:$0xff]
    %v3345 = vld [vmem:[%s3 + $0x38] sm:$0xff]
    %v3346 = vld [vmem:[%s3 + $0x40] sm:$0xff]
    %v3347 = vld [vmem:[%s3 + $0x48] sm:$0xff]
    %v3348 = vld [vmem:[%s3 + $0x50] sm:$0xff]
    %v3349 = vld [vmem:[%s3 + $0x58] sm:$0xff]
    %v3350 = vld [vmem:[%s3 + $0x60] sm:$0xff]
    %v3351 = vld [vmem:[%s3 + $0x68] sm:$0xff]
    %v3352 = vld [vmem:[%s3 + $0x70] sm:$0xff]
    %v3353 = vld [vmem:[%s3 + $0x78] sm:$0xff]
    %v3354 = vld [vmem:[%s3 + $0x80] sm:$0xff]
    %v3355 = vld [vmem:[%s3 + $0x88] sm:$0xff]
    %v3356 = vld [vmem:[%s3 + $0x90] sm:$0xff]
    %v3357 = vld [vmem:[%s3 + $0x98] sm:$0xff]
    %v3358 = vld [vmem:[%s3 + $0xa0] sm:$0xff]
    %v3359 = vld [vmem:[%s3 + $0xa8] sm:$0xff]
    %v3360 = vld [vmem:[%s3 + $0xb0] sm:$0xff]
    %v3361 = vld [vmem:[%s3 + $0xb8] sm:$0xff]
    %v3362 = vld [vmem:[%s3 + $0xc0] sm:$0xff]
    %v3363 = vld [vmem:[%s3 + $0xc8] sm:$0xff]
    %v3364 = vld [vmem:[%s3 + $0xd0] sm:$0xff]
    %v3365 = vld [vmem:[%s3 + $0xd8] sm:$0xff]
    %v3366 = vld [vmem:[%s3 + $0xe0] sm:$0xff]
    %v3367 = vld [vmem:[%s3 + $0xe8] sm:$0xff]
    %v3368 = vld [vmem:[%s3 + $0xf0] sm:$0xff]
    %v3369 = vld [vmem:[%s3 + $0xf8] sm:$0xff]
    %v3370 = vld [vmem:[%s3 + $0x100] sm:$0xff]
    %v3371 = vld [vmem:[%s3 + $0x108] sm:$0xff]
    %v3372 = vld [vmem:[%s3 + $0x110] sm:$0xff]
    %v3373 = vld [vmem:[%s3 + $0x118] sm:$0xff]
    %v3374 = vld [vmem:[%s3 + $0x120] sm:$0xff]
    %v3375 = vld [vmem:[%s3 + $0x128] sm:$0xff]
    %v3376 = vld [vmem:[%s3 + $0x130] sm:$0xff]
    %v3377 = vld [vmem:[%s3 + $0x138] sm:$0xff]
    %v3378 = vld [vmem:[%s3 + $0x140] sm:$0xff]
    %v3379 = vld [vmem:[%s3 + $0x148] sm:$0xff]
    %v3380 = vld [vmem:[%s3 + $0x150] sm:$0xff]
    %v3381 = vld [vmem:[%s3 + $0x158] sm:$0xff]
    %v3382 = vld [vmem:[%s3 + $0x160] sm:$0xff]
    %v3383 = vld [vmem:[%s3 + $0x168] sm:$0xff]
    %v3384 = vld [vmem:[%s3 + $0x170] sm:$0xff]
    %v3385 = vld [vmem:[%s3 + $0x178] sm:$0xff]
    %v3386 = vld [vmem:[%s4] sm:$0x1]
    %v3388 = vlaneseq
    %v3389 = vshrl.u32 %v3388, 7
    %v3390 = vsub.s32 0, %v3389
    %v3391 = vrot.slane %v3386, %v3390
    %3393 = vmatprep.subr.mxu0 0.0
    %3394 = vmatpush1.msra.mxu0 %v3353
    %3395 = vmatprep.subr.mxu0 0.0
    %3396 = vmatpush1.msra.mxu0 %v3352
    %3397 = vmatprep.subr.mxu0 0.0
    %3398 = vmatpush1.msra.mxu0 %v3351
    %3399 = vmatprep.subr.mxu0 0.0
    %3400 = vmatpush1.msra.mxu0 %v3350
    %3401 = vmatprep.subr.mxu0 0.0
    %3402 = vmatpush1.msra.mxu0 %v3349
    %3403 = vmatprep.subr.mxu0 0.0
    %3404 = vmatpush1.msra.mxu0 %v3348
    %3405 = vmatprep.subr.mxu0 0.0
    %3406 = vmatpush1.msra.mxu0 %v3347
    %3407 = vmatprep.subr.mxu0 0.0
    %3408 = vmatpush1.msra.mxu0 %v3346
    %3409 = vmatprep.subr.mxu0 0.0
    %3410 = vmatpush1.msra.mxu0 %v3345
    %3411 = vmatprep.subr.mxu0 0.0
    %3412 = vmatpush1.msra.mxu0 %v3344
    %3413 = vmatprep.subr.mxu0 0.0
    %3414 = vmatpush1.msra.mxu0 %v3343
    %3415 = vmatprep.subr.mxu0 0.0
    %3416 = vmatpush1.msra.mxu0 %v3342
    %3417 = vmatprep.subr.mxu0 0.0
    %3418 = vmatpush1.msra.mxu0 %v3341
    %3419 = vmatprep.subr.mxu0 0.0
    %3420 = vmatpush1.msra.mxu0 %v3340
    %3421 = vmatprep.subr.mxu0 0.0
    %3422 = vmatpush1.msra.mxu0 %v3339
    %3423 = vmatprep.subr.mxu0 0.0
    %3424 = vmatpush1.msra.mxu0 %v3338
    %3425 = vmatprep.subr.mxu0 0.0
    %3426 = vmatpush2.msra.mxu0 %v3369
    %3427 = vmatprep.subr.mxu0 0.0
    %3428 = vmatpush2.msra.mxu0 %v3368
    %3429 = vmatprep.subr.mxu0 0.0
    %3430 = vmatpush2.msra.mxu0 %v3367
    %3431 = vmatprep.subr.mxu0 0.0
    %3432 = vmatpush2.msra.mxu0 %v3366
    %3433 = vmatprep.subr.mxu0 0.0
    %3434 = vmatpush2.msra.mxu0 %v3365
    %3435 = vmatprep.subr.mxu0 0.0
    %3436 = vmatpush2.msra.mxu0 %v3364
    %3437 = vmatprep.subr.mxu0 0.0
    %3438 = vmatpush2.msra.mxu0 %v3363
    %3439 = vmatprep.subr.mxu0 0.0
    %3440 = vmatpush2.msra.mxu0 %v3362
    %3441 = vmatprep.subr.mxu0 0.0
    %3442 = vmatpush2.msra.mxu0 %v3361
    %3443 = vmatprep.subr.mxu0 0.0
    %3444 = vmatpush2.msra.mxu0 %v3360
    %3445 = vmatprep.subr.mxu0 0.0
    %3446 = vmatpush2.msra.mxu0 %v3359
    %3447 = vmatprep.subr.mxu0 0.0
    %3448 = vmatpush2.msra.mxu0 %v3358
    %3449 = vmatprep.subr.mxu0 0.0
    %3450 = vmatpush2.msra.mxu0 %v3357
    %3451 = vmatprep.subr.mxu0 0.0
    %3452 = vmatpush2.msra.mxu0 %v3356
    %3453 = vmatprep.subr.mxu0 0.0
    %3454 = vmatpush2.msra.mxu0 %v3355
    %3455 = vmatprep.subr.mxu0 0.0
    %3456 = vmatpush2.msra.mxu0 %v3354
    %3457 = vmatprep.mubr.f32.mxu0 %v3313
    %3458 = vmatmul.mubr.f32.gmra.mxu0 %v3290
    %v3459 = vpop.f32.mrf.mxu0
    %v3460 = vadd.f32 %v3391, %v3459
    %v3461 = vpop.f32.mrf.mxu0
    %3462 = vdwg.mxu0
    %3463 = vmatprep.subr.mxu0 0.0
    %3464 = vmatpush1.msra.mxu0 %v3385
    %3465 = vmatprep.subr.mxu0 0.0
    %3466 = vmatpush1.msra.mxu0 %v3384
    %3467 = vmatprep.subr.mxu0 0.0
    %3468 = vmatpush1.msra.mxu0 %v3383
    %3469 = vmatprep.subr.mxu0 0.0
    %3470 = vmatpush1.msra.mxu0 %v3382
    %3471 = vmatprep.subr.mxu0 0.0
    %3472 = vmatpush1.msra.mxu0 %v3381
    %3473 = vmatprep.subr.mxu0 0.0
    %3474 = vmatpush1.msra.mxu0 %v3380
    %3475 = vmatprep.subr.mxu0 0.0
    %3476 = vmatpush1.msra.mxu0 %v3379
    %3477 = vmatprep.subr.mxu0 0.0
    %3478 = vmatpush1.msra.mxu0 %v3378
    %3479 = vmatprep.subr.mxu0 0.0
    %3480 = vmatpush1.msra.mxu0 %v3377
    %3481 = vmatprep.subr.mxu0 0.0
    %3482 = vmatpush1.msra.mxu0 %v3376
    %3483 = vmatprep.subr.mxu0 0.0
    %3484 = vmatpush1.msra.mxu0 %v3375
    %3485 = vmatprep.subr.mxu0 0.0
    %3486 = vmatpush1.msra.mxu0 %v3374
    %3487 = vmatprep.subr.mxu0 0.0
    %3488 = vmatpush1.msra.mxu0 %v3373
    %3489 = vmatprep.subr.mxu0 0.0
    %3490 = vmatpush1.msra.mxu0 %v3372
    %3491 = vmatprep.subr.mxu0 0.0
    %3492 = vmatpush1.msra.mxu0 %v3371
    %3493 = vmatprep.subr.mxu0 0.0
    %3494 = vmatpush1.msra.mxu0 %v3370
    %3495 = vmatprep.subr.mxu0 0.0
    %3496 = vmatpush2.msra.mxu0 0.0
    %3497 = vmatprep.subr.mxu0 0.0
    %3498 = vmatpush2.msra.mxu0 0.0
    %3499 = vmatprep.subr.mxu0 0.0
    %3500 = vmatpush2.msra.mxu0 0.0
    %3501 = vmatprep.subr.mxu0 0.0
    %3502 = vmatpush2.msra.mxu0 0.0
    %3503 = vmatprep.subr.mxu0 0.0
    %3504 = vmatpush2.msra.mxu0 0.0
    %3505 = vmatprep.subr.mxu0 0.0
    %3506 = vmatpush2.msra.mxu0 0.0
    %3507 = vmatprep.subr.mxu0 0.0
    %3508 = vmatpush2.msra.mxu0 0.0
    %3509 = vmatprep.subr.mxu0 0.0
    %3510 = vmatpush2.msra.mxu0 0.0
    %3511 = vmatprep.subr.mxu0 0.0
    %3512 = vmatpush2.msra.mxu0 0.0
    %3513 = vmatprep.subr.mxu0 0.0
    %3514 = vmatpush2.msra.mxu0 0.0
    %3515 = vmatprep.subr.mxu0 0.0
    %3516 = vmatpush2.msra.mxu0 0.0
    %3517 = vmatprep.subr.mxu0 0.0
    %3518 = vmatpush2.msra.mxu0 0.0
    %3519 = vmatprep.subr.mxu0 0.0
    %3520 = vmatpush2.msra.mxu0 0.0
    %3521 = vmatprep.subr.mxu0 0.0
    %3522 = vmatpush2.msra.mxu0 0.0
    %3523 = vmatprep.subr.mxu0 0.0
    %3524 = vmatpush2.msra.mxu0 0.0
    %3525 = vmatprep.subr.mxu0 0.0
    %3526 = vmatpush2.msra.mxu0 0.0
    %3527 = vmatprep.mubr.f32.mxu0 0.0
    %3528 = vmatmul.mubr.f32.gmra.mxu0 %v3336
    %v3529 = vpop.f32.mrf.mxu0
    %v3530 = vadd.f32 %v3460, %v3529
    %v3531 = vpop.f32.mrf.mxu0
    %3532 = vdwg.mxu0
    %3533 = vst [vmem:[%s5] sm:$0xff] %v3530
    // Predicated region
    $region26: #{textcnn_forward.1} parent=1 // pred_check
      _
    $region27: #{textcnn_forward.1} parent=1 // pred_check_branch
      %3535 = sbr.rel (0) target = $region29
    $region28: #{textcnn_forward.1} parent=1 // pred_region
      _
    $region29: #{textcnn_forward.1} parent=1 // pred_fallthru
      _
    // Predicated region
    $region30: #{textcnn_forward.1} parent=1 // pred_check
      _
    $region31: #{textcnn_forward.1} parent=1 // pred_check_branch
      %3537 = sbr.rel (0) target = $region33
    $region32: #{textcnn_forward.1} parent=1 // pred_region
      _
    $region33: #{textcnn_forward.1} parent=1 // pred_fallthru
      _
    %3538 = vsyncpa [#allocation3], 1

</llo_original>
